<compile_context>
chip_gen: v5e
topology: v5e:2x2
jax: 0.10.0
libtpu: 0.0.40
codegen_flags: <defaults>
</compile_context>

<pallas_src>
import functools

import jax
import jax.numpy as jnp
import numpy as np
from jax.experimental import pallas as pl
from jax.experimental.pallas import tpu as pltpu

LANE = 128


def _round_up(x, m):
    return ((x + m - 1) // m) * m


# ---------------------------------------------------------------------------
# Pallas kernel: conv1(+folded BN)+ReLU -> conv2+ReLU -> max-pool(T) -> fc
# All SB samples of the block are stacked along the matmul M dimension.
# ---------------------------------------------------------------------------
def emotion_cnn_kernel(x_ref,     # (M, E)       M = SB*Tp flat rows, bf16, per-sample zero halos
                       mask1_ref,  # (M, 1)       f32 {0,1}: keeps extended-conv1 rows q in [1, T]
                       w1_ref,     # (5, E, C1)   conv1 taps (BN folded), bf16, channel-last
                       b1_ref,     # (1, C1)      folded conv1+BN bias, f32
                       w2_ref,     # (3, C1, C2P) conv2 taps, out channels zero-padded to 128, bf16
                       b2_ref,     # (1, C2P)     f32
                       wfc_ref,    # (C2P, CP)    fc weight, classes zero-padded to 128 lanes, bf16
                       bfc_ref,    # (1, CP)      f32
                       o_ref,      # (SB, CP)     f32
                       *, seq_len):
    M, _ = x_ref.shape
    SB = o_ref.shape[0]
    Tp = M // SB                # per-sample padded row count (multiple of 8)
    C2P = w2_ref.shape[2]

    n1 = M - 4                  # rows of the extended conv1 output (flat layout)
    n2 = n1 - 2                 # rows of the conv2 output

    x = x_ref[...]              # (M, E) bf16, loaded once

    # ---- Conv1d(E->128, k=5, pad=2) with BatchNorm (eval) folded in, samples stacked in M ----
    acc1 = jnp.dot(x[0:n1, :], w1_ref[0], preferred_element_type=jnp.float32)
    for k in range(1, 5):
        acc1 = acc1 + jnp.dot(x[k:k + n1, :], w1_ref[k],
                              preferred_element_type=jnp.float32)
    # ReLU, then the periodic row mask: zeroes conv2's zero-pad rows (q=0, q=T+1) and every
    # halo / alignment / cross-sample row.  Dropout(0.5) is identity in eval mode.
    # TODO(synk): training-mode dropout and batch-statistics BatchNorm are not implemented.
    y1 = jnp.maximum(acc1 + b1_ref[...], 0.0) * mask1_ref[0:n1, :]
    y1 = y1.astype(jnp.bfloat16)                                   # bf16 MXU feed for conv2

    # ---- Conv1d(128->64, k=3, pad=1) + ReLU (out channels zero-padded to 128 lanes) ----
    acc2 = jnp.dot(y1[0:n2, :], w2_ref[0], preferred_element_type=jnp.float32)
    for j in range(1, 3):
        acc2 = acc2 + jnp.dot(y1[j:j + n2, :], w2_ref[j],
                              preferred_element_type=jnp.float32)
    z = jnp.maximum(acc2 + b2_ref[...], 0.0)                       # (n2, C2P)

    # ---- AdaptiveMaxPool1d(1): per-sample max over the T valid rows ----
    # Cheap XLU-only loop: each slice starts at s*Tp (a multiple of 8, aligned) and covers
    # exactly the rows t in [0, T-1], so no extra masking is needed before the max.
    pooled_rows = []
    for s in range(SB):
        seg = z[s * Tp: s * Tp + seq_len, :]                       # (T, C2P)
        pooled_rows.append(jnp.max(seg, axis=0, keepdims=True))    # (1, C2P)
    pooled = jnp.concatenate(pooled_rows, axis=0)                  # (SB, C2P)

    # ---- Linear(64 -> num_classes): one batched matmul, one full lane-dense store ----
    logits = jnp.dot(pooled.astype(jnp.bfloat16), wfc_ref[...],
                     preferred_element_type=jnp.float32) + bfc_ref[...]
    o_ref[...] = logits


# ---------------------------------------------------------------------------
# Wrapper
# ---------------------------------------------------------------------------
def emotion_cnn_forward(tokens, packed, num_classes, samples_per_block=16):
    """tokens: (B, T) int32 token ids.  packed: kernel-layout params from pack_params."""
    emb = packed["embedding"]                                   # (V, E) bf16
    B, T = tokens.shape
    E = emb.shape[1]
    SB = samples_per_block

    # Per-sample padded time: 3 zero halo rows each side (conv1 pad=2 composed with conv2
    # pad=1 stencil), rounded up to a multiple of 8 for sublane-tile alignment.
    Tp = _round_up(T + 6, 8)
    M = SB * Tp

    # Embedding lookup (gather) stays XLA glue outside the kernel (emitted directly in bf16).
    # TODO(synk): fuse the nn.Embedding gather + halo padding into the kernel (scalar-prefetched
    # token ids + DMA row gather from HBM) to avoid materializing x in HBM.
    x = jnp.take(emb, tokens, axis=0)                           # (B, T, E) bf16

    # >= 2 grid steps so the BlockSpec pipeline can double-buffer the x DMA and v7x can split
    # the 'parallel' batch axis across both TensorCores.
    num_blocks = max(2, pl.cdiv(B, SB))
    B_pad = num_blocks * SB

    x = jnp.pad(x, ((0, B_pad - B), (3, Tp - T - 3), (0, 0)))   # (B_pad, Tp, E)
    x = x.reshape(B_pad * Tp, E)                                # flat sample-stacked layout

    # Periodic row mask (same for every block): keep extended-conv1 rows q in [1, T]; rows
    # q=0 and q=T+1 stand in for conv2's zero padding, the rest are halo/alignment rows.
    q = np.arange(M) % Tp
    mask1 = jnp.asarray(((q >= 1) & (q <= T)).astype(np.float32)[:, None])   # (M, 1)

    C1 = packed["b1"].shape[1]
    C2P = packed["b2"].shape[1]
    CP = packed["bfc"].shape[1]

    out = pl.pallas_call(
        functools.partial(emotion_cnn_kernel, seq_len=T),
        out_shape=jax.ShapeDtypeStruct((B_pad, CP), jnp.float32),
        grid=(num_blocks,),
        in_specs=[
            pl.BlockSpec((M, E), lambda i: (i, 0)),
            pl.BlockSpec((M, 1), lambda i: (0, 0)),
            pl.BlockSpec((5, E, C1), lambda i: (0, 0, 0)),
            pl.BlockSpec((1, C1), lambda i: (0, 0)),
            pl.BlockSpec((3, C1, C2P), lambda i: (0, 0, 0)),
            pl.BlockSpec((1, C2P), lambda i: (0, 0)),
            pl.BlockSpec((C2P, CP), lambda i: (0, 0)),
            pl.BlockSpec((1, CP), lambda i: (0, 0)),
        ],
        out_specs=pl.BlockSpec((SB, CP), lambda i: (i, 0)),
        compiler_params=pltpu.CompilerParams(
            dimension_semantics=("parallel",),
            vmem_limit_bytes=32 * 1024 * 1024),
    )(x, mask1, packed["w1"], packed["b1"], packed["w2"], packed["b2"],
      packed["wfc"], packed["bfc"])

    return out[:B, :num_classes]


# ---------------------------------------------------------------------------
# Parameter handling
# ---------------------------------------------------------------------------
def init_params(key, vocab_size, embed_dim=128, num_classes=3):
    """PyTorch-layout parameters (conv weights (O, I, K), fc weight (out, in))."""
    ks = jax.random.split(key, 11)
    s = 0.1
    c1, c2 = 128, 64
    emb = s * jax.random.normal(ks[0], (vocab_size, embed_dim), jnp.float32)
    emb = emb.at[0].set(0.0)                                    # padding_idx=0
    return {
        "embedding": emb,
        "conv1_w": s * jax.random.normal(ks[1], (c1, embed_dim, 5), jnp.float32),
        "conv1_b": s * jax.random.normal(ks[2], (c1,), jnp.float32),
        "bn1_gamma": 1.0 + 0.1 * jax.random.normal(ks[3], (c1,), jnp.float32),
        "bn1_beta": 0.1 * jax.random.normal(ks[4], (c1,), jnp.float32),
        "bn1_mean": 0.1 * jax.random.normal(ks[5], (c1,), jnp.float32),
        "bn1_var": 0.5 + 0.3 * jax.random.uniform(ks[6], (c1,), jnp.float32),
        "conv2_w": s * jax.random.normal(ks[7], (c2, c1, 3), jnp.float32),
        "conv2_b": s * jax.random.normal(ks[8], (c2,), jnp.float32),
        "fc_w": s * jax.random.normal(ks[9], (num_classes, c2), jnp.float32),
        "fc_b": s * jax.random.normal(ks[10], (num_classes,), jnp.float32),
    }


def pack_params(p, lane=LANE, eps=1e-5):
    """Kernel layout: channel-last conv taps, BN folded into conv1, bf16 MXU operands,
    conv2 output channels / fc classes zero-padded to 128 lanes."""
    scale = p["bn1_gamma"] / jnp.sqrt(p["bn1_var"] + eps)                 # (C1,)
    shift = p["bn1_beta"] - p["bn1_mean"] * scale                         # (C1,)

    # conv1 (C1, E, 5) -> (5, E, C1) with the BN scale folded per output channel.
    w1 = (jnp.transpose(p["conv1_w"], (2, 1, 0)) * scale[None, None, :]).astype(jnp.bfloat16)
    b1 = ((p["conv1_b"] * scale + shift)[None, :]).astype(jnp.float32)    # (1, C1)

    # conv2 (C2, C1, 3) -> (3, C1, C2P), output channels zero-padded to a lane multiple.
    C2 = p["conv2_w"].shape[0]
    C2P = _round_up(C2, lane)
    w2 = jnp.pad(jnp.transpose(p["conv2_w"], (2, 1, 0)),
                 ((0, 0), (0, 0), (0, C2P - C2))).astype(jnp.bfloat16)
    b2 = jnp.pad(p["conv2_b"], (0, C2P - C2))[None, :].astype(jnp.float32)

    # fc (NC, C2) -> (C2P, CP): padded rows/cols are zero, so results are unchanged.
    NC = p["fc_w"].shape[0]
    CP = _round_up(NC, lane)
    wfc = jnp.pad(jnp.transpose(p["fc_w"]),
                  ((0, C2P - C2), (0, CP - NC))).astype(jnp.bfloat16)
    bfc = jnp.pad(p["fc_b"], (0, CP - NC))[None, :].astype(jnp.float32)

    return {"embedding": p["embedding"].astype(jnp.bfloat16), "w1": w1, "b1": b1,
            "w2": w2, "b2": b2, "wfc": wfc, "bfc": bfc}


# ---------------------------------------------------------------------------
# Pure-JAX reference (mirrors the PyTorch eval-mode forward, f32, no folding/padding)
# ---------------------------------------------------------------------------
def _conv1d_ref(x, w, b, pad):
    """x: (B, Cin, T), w: (Cout, Cin, K), cross-correlation like nn.Conv1d."""
    B, Cin, T = x.shape
    Cout, _, K = w.shape
    xp = jnp.pad(x, ((0, 0), (0, 0), (pad, pad)))
    out = jnp.zeros((B, Cout, T), jnp.float32)
    for k in range(K):
        out = out + jnp.einsum("oc,bct->bot", w[:, :, k], xp[:, :, k:k + T],
                               precision=jax.lax.Precision.HIGHEST)
    return out + b[None, :, None]


def reference_forward(tokens, params, eps=1e-5):
    x = jnp.take(params["embedding"], tokens, axis=0)           # (B, T, E)
    x = jnp.transpose(x, (0, 2, 1))                             # (B, E, T)
    h = _conv1d_ref(x, params["conv1_w"], params["conv1_b"], pad=2)
    h = (h - params["bn1_mean"][None, :, None]) / jnp.sqrt(params["bn1_var"][None, :, None] + eps)
    h = h * params["bn1_gamma"][None, :, None] + params["bn1_beta"][None, :, None]
    h = jnp.maximum(h, 0.0)
    # dropout: identity in eval mode
    g = _conv1d_ref(h, params["conv2_w"], params["conv2_b"], pad=1)
    g = jnp.maximum(g, 0.0)
    pooled = jnp.max(g, axis=2)                                 # AdaptiveMaxPool1d(1) + squeeze
    return jnp.dot(pooled, params["fc_w"].T,
                   precision=jax.lax.Precision.HIGHEST) + params["fc_b"]


if __name__ == "__main__":
    key = jax.random.PRNGKey(0)
    k_par, k_tok = jax.random.split(key)

    VOCAB, EMBED, CLASSES = 50, 128, 3
    B, T = 4, 16

    params = init_params(k_par, VOCAB, embed_dim=EMBED, num_classes=CLASSES)
    packed = pack_params(params)
    tokens = jax.random.randint(k_tok, (B, T), 0, VOCAB, dtype=jnp.int32)

    out = emotion_cnn_forward(tokens, packed, CLASSES)
    out = jax.block_until_ready(out)
    assert out.shape == (B, CLASSES)

    ref = jax.block_until_ready(reference_forward(tokens, params))
    # bf16 MXU operands vs. the f32 HIGHEST-precision reference -> relaxed tolerance.
    np.testing.assert_allclose(np.asarray(out), np.asarray(ref), rtol=2e-2, atol=2e-2)

    print("KERNEL_OK")
</pallas_src>

<mosaic_0001>
module attributes {stable_mosaic.version = 11 : i64} {
  func.func @emotion_cnn_kernel(%arg0: i32, %arg1: memref<384x128xbf16, #tpu.memory_space<vmem>>, %arg2: memref<384x1xf32, #tpu.memory_space<vmem>>, %arg3: memref<5x128x128xbf16, #tpu.memory_space<vmem>>, %arg4: memref<1x128xf32, #tpu.memory_space<vmem>>, %arg5: memref<3x128x128xbf16, #tpu.memory_space<vmem>>, %arg6: memref<1x128xf32, #tpu.memory_space<vmem>>, %arg7: memref<128x128xbf16, #tpu.memory_space<vmem>>, %arg8: memref<1x128xf32, #tpu.memory_space<vmem>>, %arg9: memref<16x128xf32, #tpu.memory_space<vmem>>) attributes {dimension_semantics = [#tpu.dimension_semantics<parallel>], iteration_bounds = array<i64: 2>, scalar_prefetch = 0 : i64, scratch_operands = 0 : i64, tpu.core_type = #tpu.core_type<tc>, window_params = [{transform_indices = @transform_0, window_bounds = array<i64: 384, 128>}, {pipeline_mode = #tpu.pipeline_mode<synchronous>, transform_indices = @transform_1, window_bounds = array<i64: 384, 1>}, {pipeline_mode = #tpu.pipeline_mode<synchronous>, transform_indices = @transform_2, window_bounds = array<i64: 5, 128, 128>}, {pipeline_mode = #tpu.pipeline_mode<synchronous>, transform_indices = @transform_3, window_bounds = array<i64: 1, 128>}, {pipeline_mode = #tpu.pipeline_mode<synchronous>, transform_indices = @transform_4, window_bounds = array<i64: 3, 128, 128>}, {pipeline_mode = #tpu.pipeline_mode<synchronous>, transform_indices = @transform_5, window_bounds = array<i64: 1, 128>}, {pipeline_mode = #tpu.pipeline_mode<synchronous>, transform_indices = @transform_6, window_bounds = array<i64: 128, 128>}, {pipeline_mode = #tpu.pipeline_mode<synchronous>, transform_indices = @transform_7, window_bounds = array<i64: 1, 128>}, {transform_indices = @transform_8, window_bounds = array<i64: 16, 128>}]} {
    %c0 = arith.constant 0 : index
    %c0_0 = arith.constant 0 : index
    %0 = vector.load %arg1[%c0, %c0_0] : memref<384x128xbf16, #tpu.memory_space<vmem>>, vector<384x128xbf16>
    %1 = vector.extract_strided_slice %0 {offsets = [0, 0], sizes = [380, 128], strides = [1, 1]} : vector<384x128xbf16> to vector<380x128xbf16>
    %c0_1 = arith.constant 0 : index
    %c0_2 = arith.constant 0 : index
    %c0_3 = arith.constant 0 : index
    %2 = vector.load %arg3[%c0_1, %c0_2, %c0_3] : memref<5x128x128xbf16, #tpu.memory_space<vmem>>, vector<1x128x128xbf16>
    %3 = vector.shape_cast %2 : vector<1x128x128xbf16> to vector<128x128xbf16>
    %cst = arith.constant dense<0.000000e+00> : vector<380x128xf32>
    %4 = tpu.matmul %1, %3, %cst {dimension_numbers = #tpu.dot_dimension_numbers<[1], [0], [0], [1], [0, 0, 1, 1], [], []>} : vector<380x128xbf16>, vector<128x128xbf16>, vector<380x128xf32> -> vector<380x128xf32>
    %5 = vector.extract_strided_slice %0 {offsets = [1, 0], sizes = [380, 128], strides = [1, 1]} : vector<384x128xbf16> to vector<380x128xbf16>
    %c1 = arith.constant 1 : index
    %c0_4 = arith.constant 0 : index
    %c0_5 = arith.constant 0 : index
    %6 = vector.load %arg3[%c1, %c0_4, %c0_5] : memref<5x128x128xbf16, #tpu.memory_space<vmem>>, vector<1x128x128xbf16>
    %7 = vector.shape_cast %6 : vector<1x128x128xbf16> to vector<128x128xbf16>
    %cst_6 = arith.constant dense<0.000000e+00> : vector<380x128xf32>
    %8 = tpu.matmul %5, %7, %cst_6 {dimension_numbers = #tpu.dot_dimension_numbers<[1], [0], [0], [1], [0, 0, 1, 1], [], []>} : vector<380x128xbf16>, vector<128x128xbf16>, vector<380x128xf32> -> vector<380x128xf32>
    %9 = arith.addf %4, %8 : vector<380x128xf32>
    %10 = vector.extract_strided_slice %0 {offsets = [2, 0], sizes = [380, 128], strides = [1, 1]} : vector<384x128xbf16> to vector<380x128xbf16>
    %c2 = arith.constant 2 : index
    %c0_7 = arith.constant 0 : index
    %c0_8 = arith.constant 0 : index
    %11 = vector.load %arg3[%c2, %c0_7, %c0_8] : memref<5x128x128xbf16, #tpu.memory_space<vmem>>, vector<1x128x128xbf16>
    %12 = vector.shape_cast %11 : vector<1x128x128xbf16> to vector<128x128xbf16>
    %cst_9 = arith.constant dense<0.000000e+00> : vector<380x128xf32>
    %13 = tpu.matmul %10, %12, %cst_9 {dimension_numbers = #tpu.dot_dimension_numbers<[1], [0], [0], [1], [0, 0, 1, 1], [], []>} : vector<380x128xbf16>, vector<128x128xbf16>, vector<380x128xf32> -> vector<380x128xf32>
    %14 = arith.addf %9, %13 : vector<380x128xf32>
    %15 = vector.extract_strided_slice %0 {offsets = [3, 0], sizes = [380, 128], strides = [1, 1]} : vector<384x128xbf16> to vector<380x128xbf16>
    %c3 = arith.constant 3 : index
    %c0_10 = arith.constant 0 : index
    %c0_11 = arith.constant 0 : index
    %16 = vector.load %arg3[%c3, %c0_10, %c0_11] : memref<5x128x128xbf16, #tpu.memory_space<vmem>>, vector<1x128x128xbf16>
    %17 = vector.shape_cast %16 : vector<1x128x128xbf16> to vector<128x128xbf16>
    %cst_12 = arith.constant dense<0.000000e+00> : vector<380x128xf32>
    %18 = tpu.matmul %15, %17, %cst_12 {dimension_numbers = #tpu.dot_dimension_numbers<[1], [0], [0], [1], [0, 0, 1, 1], [], []>} : vector<380x128xbf16>, vector<128x128xbf16>, vector<380x128xf32> -> vector<380x128xf32>
    %19 = arith.addf %14, %18 : vector<380x128xf32>
    %20 = vector.extract_strided_slice %0 {offsets = [4, 0], sizes = [380, 128], strides = [1, 1]} : vector<384x128xbf16> to vector<380x128xbf16>
    %c4 = arith.constant 4 : index
    %c0_13 = arith.constant 0 : index
    %c0_14 = arith.constant 0 : index
    %21 = vector.load %arg3[%c4, %c0_13, %c0_14] : memref<5x128x128xbf16, #tpu.memory_space<vmem>>, vector<1x128x128xbf16>
    %22 = vector.shape_cast %21 : vector<1x128x128xbf16> to vector<128x128xbf16>
    %cst_15 = arith.constant dense<0.000000e+00> : vector<380x128xf32>
    %23 = tpu.matmul %20, %22, %cst_15 {dimension_numbers = #tpu.dot_dimension_numbers<[1], [0], [0], [1], [0, 0, 1, 1], [], []>} : vector<380x128xbf16>, vector<128x128xbf16>, vector<380x128xf32> -> vector<380x128xf32>
    %24 = arith.addf %19, %23 : vector<380x128xf32>
    %c0_16 = arith.constant 0 : index
    %c0_17 = arith.constant 0 : index
    %25 = vector.load %arg4[%c0_16, %c0_17] : memref<1x128xf32, #tpu.memory_space<vmem>>, vector<1x128xf32>
    %26 = vector.broadcast %25 : vector<1x128xf32> to vector<380x128xf32>
    %27 = arith.addf %24, %26 : vector<380x128xf32>
    %cst_18 = arith.constant 0.000000e+00 : f32
    %28 = vector.broadcast %cst_18 : f32 to vector<380x128xf32>
    %29 = arith.maximumf %27, %28 : vector<380x128xf32>
    %c0_19 = arith.constant 0 : index
    %c0_20 = arith.constant 0 : index
    %30 = vector.load %arg2[%c0_19, %c0_20] : memref<384x1xf32, #tpu.memory_space<vmem>>, vector<380x1xf32>
    %31 = vector.broadcast %30 : vector<380x1xf32> to vector<380x128xf32>
    %32 = arith.mulf %29, %31 : vector<380x128xf32>
    %33 = arith.truncf %32 : vector<380x128xf32> to vector<380x128xbf16>
    %34 = vector.extract_strided_slice %33 {offsets = [0, 0], sizes = [378, 128], strides = [1, 1]} : vector<380x128xbf16> to vector<378x128xbf16>
    %c0_21 = arith.constant 0 : index
    %c0_22 = arith.constant 0 : index
    %c0_23 = arith.constant 0 : index
    %35 = vector.load %arg5[%c0_21, %c0_22, %c0_23] : memref<3x128x128xbf16, #tpu.memory_space<vmem>>, vector<1x128x128xbf16>
    %36 = vector.shape_cast %35 : vector<1x128x128xbf16> to vector<128x128xbf16>
    %cst_24 = arith.constant dense<0.000000e+00> : vector<378x128xf32>
    %37 = tpu.matmul %34, %36, %cst_24 {dimension_numbers = #tpu.dot_dimension_numbers<[1], [0], [0], [1], [0, 0, 1, 1], [], []>} : vector<378x128xbf16>, vector<128x128xbf16>, vector<378x128xf32> -> vector<378x128xf32>
    %38 = vector.extract_strided_slice %33 {offsets = [1, 0], sizes = [378, 128], strides = [1, 1]} : vector<380x128xbf16> to vector<378x128xbf16>
    %c1_25 = arith.constant 1 : index
    %c0_26 = arith.constant 0 : index
    %c0_27 = arith.constant 0 : index
    %39 = vector.load %arg5[%c1_25, %c0_26, %c0_27] : memref<3x128x128xbf16, #tpu.memory_space<vmem>>, vector<1x128x128xbf16>
    %40 = vector.shape_cast %39 : vector<1x128x128xbf16> to vector<128x128xbf16>
    %cst_28 = arith.constant dense<0.000000e+00> : vector<378x128xf32>
    %41 = tpu.matmul %38, %40, %cst_28 {dimension_numbers = #tpu.dot_dimension_numbers<[1], [0], [0], [1], [0, 0, 1, 1], [], []>} : vector<378x128xbf16>, vector<128x128xbf16>, vector<378x128xf32> -> vector<378x128xf32>
    %42 = arith.addf %37, %41 : vector<378x128xf32>
    %43 = vector.extract_strided_slice %33 {offsets = [2, 0], sizes = [378, 128], strides = [1, 1]} : vector<380x128xbf16> to vector<378x128xbf16>
    %c2_29 = arith.constant 2 : index
    %c0_30 = arith.constant 0 : index
    %c0_31 = arith.constant 0 : index
    %44 = vector.load %arg5[%c2_29, %c0_30, %c0_31] : memref<3x128x128xbf16, #tpu.memory_space<vmem>>, vector<1x128x128xbf16>
    %45 = vector.shape_cast %44 : vector<1x128x128xbf16> to vector<128x128xbf16>
    %cst_32 = arith.constant dense<0.000000e+00> : vector<378x128xf32>
    %46 = tpu.matmul %43, %45, %cst_32 {dimension_numbers = #tpu.dot_dimension_numbers<[1], [0], [0], [1], [0, 0, 1, 1], [], []>} : vector<378x128xbf16>, vector<128x128xbf16>, vector<378x128xf32> -> vector<378x128xf32>
    %47 = arith.addf %42, %46 : vector<378x128xf32>
    %c0_33 = arith.constant 0 : index
    %c0_34 = arith.constant 0 : index
    %48 = vector.load %arg6[%c0_33, %c0_34] : memref<1x128xf32, #tpu.memory_space<vmem>>, vector<1x128xf32>
    %49 = vector.broadcast %48 : vector<1x128xf32> to vector<378x128xf32>
    %50 = arith.addf %47, %49 : vector<378x128xf32>
    %cst_35 = arith.constant 0.000000e+00 : f32
    %51 = vector.broadcast %cst_35 : f32 to vector<378x128xf32>
    %52 = arith.maximumf %50, %51 : vector<378x128xf32>
    %53 = vector.extract_strided_slice %52 {offsets = [0, 0], sizes = [16, 128], strides = [1, 1]} : vector<378x128xf32> to vector<16x128xf32>
    %cst_36 = arith.constant dense<0xFF800000> : vector<128xf32>
    %54 = vector.multi_reduction <maximumf>, %53, %cst_36 [0] : vector<16x128xf32> to vector<128xf32>
    %55 = vector.shape_cast %54 : vector<128xf32> to vector<1x128xf32>
    %56 = vector.extract_strided_slice %52 {offsets = [24, 0], sizes = [16, 128], strides = [1, 1]} : vector<378x128xf32> to vector<16x128xf32>
    %cst_37 = arith.constant dense<0xFF800000> : vector<128xf32>
    %57 = vector.multi_reduction <maximumf>, %56, %cst_37 [0] : vector<16x128xf32> to vector<128xf32>
    %58 = vector.shape_cast %57 : vector<128xf32> to vector<1x128xf32>
    %59 = vector.extract_strided_slice %52 {offsets = [48, 0], sizes = [16, 128], strides = [1, 1]} : vector<378x128xf32> to vector<16x128xf32>
    %cst_38 = arith.constant dense<0xFF800000> : vector<128xf32>
    %60 = vector.multi_reduction <maximumf>, %59, %cst_38 [0] : vector<16x128xf32> to vector<128xf32>
    %61 = vector.shape_cast %60 : vector<128xf32> to vector<1x128xf32>
    %62 = vector.extract_strided_slice %52 {offsets = [72, 0], sizes = [16, 128], strides = [1, 1]} : vector<378x128xf32> to vector<16x128xf32>
    %cst_39 = arith.constant dense<0xFF800000> : vector<128xf32>
    %63 = vector.multi_reduction <maximumf>, %62, %cst_39 [0] : vector<16x128xf32> to vector<128xf32>
    %64 = vector.shape_cast %63 : vector<128xf32> to vector<1x128xf32>
    %65 = vector.extract_strided_slice %52 {offsets = [96, 0], sizes = [16, 128], strides = [1, 1]} : vector<378x128xf32> to vector<16x128xf32>
    %cst_40 = arith.constant dense<0xFF800000> : vector<128xf32>
    %66 = vector.multi_reduction <maximumf>, %65, %cst_40 [0] : vector<16x128xf32> to vector<128xf32>
    %67 = vector.shape_cast %66 : vector<128xf32> to vector<1x128xf32>
    %68 = vector.extract_strided_slice %52 {offsets = [120, 0], sizes = [16, 128], strides = [1, 1]} : vector<378x128xf32> to vector<16x128xf32>
    %cst_41 = arith.constant dense<0xFF800000> : vector<128xf32>
    %69 = vector.multi_reduction <maximumf>, %68, %cst_41 [0] : vector<16x128xf32> to vector<128xf32>
    %70 = vector.shape_cast %69 : vector<128xf32> to vector<1x128xf32>
    %71 = vector.extract_strided_slice %52 {offsets = [144, 0], sizes = [16, 128], strides = [1, 1]} : vector<378x128xf32> to vector<16x128xf32>
    %cst_42 = arith.constant dense<0xFF800000> : vector<128xf32>
    %72 = vector.multi_reduction <maximumf>, %71, %cst_42 [0] : vector<16x128xf32> to vector<128xf32>
    %73 = vector.shape_cast %72 : vector<128xf32> to vector<1x128xf32>
    %74 = vector.extract_strided_slice %52 {offsets = [168, 0], sizes = [16, 128], strides = [1, 1]} : vector<378x128xf32> to vector<16x128xf32>
    %cst_43 = arith.constant dense<0xFF800000> : vector<128xf32>
    %75 = vector.multi_reduction <maximumf>, %74, %cst_43 [0] : vector<16x128xf32> to vector<128xf32>
    %76 = vector.shape_cast %75 : vector<128xf32> to vector<1x128xf32>
    %77 = vector.extract_strided_slice %52 {offsets = [192, 0], sizes = [16, 128], strides = [1, 1]} : vector<378x128xf32> to vector<16x128xf32>
    %cst_44 = arith.constant dense<0xFF800000> : vector<128xf32>
    %78 = vector.multi_reduction <maximumf>, %77, %cst_44 [0] : vector<16x128xf32> to vector<128xf32>
    %79 = vector.shape_cast %78 : vector<128xf32> to vector<1x128xf32>
    %80 = vector.extract_strided_slice %52 {offsets = [216, 0], sizes = [16, 128], strides = [1, 1]} : vector<378x128xf32> to vector<16x128xf32>
    %cst_45 = arith.constant dense<0xFF800000> : vector<128xf32>
    %81 = vector.multi_reduction <maximumf>, %80, %cst_45 [0] : vector<16x128xf32> to vector<128xf32>
    %82 = vector.shape_cast %81 : vector<128xf32> to vector<1x128xf32>
    %83 = vector.extract_strided_slice %52 {offsets = [240, 0], sizes = [16, 128], strides = [1, 1]} : vector<378x128xf32> to vector<16x128xf32>
    %cst_46 = arith.constant dense<0xFF800000> : vector<128xf32>
    %84 = vector.multi_reduction <maximumf>, %83, %cst_46 [0] : vector<16x128xf32> to vector<128xf32>
    %85 = vector.shape_cast %84 : vector<128xf32> to vector<1x128xf32>
    %86 = vector.extract_strided_slice %52 {offsets = [264, 0], sizes = [16, 128], strides = [1, 1]} : vector<378x128xf32> to vector<16x128xf32>
    %cst_47 = arith.constant dense<0xFF800000> : vector<128xf32>
    %87 = vector.multi_reduction <maximumf>, %86, %cst_47 [0] : vector<16x128xf32> to vector<128xf32>
    %88 = vector.shape_cast %87 : vector<128xf32> to vector<1x128xf32>
    %89 = vector.extract_strided_slice %52 {offsets = [288, 0], sizes = [16, 128], strides = [1, 1]} : vector<378x128xf32> to vector<16x128xf32>
    %cst_48 = arith.constant dense<0xFF800000> : vector<128xf32>
    %90 = vector.multi_reduction <maximumf>, %89, %cst_48 [0] : vector<16x128xf32> to vector<128xf32>
    %91 = vector.shape_cast %90 : vector<128xf32> to vector<1x128xf32>
    %92 = vector.extract_strided_slice %52 {offsets = [312, 0], sizes = [16, 128], strides = [1, 1]} : vector<378x128xf32> to vector<16x128xf32>
    %cst_49 = arith.constant dense<0xFF800000> : vector<128xf32>
    %93 = vector.multi_reduction <maximumf>, %92, %cst_49 [0] : vector<16x128xf32> to vector<128xf32>
    %94 = vector.shape_cast %93 : vector<128xf32> to vector<1x128xf32>
    %95 = vector.extract_strided_slice %52 {offsets = [336, 0], sizes = [16, 128], strides = [1, 1]} : vector<378x128xf32> to vector<16x128xf32>
    %cst_50 = arith.constant dense<0xFF800000> : vector<128xf32>
    %96 = vector.multi_reduction <maximumf>, %95, %cst_50 [0] : vector<16x128xf32> to vector<128xf32>
    %97 = vector.shape_cast %96 : vector<128xf32> to vector<1x128xf32>
    %98 = vector.extract_strided_slice %52 {offsets = [360, 0], sizes = [16, 128], strides = [1, 1]} : vector<378x128xf32> to vector<16x128xf32>
    %cst_51 = arith.constant dense<0xFF800000> : vector<128xf32>
    %99 = vector.multi_reduction <maximumf>, %98, %cst_51 [0] : vector<16x128xf32> to vector<128xf32>
    %100 = vector.shape_cast %99 : vector<128xf32> to vector<1x128xf32>
    %101 = tpu.concatenate %55, %58, %61, %64, %67, %70, %73, %76, %79, %82, %85, %88, %91, %94, %97, %100 in 0 : vector<1x128xf32>, vector<1x128xf32>, vector<1x128xf32>, vector<1x128xf32>, vector<1x128xf32>, vector<1x128xf32>, vector<1x128xf32>, vector<1x128xf32>, vector<1x128xf32>, vector<1x128xf32>, vector<1x128xf32>, vector<1x128xf32>, vector<1x128xf32>, vector<1x128xf32>, vector<1x128xf32>, vector<1x128xf32> -> vector<16x128xf32>
    %102 = arith.truncf %101 : vector<16x128xf32> to vector<16x128xbf16>
    %c0_52 = arith.constant 0 : index
    %c0_53 = arith.constant 0 : index
    %103 = vector.load %arg7[%c0_52, %c0_53] : memref<128x128xbf16, #tpu.memory_space<vmem>>, vector<128x128xbf16>
    %cst_54 = arith.constant dense<0.000000e+00> : vector<16x128xf32>
    %104 = tpu.matmul %102, %103, %cst_54 {dimension_numbers = #tpu.dot_dimension_numbers<[1], [0], [0], [1], [0, 0, 1, 1], [], []>} : vector<16x128xbf16>, vector<128x128xbf16>, vector<16x128xf32> -> vector<16x128xf32>
    %c0_55 = arith.constant 0 : index
    %c0_56 = arith.constant 0 : index
    %105 = vector.load %arg8[%c0_55, %c0_56] : memref<1x128xf32, #tpu.memory_space<vmem>>, vector<1x128xf32>
    %106 = vector.broadcast %105 : vector<1x128xf32> to vector<16x128xf32>
    %107 = arith.addf %104, %106 : vector<16x128xf32>
    %c0_57 = arith.constant 0 : index
    %c0_58 = arith.constant 0 : index
    %108 = vector.load %arg9[%c0_57, %c0_58] : memref<16x128xf32, #tpu.memory_space<vmem>>, vector<16x128xf32>
    tpu.vector_store %arg9[%c0_57, %c0_58], %107 {strides = array<i32>} : memref<16x128xf32, #tpu.memory_space<vmem>>, vector<16x128xf32>,
    return
  }
  func.func @transform_0(%arg0: i32) -> (i32, i32) {
    %c0_i32 = arith.constant 0 : i32
    %c0_i32_0 = arith.constant 0 : i32
    return %arg0, %c0_i32 : i32, i32
  }
  func.func @transform_1(%arg0: i32) -> (i32, i32) {
    %c0_i32 = arith.constant 0 : i32
    %c0_i32_0 = arith.constant 0 : i32
    %c0_i32_1 = arith.constant 0 : i32
    return %c0_i32, %c0_i32_0 : i32, i32
  }
  func.func @transform_2(%arg0: i32) -> (i32, i32, i32) {
    %c0_i32 = arith.constant 0 : i32
    %c0_i32_0 = arith.constant 0 : i32
    %c0_i32_1 = arith.constant 0 : i32
    %c0_i32_2 = arith.constant 0 : i32
    return %c0_i32, %c0_i32_0, %c0_i32_1 : i32, i32, i32
  }
  func.func @transform_3(%arg0: i32) -> (i32, i32) {
    %c0_i32 = arith.constant 0 : i32
    %c0_i32_0 = arith.constant 0 : i32
    %c0_i32_1 = arith.constant 0 : i32
    return %c0_i32, %c0_i32_0 : i32, i32
  }
  func.func @transform_4(%arg0: i32) -> (i32, i32, i32) {
    %c0_i32 = arith.constant 0 : i32
    %c0_i32_0 = arith.constant 0 : i32
    %c0_i32_1 = arith.constant 0 : i32
    %c0_i32_2 = arith.constant 0 : i32
    return %c0_i32, %c0_i32_0, %c0_i32_1 : i32, i32, i32
  }
  func.func @transform_5(%arg0: i32) -> (i32, i32) {
    %c0_i32 = arith.constant 0 : i32
    %c0_i32_0 = arith.constant 0 : i32
    %c0_i32_1 = arith.constant 0 : i32
    return %c0_i32, %c0_i32_0 : i32, i32
  }
  func.func @transform_6(%arg0: i32) -> (i32, i32) {
    %c0_i32 = arith.constant 0 : i32
    %c0_i32_0 = arith.constant 0 : i32
    %c0_i32_1 = arith.constant 0 : i32
    return %c0_i32, %c0_i32_0 : i32, i32
  }
  func.func @transform_7(%arg0: i32) -> (i32, i32) {
    %c0_i32 = arith.constant 0 : i32
    %c0_i32_0 = arith.constant 0 : i32
    %c0_i32_1 = arith.constant 0 : i32
    return %c0_i32, %c0_i32_0 : i32, i32
  }
  func.func @transform_8(%arg0: i32) -> (i32, i32) {
    %c0_i32 = arith.constant 0 : i32
    %c0_i32_0 = arith.constant 0 : i32
    return %arg0, %c0_i32 : i32, i32
  }
}

</mosaic_0001>

<llo_original>
// kernel: tpu_custom_call.1
$region0: #{tpu_custom_call.1}
  #allocation0 [shape = 'u32[]', space=smem, size = 0x4, offset = 0x4, fixed_abs, tag = 'smem constant byte address 0x4 - core index']
  #allocation1 [shape = 'u32[72,128]{1,0:T(1,128)}', space=vmem, size = 0x9000, scoped, tag = 'internal scratch']
  %s0 = inlined_call_operand.vmem [shape: bf16[768,128], index: 0, kind: input, shape index: {}]
  %s1 = inlined_call_operand.vmem [shape: f32[384,1], index: 1, kind: input, shape index: {}]
  %s2 = inlined_call_operand.hbm [shape: bf16[5,128,128], index: 2, kind: input, shape index: {}]
  %s3 = inlined_call_operand.vmem [shape: f32[1,128], index: 3, kind: input, shape index: {}]
  %s4 = inlined_call_operand.hbm [shape: bf16[3,128,128], index: 4, kind: input, shape index: {}]
  %s5 = inlined_call_operand.vmem [shape: f32[1,128], index: 5, kind: input, shape index: {}]
  %s6 = inlined_call_operand.hbm [shape: bf16[128,128], index: 6, kind: input, shape index: {}]
  %s7 = inlined_call_operand.vmem [shape: f32[1,128], index: 7, kind: input, shape index: {}]
  %s8 = inlined_call_operand.hbm [shape: f32[32,128], index: 8, kind: output, shape index: {}]
  %s9 = sld [smem:[#allocation0]]
  $region77: #{tpu_custom_call.1} parent=0
    _
  %s11 = ssub.s32 1, %s9
  %s12 = scalar_select 0, %s11, %s9
  $region1: #{tpu_custom_call.1} parent=0
    #allocation2 [shape = 'u8[163840]{0}', space=vmem, size = 0x28000, scoped, tag = 'input window, operand 2, single buffered']
    #allocation3 [shape = 's32[2]{0}', space=sflag, size = 0x8, scoped, tag = 'scoped memory for tpu_custom_call.1']
    #allocation4 [shape = 's32[2]{0}', space=sflag, size = 0x8, scoped, tag = 'scoped memory for tpu_custom_call.1']
    #allocation5 [shape = 'u8[98304]{0}', space=vmem, size = 0x18000, scoped, tag = 'input window, operand 4, single buffered']
    #allocation6 [shape = 's32[1]{0}', space=sflag, size = 0x4, scoped, tag = 'scoped memory for tpu_custom_call.1']
    #allocation7 [shape = 'u8[32768]{0}', space=vmem, size = 0x8000, scoped, tag = 'input window, operand 6, single buffered']
    #allocation8 [shape = 'u8[16384]{0}', space=vmem, size = 0x4000, scoped, tag = 'output window, operand 0']
    %13 = vsyncpa [#allocation3], 0
    %14 = vsyncpa [#allocation6], 0
    %15 = vsyncpa [#allocation4], 0
    %s16 = scalar_lea.sflag [#allocation4], 1
    %17 = vsyncpa %s16, 0
    loop: start=0, step=1, limit=4
    $region2: #{tpu_custom_call.1} parent=1 // loop_pre_header
      _
    $region3: #{tpu_custom_call.1} parent=1 // loop_header
      %s19 = sphi 0, %s23
      %p20 = scmp.ge.s32.totalorder %s19, 4
      %s29 = sphi 0, %s31
      %s32 = sphi 0, %s29
      %s33 = sphi 0, %s32
      %s49 = sphi 0, %s33
      %s53 = sphi 0, %s53
      %s55 = sphi 0, %s53
      %s56 = sphi 0, %s55
      %s70 = sphi 0, %s56
      %s74 = sphi 0, %s74
      %s76 = sphi 0, %s74
      %s77 = sphi 0, %s76
      %s91 = sphi 0, %s77
      %s95 = sphi 0, %s95
      %s97 = sphi 0, %s95
      %s98 = sphi 0, %s97
      %s112 = sphi 0, %s98
      %s116 = sphi 0, %s116
      %s118 = sphi 0, %s116
      %s119 = sphi 0, %s118
      %s133 = sphi 0, %s119
      %s137 = sphi 0, %s137
      %s139 = sphi 0, %s137
      %s140 = sphi 0, %s139
      %s154 = sphi 0, %s140
      %s158 = sphi 0, %s158
      %s160 = sphi 0, %s158
      %s161 = sphi 0, %s160
      %s175 = sphi 0, %s161
      %s179 = sphi 0, %s179
      %s181 = sphi 0, %s179
      %s182 = sphi 0, %s181
      %s196 = sphi 0, %s182
      %s202 = sphi 0, %s204
      %s205 = sphi 0, %s202
      %s206 = sphi 0, %s205
      %s222 = sphi 0, %s206
    $region4: #{tpu_custom_call.1} parent=1 // loop_header_branch
      %22 = sbr.rel (%p20) target = $region8
    $region5: #{tpu_custom_call.1} parent=1 // loop_body
      %s24 = ssub.s32 %s19, 1
      %s25 = ssub.s32 %s19, 2
      %s26 = sadd.s32 %s19, 1
      %s27 = ssub.s32 %s19, %s26
      %p28 = scmp.eq.s32.totalorder %s27, 0
      %s30 = sadd.s32 %s29, 1
      %s31 = scalar_select %p28, %s29, %s30
      %p34 = pneg %p28
      %p35 = scmp.eq.s32.totalorder %s19, 1
      %p36 = por %p34, %p35
      %p37 = scmp.ne.s32.totalorder %s29, %s32
      %p38 = scmp.eq.s32.totalorder %s19, 0
      %p39 = por %p37, %p38
      %p40 = scmp.ne.s32.totalorder %s29, %s32
      %p41 = scmp.eq.s32.totalorder %s24, 1
      %p42 = por %p40, %p41
      %p43 = scmp.ne.s32.totalorder %s32, %s33
      %p44 = scmp.eq.s32.totalorder %s24, 0
      %p45 = por %p43, %p44
      %p46 = scmp.ne.s32.totalorder %s32, %s33
      %p47 = scmp.eq.s32.totalorder %s25, 1
      %p48 = por %p46, %p47
      %p50 = scmp.ne.s32.totalorder %s33, %s49
      %p51 = scmp.eq.s32.totalorder %s25, 0
      %p52 = por %p50, %p51
      %s54 = sadd.s32 %s53, 1
      %p57 = scmp.eq.s32.totalorder %s19, 1
      %p58 = scmp.ne.s32.totalorder %s53, %s55
      %p59 = scmp.eq.s32.totalorder %s19, 0
      %p60 = por %p58, %p59
      %p61 = scmp.ne.s32.totalorder %s53, %s55
      %p62 = scmp.eq.s32.totalorder %s24, 1
      %p63 = por %p61, %p62
      %p64 = scmp.ne.s32.totalorder %s55, %s56
      %p65 = scmp.eq.s32.totalorder %s24, 0
      %p66 = por %p64, %p65
      %p67 = scmp.ne.s32.totalorder %s55, %s56
      %p68 = scmp.eq.s32.totalorder %s25, 1
      %p69 = por %p67, %p68
      %p71 = scmp.ne.s32.totalorder %s56, %s70
      %p72 = scmp.eq.s32.totalorder %s25, 0
      %p73 = por %p71, %p72
      %s75 = sadd.s32 %s74, 1
      %p78 = scmp.eq.s32.totalorder %s19, 1
      %p79 = scmp.ne.s32.totalorder %s74, %s76
      %p80 = scmp.eq.s32.totalorder %s19, 0
      %p81 = por %p79, %p80
      %p82 = scmp.ne.s32.totalorder %s74, %s76
      %p83 = scmp.eq.s32.totalorder %s24, 1
      %p84 = por %p82, %p83
      %p85 = scmp.ne.s32.totalorder %s76, %s77
      %p86 = scmp.eq.s32.totalorder %s24, 0
      %p87 = por %p85, %p86
      %p88 = scmp.ne.s32.totalorder %s76, %s77
      %p89 = scmp.eq.s32.totalorder %s25, 1
      %p90 = por %p88, %p89
      %p92 = scmp.ne.s32.totalorder %s77, %s91
      %p93 = scmp.eq.s32.totalorder %s25, 0
      %p94 = por %p92, %p93
      %s96 = sadd.s32 %s95, 1
      %p99 = scmp.eq.s32.totalorder %s19, 1
      %p100 = scmp.ne.s32.totalorder %s95, %s97
      %p101 = scmp.eq.s32.totalorder %s19, 0
      %p102 = por %p100, %p101
      %p103 = scmp.ne.s32.totalorder %s95, %s97
      %p104 = scmp.eq.s32.totalorder %s24, 1
      %p105 = por %p103, %p104
      %p106 = scmp.ne.s32.totalorder %s97, %s98
      %p107 = scmp.eq.s32.totalorder %s24, 0
      %p108 = por %p106, %p107
      %p109 = scmp.ne.s32.totalorder %s97, %s98
      %p110 = scmp.eq.s32.totalorder %s25, 1
      %p111 = por %p109, %p110
      %p113 = scmp.ne.s32.totalorder %s98, %s112
      %p114 = scmp.eq.s32.totalorder %s25, 0
      %p115 = por %p113, %p114
      %s117 = sadd.s32 %s116, 1
      %p120 = scmp.eq.s32.totalorder %s19, 1
      %p121 = scmp.ne.s32.totalorder %s116, %s118
      %p122 = scmp.eq.s32.totalorder %s19, 0
      %p123 = por %p121, %p122
      %p124 = scmp.ne.s32.totalorder %s116, %s118
      %p125 = scmp.eq.s32.totalorder %s24, 1
      %p126 = por %p124, %p125
      %p127 = scmp.ne.s32.totalorder %s118, %s119
      %p128 = scmp.eq.s32.totalorder %s24, 0
      %p129 = por %p127, %p128
      %p130 = scmp.ne.s32.totalorder %s118, %s119
      %p131 = scmp.eq.s32.totalorder %s25, 1
      %p132 = por %p130, %p131
      %p134 = scmp.ne.s32.totalorder %s119, %s133
      %p135 = scmp.eq.s32.totalorder %s25, 0
      %p136 = por %p134, %p135
      %s138 = sadd.s32 %s137, 1
      %p141 = scmp.eq.s32.totalorder %s19, 1
      %p142 = scmp.ne.s32.totalorder %s137, %s139
      %p143 = scmp.eq.s32.totalorder %s19, 0
      %p144 = por %p142, %p143
      %p145 = scmp.ne.s32.totalorder %s137, %s139
      %p146 = scmp.eq.s32.totalorder %s24, 1
      %p147 = por %p145, %p146
      %p148 = scmp.ne.s32.totalorder %s139, %s140
      %p149 = scmp.eq.s32.totalorder %s24, 0
      %p150 = por %p148, %p149
      %p151 = scmp.ne.s32.totalorder %s139, %s140
      %p152 = scmp.eq.s32.totalorder %s25, 1
      %p153 = por %p151, %p152
      %p155 = scmp.ne.s32.totalorder %s140, %s154
      %p156 = scmp.eq.s32.totalorder %s25, 0
      %p157 = por %p155, %p156
      %s159 = sadd.s32 %s158, 1
      %p162 = scmp.eq.s32.totalorder %s19, 1
      %p163 = scmp.ne.s32.totalorder %s158, %s160
      %p164 = scmp.eq.s32.totalorder %s19, 0
      %p165 = por %p163, %p164
      %p166 = scmp.ne.s32.totalorder %s158, %s160
      %p167 = scmp.eq.s32.totalorder %s24, 1
      %p168 = por %p166, %p167
      %p169 = scmp.ne.s32.totalorder %s160, %s161
      %p170 = scmp.eq.s32.totalorder %s24, 0
      %p171 = por %p169, %p170
      %p172 = scmp.ne.s32.totalorder %s160, %s161
      %p173 = scmp.eq.s32.totalorder %s25, 1
      %p174 = por %p172, %p173
      %p176 = scmp.ne.s32.totalorder %s161, %s175
      %p177 = scmp.eq.s32.totalorder %s25, 0
      %p178 = por %p176, %p177
      %s180 = sadd.s32 %s179, 1
      %p183 = scmp.eq.s32.totalorder %s19, 1
      %p184 = scmp.ne.s32.totalorder %s179, %s181
      %p185 = scmp.eq.s32.totalorder %s19, 0
      %p186 = por %p184, %p185
      %p187 = scmp.ne.s32.totalorder %s179, %s181
      %p188 = scmp.eq.s32.totalorder %s24, 1
      %p189 = por %p187, %p188
      %p190 = scmp.ne.s32.totalorder %s181, %s182
      %p191 = scmp.eq.s32.totalorder %s24, 0
      %p192 = por %p190, %p191
      %p193 = scmp.ne.s32.totalorder %s181, %s182
      %p194 = scmp.eq.s32.totalorder %s25, 1
      %p195 = por %p193, %p194
      %p197 = scmp.ne.s32.totalorder %s182, %s196
      %p198 = scmp.eq.s32.totalorder %s25, 0
      %p199 = por %p197, %p198
      %s200 = ssub.s32 %s19, %s26
      %p201 = scmp.eq.s32.totalorder %s200, 0
      %s203 = sadd.s32 %s202, 1
      %s204 = scalar_select %p201, %s202, %s203
      %p207 = pneg %p201
      %p208 = scmp.eq.s32.totalorder %s19, 1
      %p209 = por %p207, %p208
      %p210 = scmp.ne.s32.totalorder %s202, %s205
      %p211 = scmp.eq.s32.totalorder %s19, 0
      %p212 = por %p210, %p211
      %p213 = scmp.ne.s32.totalorder %s202, %s205
      %p214 = scmp.eq.s32.totalorder %s24, 1
      %p215 = por %p213, %p214
      %p216 = scmp.ne.s32.totalorder %s205, %s206
      %p217 = scmp.eq.s32.totalorder %s24, 0
      %p218 = por %p216, %p217
      %p219 = scmp.ne.s32.totalorder %s205, %s206
      %p220 = scmp.eq.s32.totalorder %s25, 1
      %p221 = por %p219, %p220
      %p223 = scmp.ne.s32.totalorder %s206, %s222
      %p224 = scmp.eq.s32.totalorder %s25, 0
      %p225 = por %p223, %p224
      %p226 = scmp.le.s32.totalorder 1, %s19
      %p227 = scmp.lt.s32.totalorder %s19, 3
      %p228 = pnand %p226, %p227
      %p229 = pneg %p228
      // Predicated region
      $region9: #{tpu_custom_call.1} parent=5 // pred_check
        _
      $region10: #{tpu_custom_call.1} parent=5 // pred_check_branch
        %231 = sbr.rel (%p228) target = $region12
      $region11: #{tpu_custom_call.1} parent=5 // pred_region
        %s232 = ssub.s32 %s19, 1
        // Predicated region
        $region13: #{tpu_custom_call.1} parent=11 // pred_check
          %p233 = pneg %p66
        $region14: #{tpu_custom_call.1} parent=11 // pred_check_branch
          %235 = sbr.rel (%p233) target = $region16
        $region15: #{tpu_custom_call.1} parent=11 // pred_region
          _
        $region16: #{tpu_custom_call.1} parent=11 // pred_fallthru
          _
        // Predicated region
        $region17: #{tpu_custom_call.1} parent=11 // pred_check
          %p236 = pneg %p87
        $region18: #{tpu_custom_call.1} parent=11 // pred_check_branch
          %238 = sbr.rel (%p236) target = $region20
        $region19: #{tpu_custom_call.1} parent=11 // pred_region
          %240 = vsyncadd [#allocation3], 0
          %s241 = sshll.u32 %s2, 4
          %s242 = int_to_ptr.hbm [resolvable:$true] %s241
          %s243 = sshll.u32 [#allocation2], 4
          %s244 = int_to_ptr.vmem [resolvable:$true] %s243
          %249 = dma.hbm_to_vmem [thread:$0]  %s242, 5120, %s244, [#allocation3], 64, 64, 4
        $region20: #{tpu_custom_call.1} parent=11 // pred_fallthru
          _
        // Predicated region
        $region21: #{tpu_custom_call.1} parent=11 // pred_check
          %p250 = pneg %p108
        $region22: #{tpu_custom_call.1} parent=11 // pred_check_branch
          %252 = sbr.rel (%p250) target = $region24
        $region23: #{tpu_custom_call.1} parent=11 // pred_region
          _
        $region24: #{tpu_custom_call.1} parent=11 // pred_fallthru
          _
        // Predicated region
        $region25: #{tpu_custom_call.1} parent=11 // pred_check
          %p253 = pneg %p129
        $region26: #{tpu_custom_call.1} parent=11 // pred_check_branch
          %255 = sbr.rel (%p253) target = $region28
        $region27: #{tpu_custom_call.1} parent=11 // pred_region
          %257 = vsyncadd [#allocation6], 0
          %s258 = sshll.u32 %s4, 4
          %s259 = int_to_ptr.hbm [resolvable:$true] %s258
          %s260 = sshll.u32 [#allocation5], 4
          %s261 = int_to_ptr.vmem [resolvable:$true] %s260
          %266 = dma.hbm_to_vmem [thread:$0]  %s259, 3072, %s261, [#allocation6], 64, 64, 4
        $region28: #{tpu_custom_call.1} parent=11 // pred_fallthru
          _
        // Predicated region
        $region29: #{tpu_custom_call.1} parent=11 // pred_check
          %p267 = pneg %p150
        $region30: #{tpu_custom_call.1} parent=11 // pred_check_branch
          %269 = sbr.rel (%p267) target = $region32
        $region31: #{tpu_custom_call.1} parent=11 // pred_region
          _
        $region32: #{tpu_custom_call.1} parent=11 // pred_fallthru
          _
        // Predicated region
        $region33: #{tpu_custom_call.1} parent=11 // pred_check
          %p270 = pneg %p171
        $region34: #{tpu_custom_call.1} parent=11 // pred_check_branch
          %272 = sbr.rel (%p270) target = $region36
        $region35: #{tpu_custom_call.1} parent=11 // pred_region
          %274 = vsyncadd [#allocation6], 0
          %s275 = sshll.u32 %s6, 4
          %s276 = int_to_ptr.hbm [resolvable:$true] %s275
          %s277 = sshll.u32 [#allocation7], 4
          %s278 = int_to_ptr.vmem [resolvable:$true] %s277
          %283 = dma.hbm_to_vmem [thread:$0]  %s276, 1024, %s278, [#allocation6], 64, 64, 4
        $region36: #{tpu_custom_call.1} parent=11 // pred_fallthru
          _
        // Predicated region
        $region37: #{tpu_custom_call.1} parent=11 // pred_check
          %p284 = pneg %p192
        $region38: #{tpu_custom_call.1} parent=11 // pred_check_branch
          %286 = sbr.rel (%p284) target = $region40
        $region39: #{tpu_custom_call.1} parent=11 // pred_region
          _
        $region40: #{tpu_custom_call.1} parent=11 // pred_fallthru
          _
      $region12: #{tpu_custom_call.1} parent=5 // pred_fallthru
        _
      %p287 = scmp.lt.s32.totalorder %s19, 2
      // Predicated region
      $region41: #{tpu_custom_call.1} parent=5 // pred_check
        %p288 = pneg %p287
      $region42: #{tpu_custom_call.1} parent=5 // pred_check_branch
        %290 = sbr.rel (%p288) target = $region44
      $region43: #{tpu_custom_call.1} parent=5 // pred_region
        // Predicated region
        $region45: #{tpu_custom_call.1} parent=43 // pred_check
          %p291 = pneg %p39
        $region46: #{tpu_custom_call.1} parent=43 // pred_check_branch
          %293 = sbr.rel (%p291) target = $region48
        $region47: #{tpu_custom_call.1} parent=43 // pred_region
          %s294 = smul.u32 48, %s19
          %p295 = scmp.lt.s32.totalorder %s294, 95
          %s296 = scalar_select %p295, %s294, 95
          %s297 = smul.addr %s296, 4
          %s298 = scalar_lea.vmem %s0, %s297
          %s299 = smul.u32 48, %s19
        $region48: #{tpu_custom_call.1} parent=43 // pred_fallthru
          _
      $region44: #{tpu_custom_call.1} parent=5 // pred_fallthru
        _
      %p300 = scmp.le.s32.totalorder 1, %s19
      %p301 = scmp.lt.s32.totalorder %s19, 3
      %p302 = pnand %p300, %p301
      %p303 = pneg %p302
      // Predicated region
      $region49: #{tpu_custom_call.1} parent=5 // pred_check
        _
      $region50: #{tpu_custom_call.1} parent=5 // pred_check_branch
        %305 = sbr.rel (%p302) target = $region52
      $region51: #{tpu_custom_call.1} parent=5 // pred_region
        %s306 = ssub.s32 %s19, 1
        // Predicated region
        $region53: #{tpu_custom_call.1} parent=51 // pred_check
          %p307 = pneg %p87
        $region54: #{tpu_custom_call.1} parent=51 // pred_check_branch
          %309 = sbr.rel (%p307) target = $region56
        $region55: #{tpu_custom_call.1} parent=51 // pred_region
          %311 = dma.done [#allocation3], 5120
        $region56: #{tpu_custom_call.1} parent=51 // pred_fallthru
          _
        // Predicated region
        $region57: #{tpu_custom_call.1} parent=51 // pred_check
          %p312 = pneg %p129
        $region58: #{tpu_custom_call.1} parent=51 // pred_check_branch
          %314 = sbr.rel (%p312) target = $region60
        $region59: #{tpu_custom_call.1} parent=51 // pred_region
          %316 = dma.done [#allocation6], 3072
        $region60: #{tpu_custom_call.1} parent=51 // pred_fallthru
          _
        // Predicated region
        $region61: #{tpu_custom_call.1} parent=51 // pred_check
          %p317 = pneg %p171
        $region62: #{tpu_custom_call.1} parent=51 // pred_check_branch
          %319 = sbr.rel (%p317) target = $region64
        $region63: #{tpu_custom_call.1} parent=51 // pred_region
          %321 = dma.done [#allocation6], 1024
        $region64: #{tpu_custom_call.1} parent=51 // pred_fallthru
          _
        %s322 = smul.u32 48, %s24
        %p323 = scmp.lt.s32.totalorder %s322, 95
        %s324 = scalar_select %p323, %s322, 95
        %s325 = smul.addr %s324, 4
        %s326 = scalar_lea.vmem %s0, %s325
        %p327 = pneg %p45
        %p328 = pneg %p42
        %p329 = pneg %p66
        %p330 = pneg %p63
        %p331 = pneg %p87
        %p332 = pneg %p84
        %p333 = pneg %p108
        %p334 = pneg %p105
        %p335 = pneg %p129
        %p336 = pneg %p126
        %p337 = pneg %p150
        %p338 = pneg %p147
        %p339 = pneg %p171
        %p340 = pneg %p168
        %p341 = pneg %p192
        %p342 = pneg %p189
        %p343 = pneg %p218
        %p344 = pneg %p215
        %s345 = sand.u32 %s205, 1
        %s346 = scalar_lea.sflag [#allocation4], %s345
        %s347 = sand.u32 %s205, 1
        %s348 = smul.addr %s347, 16
        %s349 = scalar_lea.vmem [#allocation8], %s348
        %s350 = smul.u32 48, %s24
        %p351 = scmp.lt.s32.totalorder %s350, 95
        %s352 = scalar_select %p351, %s350, 95
        %s353 = smul.addr %s352, 4
        %s354 = scalar_lea.vmem %s0, %s353
        %s355 = smul.u32 48, %s24
        %s356 = smul.u32 2, %s24
        %v357 = vld [vmem:[%s354] sm:$0xf]
        %v358 = vld [vmem:[%s354 + $0x4] sm:$0xf]
        %v359 = vld [vmem:[%s354 + $0x8] sm:$0xf]
        %v360 = vld [vmem:[%s354 + $0xc] sm:$0xf]
        %v361 = vld [vmem:[%s354 + $0x10] sm:$0xf]
        %v362 = vld [vmem:[%s354 + $0x14] sm:$0xf]
        %v363 = vld [vmem:[%s354 + $0x18] sm:$0xf]
        %v364 = vld [vmem:[%s354 + $0x1c] sm:$0xf]
        %v365 = vld [vmem:[%s354 + $0x20] sm:$0xf]
        %v366 = vld [vmem:[%s354 + $0x24] sm:$0xf]
        %v367 = vld [vmem:[%s354 + $0x28] sm:$0xf]
        %v368 = vld [vmem:[%s354 + $0x2c] sm:$0xf]
        %v369 = vld [vmem:[%s354 + $0x30] sm:$0xf]
        %v370 = vld [vmem:[%s354 + $0x34] sm:$0xf]
        %v371 = vld [vmem:[%s354 + $0x38] sm:$0xf]
        %v372 = vld [vmem:[%s354 + $0x3c] sm:$0xf]
        %v373 = vld [vmem:[%s354 + $0x40] sm:$0xf]
        %v374 = vld [vmem:[%s354 + $0x44] sm:$0xf]
        %v375 = vld [vmem:[%s354 + $0x48] sm:$0xf]
        %v376 = vld [vmem:[%s354 + $0x4c] sm:$0xf]
        %v377 = vld [vmem:[%s354 + $0x50] sm:$0xf]
        %v378 = vld [vmem:[%s354 + $0x54] sm:$0xf]
        %v379 = vld [vmem:[%s354 + $0x58] sm:$0xf]
        %v380 = vld [vmem:[%s354 + $0x5c] sm:$0xf]
        %v381 = vld [vmem:[%s354 + $0x60] sm:$0xf]
        %v382 = vld [vmem:[%s354 + $0x64] sm:$0xf]
        %v383 = vld [vmem:[%s354 + $0x68] sm:$0xf]
        %v384 = vld [vmem:[%s354 + $0x6c] sm:$0xf]
        %v385 = vld [vmem:[%s354 + $0x70] sm:$0xf]
        %v386 = vld [vmem:[%s354 + $0x74] sm:$0xf]
        %v387 = vld [vmem:[%s354 + $0x78] sm:$0xf]
        %v388 = vld [vmem:[%s354 + $0x7c] sm:$0xf]
        %v389 = vld [vmem:[%s354 + $0x80] sm:$0xf]
        %v390 = vld [vmem:[%s354 + $0x84] sm:$0xf]
        %v391 = vld [vmem:[%s354 + $0x88] sm:$0xf]
        %v392 = vld [vmem:[%s354 + $0x8c] sm:$0xf]
        %v393 = vld [vmem:[%s354 + $0x90] sm:$0xf]
        %v394 = vld [vmem:[%s354 + $0x94] sm:$0xf]
        %v395 = vld [vmem:[%s354 + $0x98] sm:$0xf]
        %v396 = vld [vmem:[%s354 + $0x9c] sm:$0xf]
        %v397 = vld [vmem:[%s354 + $0xa0] sm:$0xf]
        %v398 = vld [vmem:[%s354 + $0xa4] sm:$0xf]
        %v399 = vld [vmem:[%s354 + $0xa8] sm:$0xf]
        %v400 = vld [vmem:[%s354 + $0xac] sm:$0xf]
        %v401 = vld [vmem:[%s354 + $0xb0] sm:$0xf]
        %v402 = vld [vmem:[%s354 + $0xb4] sm:$0xf]
        %v403 = vld [vmem:[%s354 + $0xb8] sm:$0xf]
        %v404 = vld [vmem:[%s354 + $0xbc] sm:$0xf]
        %v405 = vld [vmem:[#allocation2] sm:$0xf]
        %v406 = vld [vmem:[#allocation2 + $0x4] sm:$0xf]
        %v407 = vld [vmem:[#allocation2 + $0x8] sm:$0xf]
        %v408 = vld [vmem:[#allocation2 + $0xc] sm:$0xf]
        %v409 = vld [vmem:[#allocation2 + $0x10] sm:$0xf]
        %v410 = vld [vmem:[#allocation2 + $0x14] sm:$0xf]
        %v411 = vld [vmem:[#allocation2 + $0x18] sm:$0xf]
        %v412 = vld [vmem:[#allocation2 + $0x1c] sm:$0xf]
        %v413 = vld [vmem:[#allocation2 + $0x20] sm:$0xf]
        %v414 = vld [vmem:[#allocation2 + $0x24] sm:$0xf]
        %v415 = vld [vmem:[#allocation2 + $0x28] sm:$0xf]
        %v416 = vld [vmem:[#allocation2 + $0x2c] sm:$0xf]
        %v417 = vld [vmem:[#allocation2 + $0x30] sm:$0xf]
        %v418 = vld [vmem:[#allocation2 + $0x34] sm:$0xf]
        %v419 = vld [vmem:[#allocation2 + $0x38] sm:$0xf]
        %v420 = vld [vmem:[#allocation2 + $0x3c] sm:$0xf]
        %s421 = scalar_lea.vmem [#allocation2], 64
        %v422 = vld [vmem:[%s421] sm:$0xf]
        %v423 = vld [vmem:[%s421 + $0x4] sm:$0xf]
        %v424 = vld [vmem:[%s421 + $0x8] sm:$0xf]
        %v425 = vld [vmem:[%s421 + $0xc] sm:$0xf]
        %v426 = vld [vmem:[%s421 + $0x10] sm:$0xf]
        %v427 = vld [vmem:[%s421 + $0x14] sm:$0xf]
        %v428 = vld [vmem:[%s421 + $0x18] sm:$0xf]
        %v429 = vld [vmem:[%s421 + $0x1c] sm:$0xf]
        %v430 = vld [vmem:[%s421 + $0x20] sm:$0xf]
        %v431 = vld [vmem:[%s421 + $0x24] sm:$0xf]
        %v432 = vld [vmem:[%s421 + $0x28] sm:$0xf]
        %v433 = vld [vmem:[%s421 + $0x2c] sm:$0xf]
        %v434 = vld [vmem:[%s421 + $0x30] sm:$0xf]
        %v435 = vld [vmem:[%s421 + $0x34] sm:$0xf]
        %v436 = vld [vmem:[%s421 + $0x38] sm:$0xf]
        %v437 = vld [vmem:[%s421 + $0x3c] sm:$0xf]
        %v486 = vunpack.c.l.b16 %v357
        %v487 = vunpack.c.l.b16 %v358
        %v488 = vunpack.c.l.b16 %v359
        %v489 = vunpack.c.l.b16 %v360
        %v490 = vunpack.c.l.b16 %v361
        %v491 = vunpack.c.l.b16 %v362
        %v492 = vunpack.c.l.b16 %v363
        %v493 = vunpack.c.l.b16 %v364
        %v494 = vunpack.c.l.b16 %v365
        %v495 = vunpack.c.l.b16 %v366
        %v496 = vunpack.c.l.b16 %v367
        %v497 = vunpack.c.l.b16 %v368
        %v498 = vunpack.c.l.b16 %v369
        %v499 = vunpack.c.l.b16 %v370
        %v500 = vunpack.c.l.b16 %v371
        %v501 = vunpack.c.l.b16 %v372
        %v502 = vunpack.c.l.b16 %v373
        %v503 = vunpack.c.l.b16 %v374
        %v504 = vunpack.c.l.b16 %v375
        %v505 = vunpack.c.l.b16 %v376
        %v506 = vunpack.c.l.b16 %v377
        %v507 = vunpack.c.l.b16 %v378
        %v508 = vunpack.c.l.b16 %v379
        %v509 = vunpack.c.l.b16 %v380
        %v510 = vunpack.c.l.b16 %v381
        %v511 = vunpack.c.l.b16 %v382
        %v512 = vunpack.c.l.b16 %v383
        %v513 = vunpack.c.l.b16 %v384
        %v514 = vunpack.c.l.b16 %v385
        %v515 = vunpack.c.l.b16 %v386
        %v516 = vunpack.c.l.b16 %v387
        %v517 = vunpack.c.l.b16 %v388
        %v518 = vunpack.c.l.b16 %v389
        %v519 = vunpack.c.l.b16 %v390
        %v520 = vunpack.c.l.b16 %v391
        %v521 = vunpack.c.l.b16 %v392
        %v522 = vunpack.c.l.b16 %v393
        %v523 = vunpack.c.l.b16 %v394
        %v524 = vunpack.c.l.b16 %v395
        %v525 = vunpack.c.l.b16 %v396
        %v526 = vunpack.c.l.b16 %v397
        %v527 = vunpack.c.l.b16 %v398
        %v528 = vunpack.c.l.b16 %v399
        %v529 = vunpack.c.l.b16 %v400
        %v530 = vunpack.c.l.b16 %v401
        %v531 = vunpack.c.l.b16 %v402
        %v532 = vunpack.c.l.b16 %v403
        %v533 = vunpack.c.l.b16 %v404
        %v534 = vpack.c.b16 %v487, %v486
        %v535 = vpack.c.b16 %v489, %v488
        %v536 = vpack.c.b16 %v491, %v490
        %v537 = vpack.c.b16 %v493, %v492
        %v538 = vpack.c.b16 %v495, %v494
        %v539 = vpack.c.b16 %v497, %v496
        %v540 = vpack.c.b16 %v499, %v498
        %v541 = vpack.c.b16 %v501, %v500
        %v542 = vpack.c.b16 %v503, %v502
        %v543 = vpack.c.b16 %v505, %v504
        %v544 = vpack.c.b16 %v507, %v506
        %v545 = vpack.c.b16 %v509, %v508
        %v546 = vpack.c.b16 %v511, %v510
        %v547 = vpack.c.b16 %v513, %v512
        %v548 = vpack.c.b16 %v515, %v514
        %v549 = vpack.c.b16 %v517, %v516
        %v550 = vpack.c.b16 %v519, %v518
        %v551 = vpack.c.b16 %v521, %v520
        %v552 = vpack.c.b16 %v523, %v522
        %v553 = vpack.c.b16 %v525, %v524
        %v554 = vpack.c.b16 %v527, %v526
        %v555 = vpack.c.b16 %v529, %v528
        %v556 = vpack.c.b16 %v531, %v530
        %v557 = vpack.c.b16 %v533, %v532
        %vm558 = vsmask.f32 7424
        %v560 = vshrl.u32 %v534, 16
        %v562 = vshll.u32 %v534, 16
        %v564 = vrot.slane %v562, 1
        %v565 = vor.u32 %v560, %v564
        %v567 = vshll.u32 %v535, 16
        %v569 = vrot.slane %v567, 1
        %v570 = vsel %vm558, %v565, %v569
        %v571 = vshrl.u32 %v535, 16
        %v573 = vor.u32 %v571, %v569
        %v575 = vshll.u32 %v536, 16
        %v577 = vrot.slane %v575, 1
        %v578 = vsel %vm558, %v573, %v577
        %v579 = vshrl.u32 %v536, 16
        %v581 = vor.u32 %v579, %v577
        %v583 = vshll.u32 %v537, 16
        %v585 = vrot.slane %v583, 1
        %v586 = vsel %vm558, %v581, %v585
        %v587 = vshrl.u32 %v537, 16
        %v589 = vor.u32 %v587, %v585
        %v591 = vshll.u32 %v538, 16
        %v593 = vrot.slane %v591, 1
        %v594 = vsel %vm558, %v589, %v593
        %v595 = vshrl.u32 %v538, 16
        %v597 = vor.u32 %v595, %v593
        %v599 = vshll.u32 %v539, 16
        %v601 = vrot.slane %v599, 1
        %v602 = vsel %vm558, %v597, %v601
        %v603 = vshrl.u32 %v539, 16
        %v605 = vor.u32 %v603, %v601
        %v607 = vshll.u32 %v540, 16
        %v609 = vrot.slane %v607, 1
        %v610 = vsel %vm558, %v605, %v609
        %v611 = vshrl.u32 %v540, 16
        %v613 = vor.u32 %v611, %v609
        %v615 = vshll.u32 %v541, 16
        %v617 = vrot.slane %v615, 1
        %v618 = vsel %vm558, %v613, %v617
        %v619 = vshrl.u32 %v541, 16
        %v621 = vor.u32 %v619, %v617
        %v623 = vshll.u32 %v542, 16
        %v625 = vrot.slane %v623, 1
        %v626 = vsel %vm558, %v621, %v625
        %v627 = vshrl.u32 %v542, 16
        %v629 = vor.u32 %v627, %v625
        %v631 = vshll.u32 %v543, 16
        %v633 = vrot.slane %v631, 1
        %v634 = vsel %vm558, %v629, %v633
        %v635 = vshrl.u32 %v543, 16
        %v637 = vor.u32 %v635, %v633
        %v639 = vshll.u32 %v544, 16
        %v641 = vrot.slane %v639, 1
        %v642 = vsel %vm558, %v637, %v641
        %v643 = vshrl.u32 %v544, 16
        %v645 = vor.u32 %v643, %v641
        %v647 = vshll.u32 %v545, 16
        %v649 = vrot.slane %v647, 1
        %v650 = vsel %vm558, %v645, %v649
        %v651 = vshrl.u32 %v545, 16
        %v653 = vor.u32 %v651, %v649
        %v655 = vshll.u32 %v546, 16
        %v657 = vrot.slane %v655, 1
        %v658 = vsel %vm558, %v653, %v657
        %v659 = vshrl.u32 %v546, 16
        %v661 = vor.u32 %v659, %v657
        %v663 = vshll.u32 %v547, 16
        %v665 = vrot.slane %v663, 1
        %v666 = vsel %vm558, %v661, %v665
        %v667 = vshrl.u32 %v547, 16
        %v669 = vor.u32 %v667, %v665
        %v671 = vshll.u32 %v548, 16
        %v673 = vrot.slane %v671, 1
        %v674 = vsel %vm558, %v669, %v673
        %v675 = vshrl.u32 %v548, 16
        %v677 = vor.u32 %v675, %v673
        %v679 = vshll.u32 %v549, 16
        %v681 = vrot.slane %v679, 1
        %v682 = vsel %vm558, %v677, %v681
        %v683 = vshrl.u32 %v549, 16
        %v685 = vor.u32 %v683, %v681
        %v687 = vshll.u32 %v550, 16
        %v689 = vrot.slane %v687, 1
        %v690 = vsel %vm558, %v685, %v689
        %v691 = vshrl.u32 %v550, 16
        %v693 = vor.u32 %v691, %v689
        %v695 = vshll.u32 %v551, 16
        %v697 = vrot.slane %v695, 1
        %v698 = vsel %vm558, %v693, %v697
        %v699 = vshrl.u32 %v551, 16
        %v701 = vor.u32 %v699, %v697
        %v703 = vshll.u32 %v552, 16
        %v705 = vrot.slane %v703, 1
        %v706 = vsel %vm558, %v701, %v705
        %v707 = vshrl.u32 %v552, 16
        %v709 = vor.u32 %v707, %v705
        %v711 = vshll.u32 %v553, 16
        %v713 = vrot.slane %v711, 1
        %v714 = vsel %vm558, %v709, %v713
        %v715 = vshrl.u32 %v553, 16
        %v717 = vor.u32 %v715, %v713
        %v719 = vshll.u32 %v554, 16
        %v721 = vrot.slane %v719, 1
        %v722 = vsel %vm558, %v717, %v721
        %v723 = vshrl.u32 %v554, 16
        %v725 = vor.u32 %v723, %v721
        %v727 = vshll.u32 %v555, 16
        %v729 = vrot.slane %v727, 1
        %v730 = vsel %vm558, %v725, %v729
        %v731 = vshrl.u32 %v555, 16
        %v733 = vor.u32 %v731, %v729
        %v735 = vshll.u32 %v556, 16
        %v737 = vrot.slane %v735, 1
        %v738 = vsel %vm558, %v733, %v737
        %v739 = vshrl.u32 %v556, 16
        %v741 = vor.u32 %v739, %v737
        %v743 = vshll.u32 %v557, 16
        %v745 = vrot.slane %v743, 1
        %v746 = vsel %vm558, %v741, %v745
        %v747 = vshrl.u32 %v557, 16
        %v749 = vor.u32 %v747, %v745
        %v790 = vunpack.c.l.b16 %v422
        %v791 = vunpack.c.l.b16 %v423
        %v792 = vunpack.c.l.b16 %v424
        %v793 = vunpack.c.l.b16 %v425
        %v794 = vunpack.c.l.b16 %v426
        %v795 = vunpack.c.l.b16 %v427
        %v796 = vunpack.c.l.b16 %v428
        %v797 = vunpack.c.l.b16 %v429
        %v798 = vunpack.c.l.b16 %v430
        %v799 = vunpack.c.l.b16 %v431
        %v800 = vunpack.c.l.b16 %v432
        %v801 = vunpack.c.l.b16 %v433
        %v802 = vunpack.c.l.b16 %v434
        %v803 = vunpack.c.l.b16 %v435
        %v804 = vunpack.c.l.b16 %v436
        %v805 = vunpack.c.l.b16 %v437
        %v806 = vpack.c.b16 %v791, %v790
        %v807 = vpack.c.b16 %v793, %v792
        %v808 = vpack.c.b16 %v795, %v794
        %v809 = vpack.c.b16 %v797, %v796
        %v810 = vpack.c.b16 %v799, %v798
        %v811 = vpack.c.b16 %v801, %v800
        %v812 = vpack.c.b16 %v803, %v802
        %v813 = vpack.c.b16 %v805, %v804
        %822 = vmatpush.bf16.msra.mxu0 %v813
        %823 = vmatpush.bf16.msra.mxu0 %v812
        %824 = vmatpush.bf16.msra.mxu0 %v811
        %825 = vmatpush.bf16.msra.mxu0 %v810
        %826 = vmatpush.bf16.msra.mxu0 %v809
        %827 = vmatpush.bf16.msra.mxu0 %v808
        %828 = vmatpush.bf16.msra.mxu0 %v807
        %829 = vmatpush.bf16.msra.mxu0 %v806
        %830 = vmatmul.bf16.gmra.mxu0 %v570
        %v831 = vpop.f32.mrf.mxu0
        %v832 = vadd.f32 0.0, %v831
        %v833 = vpop.f32.mrf.mxu0
        %v834 = vadd.f32 0.0, %v833
        %835 = vmatmul.bf16.gmra.mxu0 %v578
        %v836 = vpop.f32.mrf.mxu0
        %v837 = vadd.f32 0.0, %v836
        %v838 = vpop.f32.mrf.mxu0
        %v839 = vadd.f32 0.0, %v838
        %840 = vmatmul.bf16.gmra.mxu0 %v586
        %v841 = vpop.f32.mrf.mxu0
        %v842 = vadd.f32 0.0, %v841
        %v843 = vpop.f32.mrf.mxu0
        %v844 = vadd.f32 0.0, %v843
        %845 = vmatmul.bf16.gmra.mxu0 %v594
        %v846 = vpop.f32.mrf.mxu0
        %v847 = vadd.f32 0.0, %v846
        %v848 = vpop.f32.mrf.mxu0
        %v849 = vadd.f32 0.0, %v848
        %850 = vmatmul.bf16.gmra.mxu0 %v602
        %v851 = vpop.f32.mrf.mxu0
        %v852 = vadd.f32 0.0, %v851
        %v853 = vpop.f32.mrf.mxu0
        %v854 = vadd.f32 0.0, %v853
        %855 = vmatmul.bf16.gmra.mxu0 %v610
        %v856 = vpop.f32.mrf.mxu0
        %v857 = vadd.f32 0.0, %v856
        %v858 = vpop.f32.mrf.mxu0
        %v859 = vadd.f32 0.0, %v858
        %860 = vmatmul.bf16.gmra.mxu0 %v618
        %v861 = vpop.f32.mrf.mxu0
        %v862 = vadd.f32 0.0, %v861
        %v863 = vpop.f32.mrf.mxu0
        %v864 = vadd.f32 0.0, %v863
        %865 = vmatmul.bf16.gmra.mxu0 %v626
        %v866 = vpop.f32.mrf.mxu0
        %v867 = vadd.f32 0.0, %v866
        %v868 = vpop.f32.mrf.mxu0
        %v869 = vadd.f32 0.0, %v868
        %870 = vmatmul.bf16.gmra.mxu0 %v634
        %v871 = vpop.f32.mrf.mxu0
        %v872 = vadd.f32 0.0, %v871
        %v873 = vpop.f32.mrf.mxu0
        %v874 = vadd.f32 0.0, %v873
        %875 = vmatmul.bf16.gmra.mxu0 %v642
        %v876 = vpop.f32.mrf.mxu0
        %v877 = vadd.f32 0.0, %v876
        %v878 = vpop.f32.mrf.mxu0
        %v879 = vadd.f32 0.0, %v878
        %880 = vmatmul.bf16.gmra.mxu0 %v650
        %v881 = vpop.f32.mrf.mxu0
        %v882 = vadd.f32 0.0, %v881
        %v883 = vpop.f32.mrf.mxu0
        %v884 = vadd.f32 0.0, %v883
        %885 = vmatmul.bf16.gmra.mxu0 %v658
        %v886 = vpop.f32.mrf.mxu0
        %v887 = vadd.f32 0.0, %v886
        %v888 = vpop.f32.mrf.mxu0
        %v889 = vadd.f32 0.0, %v888
        %890 = vmatmul.bf16.gmra.mxu0 %v666
        %v891 = vpop.f32.mrf.mxu0
        %v892 = vadd.f32 0.0, %v891
        %v893 = vpop.f32.mrf.mxu0
        %v894 = vadd.f32 0.0, %v893
        %895 = vmatmul.bf16.gmra.mxu0 %v674
        %v896 = vpop.f32.mrf.mxu0
        %v897 = vadd.f32 0.0, %v896
        %v898 = vpop.f32.mrf.mxu0
        %v899 = vadd.f32 0.0, %v898
        %900 = vmatmul.bf16.gmra.mxu0 %v682
        %v901 = vpop.f32.mrf.mxu0
        %v902 = vadd.f32 0.0, %v901
        %v903 = vpop.f32.mrf.mxu0
        %v904 = vadd.f32 0.0, %v903
        %905 = vmatmul.bf16.gmra.mxu0 %v690
        %v906 = vpop.f32.mrf.mxu0
        %v907 = vadd.f32 0.0, %v906
        %v908 = vpop.f32.mrf.mxu0
        %v909 = vadd.f32 0.0, %v908
        %910 = vmatmul.bf16.gmra.mxu0 %v698
        %v911 = vpop.f32.mrf.mxu0
        %v912 = vadd.f32 0.0, %v911
        %v913 = vpop.f32.mrf.mxu0
        %v914 = vadd.f32 0.0, %v913
        %915 = vmatmul.bf16.gmra.mxu0 %v706
        %v916 = vpop.f32.mrf.mxu0
        %v917 = vadd.f32 0.0, %v916
        %v918 = vpop.f32.mrf.mxu0
        %v919 = vadd.f32 0.0, %v918
        %920 = vmatmul.bf16.gmra.mxu0 %v714
        %v921 = vpop.f32.mrf.mxu0
        %v922 = vadd.f32 0.0, %v921
        %v923 = vpop.f32.mrf.mxu0
        %v924 = vadd.f32 0.0, %v923
        %925 = vmatmul.bf16.gmra.mxu0 %v722
        %v926 = vpop.f32.mrf.mxu0
        %v927 = vadd.f32 0.0, %v926
        %v928 = vpop.f32.mrf.mxu0
        %v929 = vadd.f32 0.0, %v928
        %930 = vmatmul.bf16.gmra.mxu0 %v730
        %v931 = vpop.f32.mrf.mxu0
        %v932 = vadd.f32 0.0, %v931
        %v933 = vpop.f32.mrf.mxu0
        %v934 = vadd.f32 0.0, %v933
        %935 = vmatmul.bf16.gmra.mxu0 %v738
        %v936 = vpop.f32.mrf.mxu0
        %v937 = vadd.f32 0.0, %v936
        %v938 = vpop.f32.mrf.mxu0
        %v939 = vadd.f32 0.0, %v938
        %940 = vmatmul.bf16.gmra.mxu0 %v746
        %v941 = vpop.f32.mrf.mxu0
        %v942 = vadd.f32 0.0, %v941
        %v943 = vpop.f32.mrf.mxu0
        %v944 = vadd.f32 0.0, %v943
        %945 = vmatmul.bf16.gmra.mxu0 %v749
        %v946 = vpop.f32.mrf.mxu0
        %v947 = vadd.f32 0.0, %v946
        %v948 = vpop.f32.mrf.mxu0
        %v949 = vadd.f32 0.0, %v948
        %950 = vdwg.mxu0
        %v991 = vunpack.c.l.b16 %v405
        %v992 = vunpack.c.l.b16 %v406
        %v993 = vunpack.c.l.b16 %v407
        %v994 = vunpack.c.l.b16 %v408
        %v995 = vunpack.c.l.b16 %v409
        %v996 = vunpack.c.l.b16 %v410
        %v997 = vunpack.c.l.b16 %v411
        %v998 = vunpack.c.l.b16 %v412
        %v999 = vunpack.c.l.b16 %v413
        %v1000 = vunpack.c.l.b16 %v414
        %v1001 = vunpack.c.l.b16 %v415
        %v1002 = vunpack.c.l.b16 %v416
        %v1003 = vunpack.c.l.b16 %v417
        %v1004 = vunpack.c.l.b16 %v418
        %v1005 = vunpack.c.l.b16 %v419
        %v1006 = vunpack.c.l.b16 %v420
        %v1007 = vpack.c.b16 %v992, %v991
        %v1008 = vpack.c.b16 %v994, %v993
        %v1009 = vpack.c.b16 %v996, %v995
        %v1010 = vpack.c.b16 %v998, %v997
        %v1011 = vpack.c.b16 %v1000, %v999
        %v1012 = vpack.c.b16 %v1002, %v1001
        %v1013 = vpack.c.b16 %v1004, %v1003
        %v1014 = vpack.c.b16 %v1006, %v1005
        %1023 = vmatpush.bf16.msra.mxu0 %v1014
        %1024 = vmatpush.bf16.msra.mxu0 %v1013
        %1025 = vmatpush.bf16.msra.mxu0 %v1012
        %1026 = vmatpush.bf16.msra.mxu0 %v1011
        %1027 = vmatpush.bf16.msra.mxu0 %v1010
        %1028 = vmatpush.bf16.msra.mxu0 %v1009
        %1029 = vmatpush.bf16.msra.mxu0 %v1008
        %1030 = vmatpush.bf16.msra.mxu0 %v1007
        %1031 = vmatmul.bf16.gmra.mxu0 %v534
        %v1032 = vpop.f32.mrf.mxu0
        %v1033 = vadd.f32 %v832, %v1032
        %v1034 = vpop.f32.mrf.mxu0
        %v1035 = vadd.f32 %v834, %v1034
        %1036 = vmatmul.bf16.gmra.mxu0 %v535
        %v1037 = vpop.f32.mrf.mxu0
        %v1038 = vadd.f32 %v837, %v1037
        %v1039 = vpop.f32.mrf.mxu0
        %v1040 = vadd.f32 %v839, %v1039
        %1041 = vmatmul.bf16.gmra.mxu0 %v536
        %v1042 = vpop.f32.mrf.mxu0
        %v1043 = vadd.f32 %v842, %v1042
        %v1044 = vpop.f32.mrf.mxu0
        %v1045 = vadd.f32 %v844, %v1044
        %1046 = vmatmul.bf16.gmra.mxu0 %v537
        %v1047 = vpop.f32.mrf.mxu0
        %v1048 = vadd.f32 %v847, %v1047
        %v1049 = vpop.f32.mrf.mxu0
        %v1050 = vadd.f32 %v849, %v1049
        %1051 = vmatmul.bf16.gmra.mxu0 %v538
        %v1052 = vpop.f32.mrf.mxu0
        %v1053 = vadd.f32 %v852, %v1052
        %v1054 = vpop.f32.mrf.mxu0
        %v1055 = vadd.f32 %v854, %v1054
        %1056 = vmatmul.bf16.gmra.mxu0 %v539
        %v1057 = vpop.f32.mrf.mxu0
        %v1058 = vadd.f32 %v857, %v1057
        %v1059 = vpop.f32.mrf.mxu0
        %v1060 = vadd.f32 %v859, %v1059
        %1061 = vmatmul.bf16.gmra.mxu0 %v540
        %v1062 = vpop.f32.mrf.mxu0
        %v1063 = vadd.f32 %v862, %v1062
        %v1064 = vpop.f32.mrf.mxu0
        %v1065 = vadd.f32 %v864, %v1064
        %1066 = vmatmul.bf16.gmra.mxu0 %v541
        %v1067 = vpop.f32.mrf.mxu0
        %v1068 = vadd.f32 %v867, %v1067
        %v1069 = vpop.f32.mrf.mxu0
        %v1070 = vadd.f32 %v869, %v1069
        %1071 = vmatmul.bf16.gmra.mxu0 %v542
        %v1072 = vpop.f32.mrf.mxu0
        %v1073 = vadd.f32 %v872, %v1072
        %v1074 = vpop.f32.mrf.mxu0
        %v1075 = vadd.f32 %v874, %v1074
        %1076 = vmatmul.bf16.gmra.mxu0 %v543
        %v1077 = vpop.f32.mrf.mxu0
        %v1078 = vadd.f32 %v877, %v1077
        %v1079 = vpop.f32.mrf.mxu0
        %v1080 = vadd.f32 %v879, %v1079
        %1081 = vmatmul.bf16.gmra.mxu0 %v544
        %v1082 = vpop.f32.mrf.mxu0
        %v1083 = vadd.f32 %v882, %v1082
        %v1084 = vpop.f32.mrf.mxu0
        %v1085 = vadd.f32 %v884, %v1084
        %1086 = vmatmul.bf16.gmra.mxu0 %v545
        %v1087 = vpop.f32.mrf.mxu0
        %v1088 = vadd.f32 %v887, %v1087
        %v1089 = vpop.f32.mrf.mxu0
        %v1090 = vadd.f32 %v889, %v1089
        %1091 = vmatmul.bf16.gmra.mxu0 %v546
        %v1092 = vpop.f32.mrf.mxu0
        %v1093 = vadd.f32 %v892, %v1092
        %v1094 = vpop.f32.mrf.mxu0
        %v1095 = vadd.f32 %v894, %v1094
        %1096 = vmatmul.bf16.gmra.mxu0 %v547
        %v1097 = vpop.f32.mrf.mxu0
        %v1098 = vadd.f32 %v897, %v1097
        %v1099 = vpop.f32.mrf.mxu0
        %v1100 = vadd.f32 %v899, %v1099
        %1101 = vmatmul.bf16.gmra.mxu0 %v548
        %v1102 = vpop.f32.mrf.mxu0
        %v1103 = vadd.f32 %v902, %v1102
        %v1104 = vpop.f32.mrf.mxu0
        %v1105 = vadd.f32 %v904, %v1104
        %1106 = vmatmul.bf16.gmra.mxu0 %v549
        %v1107 = vpop.f32.mrf.mxu0
        %v1108 = vadd.f32 %v907, %v1107
        %v1109 = vpop.f32.mrf.mxu0
        %v1110 = vadd.f32 %v909, %v1109
        %1111 = vmatmul.bf16.gmra.mxu0 %v550
        %v1112 = vpop.f32.mrf.mxu0
        %v1113 = vadd.f32 %v912, %v1112
        %v1114 = vpop.f32.mrf.mxu0
        %v1115 = vadd.f32 %v914, %v1114
        %1116 = vmatmul.bf16.gmra.mxu0 %v551
        %v1117 = vpop.f32.mrf.mxu0
        %v1118 = vadd.f32 %v917, %v1117
        %v1119 = vpop.f32.mrf.mxu0
        %v1120 = vadd.f32 %v919, %v1119
        %1121 = vmatmul.bf16.gmra.mxu0 %v552
        %v1122 = vpop.f32.mrf.mxu0
        %v1123 = vadd.f32 %v922, %v1122
        %v1124 = vpop.f32.mrf.mxu0
        %v1125 = vadd.f32 %v924, %v1124
        %1126 = vmatmul.bf16.gmra.mxu0 %v553
        %v1127 = vpop.f32.mrf.mxu0
        %v1128 = vadd.f32 %v927, %v1127
        %v1129 = vpop.f32.mrf.mxu0
        %v1130 = vadd.f32 %v929, %v1129
        %1131 = vmatmul.bf16.gmra.mxu0 %v554
        %v1132 = vpop.f32.mrf.mxu0
        %v1133 = vadd.f32 %v932, %v1132
        %v1134 = vpop.f32.mrf.mxu0
        %v1135 = vadd.f32 %v934, %v1134
        %1136 = vmatmul.bf16.gmra.mxu0 %v555
        %v1137 = vpop.f32.mrf.mxu0
        %v1138 = vadd.f32 %v937, %v1137
        %v1139 = vpop.f32.mrf.mxu0
        %v1140 = vadd.f32 %v939, %v1139
        %1141 = vmatmul.bf16.gmra.mxu0 %v556
        %v1142 = vpop.f32.mrf.mxu0
        %v1143 = vadd.f32 %v942, %v1142
        %v1144 = vpop.f32.mrf.mxu0
        %v1145 = vadd.f32 %v944, %v1144
        %1146 = vmatmul.bf16.gmra.mxu0 %v557
        %v1147 = vpop.f32.mrf.mxu0
        %v1148 = vadd.f32 %v947, %v1147
        %v1149 = vpop.f32.mrf.mxu0
        %v1150 = vadd.f32 %v949, %v1149
        %1151 = vdwg.mxu0
        %s1152 = scalar_lea.vmem [#allocation2], 128
        %v1153 = vld [vmem:[%s1152] sm:$0xf]
        %v1154 = vld [vmem:[%s1152 + $0x4] sm:$0xf]
        %v1155 = vld [vmem:[%s1152 + $0x8] sm:$0xf]
        %v1156 = vld [vmem:[%s1152 + $0xc] sm:$0xf]
        %v1157 = vld [vmem:[%s1152 + $0x10] sm:$0xf]
        %v1158 = vld [vmem:[%s1152 + $0x14] sm:$0xf]
        %v1159 = vld [vmem:[%s1152 + $0x18] sm:$0xf]
        %v1160 = vld [vmem:[%s1152 + $0x1c] sm:$0xf]
        %v1161 = vld [vmem:[%s1152 + $0x20] sm:$0xf]
        %v1162 = vld [vmem:[%s1152 + $0x24] sm:$0xf]
        %v1163 = vld [vmem:[%s1152 + $0x28] sm:$0xf]
        %v1164 = vld [vmem:[%s1152 + $0x2c] sm:$0xf]
        %v1165 = vld [vmem:[%s1152 + $0x30] sm:$0xf]
        %v1166 = vld [vmem:[%s1152 + $0x34] sm:$0xf]
        %v1167 = vld [vmem:[%s1152 + $0x38] sm:$0xf]
        %v1168 = vld [vmem:[%s1152 + $0x3c] sm:$0xf]
        %vm1169 = vcmask 1046528
        %v1170 = vrot.slane %v534, 1
        %v1171 = vrot.slane %v535, 1
        %v1172 = vsel %vm1169, %v1170, %v1171
        %v1173 = vrot.slane %v536, 1
        %v1174 = vsel %vm1169, %v1171, %v1173
        %v1175 = vrot.slane %v537, 1
        %v1176 = vsel %vm1169, %v1173, %v1175
        %v1177 = vrot.slane %v538, 1
        %v1178 = vsel %vm1169, %v1175, %v1177
        %v1179 = vrot.slane %v539, 1
        %v1180 = vsel %vm1169, %v1177, %v1179
        %v1181 = vrot.slane %v540, 1
        %v1182 = vsel %vm1169, %v1179, %v1181
        %v1183 = vrot.slane %v541, 1
        %v1184 = vsel %vm1169, %v1181, %v1183
        %v1185 = vrot.slane %v542, 1
        %v1186 = vsel %vm1169, %v1183, %v1185
        %v1187 = vrot.slane %v543, 1
        %v1188 = vsel %vm1169, %v1185, %v1187
        %v1189 = vrot.slane %v544, 1
        %v1190 = vsel %vm1169, %v1187, %v1189
        %v1191 = vrot.slane %v545, 1
        %v1192 = vsel %vm1169, %v1189, %v1191
        %v1193 = vrot.slane %v546, 1
        %v1194 = vsel %vm1169, %v1191, %v1193
        %v1195 = vrot.slane %v547, 1
        %v1196 = vsel %vm1169, %v1193, %v1195
        %v1197 = vrot.slane %v548, 1
        %v1198 = vsel %vm1169, %v1195, %v1197
        %v1199 = vrot.slane %v549, 1
        %v1200 = vsel %vm1169, %v1197, %v1199
        %v1201 = vrot.slane %v550, 1
        %v1202 = vsel %vm1169, %v1199, %v1201
        %v1203 = vrot.slane %v551, 1
        %v1204 = vsel %vm1169, %v1201, %v1203
        %v1205 = vrot.slane %v552, 1
        %v1206 = vsel %vm1169, %v1203, %v1205
        %v1207 = vrot.slane %v553, 1
        %v1208 = vsel %vm1169, %v1205, %v1207
        %v1209 = vrot.slane %v554, 1
        %v1210 = vsel %vm1169, %v1207, %v1209
        %v1211 = vrot.slane %v555, 1
        %v1212 = vsel %vm1169, %v1209, %v1211
        %v1213 = vrot.slane %v556, 1
        %v1214 = vsel %vm1169, %v1211, %v1213
        %v1215 = vrot.slane %v557, 1
        %v1216 = vsel %vm1169, %v1213, %v1215
        %v1257 = vunpack.c.l.b16 %v1153
        %v1258 = vunpack.c.l.b16 %v1154
        %v1259 = vunpack.c.l.b16 %v1155
        %v1260 = vunpack.c.l.b16 %v1156
        %v1261 = vunpack.c.l.b16 %v1157
        %v1262 = vunpack.c.l.b16 %v1158
        %v1263 = vunpack.c.l.b16 %v1159
        %v1264 = vunpack.c.l.b16 %v1160
        %v1265 = vunpack.c.l.b16 %v1161
        %v1266 = vunpack.c.l.b16 %v1162
        %v1267 = vunpack.c.l.b16 %v1163
        %v1268 = vunpack.c.l.b16 %v1164
        %v1269 = vunpack.c.l.b16 %v1165
        %v1270 = vunpack.c.l.b16 %v1166
        %v1271 = vunpack.c.l.b16 %v1167
        %v1272 = vunpack.c.l.b16 %v1168
        %v1273 = vpack.c.b16 %v1258, %v1257
        %v1274 = vpack.c.b16 %v1260, %v1259
        %v1275 = vpack.c.b16 %v1262, %v1261
        %v1276 = vpack.c.b16 %v1264, %v1263
        %v1277 = vpack.c.b16 %v1266, %v1265
        %v1278 = vpack.c.b16 %v1268, %v1267
        %v1279 = vpack.c.b16 %v1270, %v1269
        %v1280 = vpack.c.b16 %v1272, %v1271
        %1289 = vmatpush.bf16.msra.mxu0 %v1280
        %1290 = vmatpush.bf16.msra.mxu0 %v1279
        %1291 = vmatpush.bf16.msra.mxu0 %v1278
        %1292 = vmatpush.bf16.msra.mxu0 %v1277
        %1293 = vmatpush.bf16.msra.mxu0 %v1276
        %1294 = vmatpush.bf16.msra.mxu0 %v1275
        %1295 = vmatpush.bf16.msra.mxu0 %v1274
        %1296 = vmatpush.bf16.msra.mxu0 %v1273
        %1297 = vmatmul.bf16.gmra.mxu0 %v1172
        %v1298 = vpop.f32.mrf.mxu0
        %v1299 = vadd.f32 0.0, %v1298
        %v1300 = vpop.f32.mrf.mxu0
        %v1301 = vadd.f32 0.0, %v1300
        %1302 = vmatmul.bf16.gmra.mxu0 %v1174
        %v1303 = vpop.f32.mrf.mxu0
        %v1304 = vadd.f32 0.0, %v1303
        %v1305 = vpop.f32.mrf.mxu0
        %v1306 = vadd.f32 0.0, %v1305
        %1307 = vmatmul.bf16.gmra.mxu0 %v1176
        %v1308 = vpop.f32.mrf.mxu0
        %v1309 = vadd.f32 0.0, %v1308
        %v1310 = vpop.f32.mrf.mxu0
        %v1311 = vadd.f32 0.0, %v1310
        %1312 = vmatmul.bf16.gmra.mxu0 %v1178
        %v1313 = vpop.f32.mrf.mxu0
        %v1314 = vadd.f32 0.0, %v1313
        %v1315 = vpop.f32.mrf.mxu0
        %v1316 = vadd.f32 0.0, %v1315
        %1317 = vmatmul.bf16.gmra.mxu0 %v1180
        %v1318 = vpop.f32.mrf.mxu0
        %v1319 = vadd.f32 0.0, %v1318
        %v1320 = vpop.f32.mrf.mxu0
        %v1321 = vadd.f32 0.0, %v1320
        %1322 = vmatmul.bf16.gmra.mxu0 %v1182
        %v1323 = vpop.f32.mrf.mxu0
        %v1324 = vadd.f32 0.0, %v1323
        %v1325 = vpop.f32.mrf.mxu0
        %v1326 = vadd.f32 0.0, %v1325
        %1327 = vmatmul.bf16.gmra.mxu0 %v1184
        %v1328 = vpop.f32.mrf.mxu0
        %v1329 = vadd.f32 0.0, %v1328
        %v1330 = vpop.f32.mrf.mxu0
        %v1331 = vadd.f32 0.0, %v1330
        %1332 = vmatmul.bf16.gmra.mxu0 %v1186
        %v1333 = vpop.f32.mrf.mxu0
        %v1334 = vadd.f32 0.0, %v1333
        %v1335 = vpop.f32.mrf.mxu0
        %v1336 = vadd.f32 0.0, %v1335
        %1337 = vmatmul.bf16.gmra.mxu0 %v1188
        %v1338 = vpop.f32.mrf.mxu0
        %v1339 = vadd.f32 0.0, %v1338
        %v1340 = vpop.f32.mrf.mxu0
        %v1341 = vadd.f32 0.0, %v1340
        %1342 = vmatmul.bf16.gmra.mxu0 %v1190
        %v1343 = vpop.f32.mrf.mxu0
        %v1344 = vadd.f32 0.0, %v1343
        %v1345 = vpop.f32.mrf.mxu0
        %v1346 = vadd.f32 0.0, %v1345
        %1347 = vmatmul.bf16.gmra.mxu0 %v1192
        %v1348 = vpop.f32.mrf.mxu0
        %v1349 = vadd.f32 0.0, %v1348
        %v1350 = vpop.f32.mrf.mxu0
        %v1351 = vadd.f32 0.0, %v1350
        %1352 = vmatmul.bf16.gmra.mxu0 %v1194
        %v1353 = vpop.f32.mrf.mxu0
        %v1354 = vadd.f32 0.0, %v1353
        %v1355 = vpop.f32.mrf.mxu0
        %v1356 = vadd.f32 0.0, %v1355
        %1357 = vmatmul.bf16.gmra.mxu0 %v1196
        %v1358 = vpop.f32.mrf.mxu0
        %v1359 = vadd.f32 0.0, %v1358
        %v1360 = vpop.f32.mrf.mxu0
        %v1361 = vadd.f32 0.0, %v1360
        %1362 = vmatmul.bf16.gmra.mxu0 %v1198
        %v1363 = vpop.f32.mrf.mxu0
        %v1364 = vadd.f32 0.0, %v1363
        %v1365 = vpop.f32.mrf.mxu0
        %v1366 = vadd.f32 0.0, %v1365
        %1367 = vmatmul.bf16.gmra.mxu0 %v1200
        %v1368 = vpop.f32.mrf.mxu0
        %v1369 = vadd.f32 0.0, %v1368
        %v1370 = vpop.f32.mrf.mxu0
        %v1371 = vadd.f32 0.0, %v1370
        %1372 = vmatmul.bf16.gmra.mxu0 %v1202
        %v1373 = vpop.f32.mrf.mxu0
        %v1374 = vadd.f32 0.0, %v1373
        %v1375 = vpop.f32.mrf.mxu0
        %v1376 = vadd.f32 0.0, %v1375
        %1377 = vmatmul.bf16.gmra.mxu0 %v1204
        %v1378 = vpop.f32.mrf.mxu0
        %v1379 = vadd.f32 0.0, %v1378
        %v1380 = vpop.f32.mrf.mxu0
        %v1381 = vadd.f32 0.0, %v1380
        %1382 = vmatmul.bf16.gmra.mxu0 %v1206
        %v1383 = vpop.f32.mrf.mxu0
        %v1384 = vadd.f32 0.0, %v1383
        %v1385 = vpop.f32.mrf.mxu0
        %v1386 = vadd.f32 0.0, %v1385
        %1387 = vmatmul.bf16.gmra.mxu0 %v1208
        %v1388 = vpop.f32.mrf.mxu0
        %v1389 = vadd.f32 0.0, %v1388
        %v1390 = vpop.f32.mrf.mxu0
        %v1391 = vadd.f32 0.0, %v1390
        %1392 = vmatmul.bf16.gmra.mxu0 %v1210
        %v1393 = vpop.f32.mrf.mxu0
        %v1394 = vadd.f32 0.0, %v1393
        %v1395 = vpop.f32.mrf.mxu0
        %v1396 = vadd.f32 0.0, %v1395
        %1397 = vmatmul.bf16.gmra.mxu0 %v1212
        %v1398 = vpop.f32.mrf.mxu0
        %v1399 = vadd.f32 0.0, %v1398
        %v1400 = vpop.f32.mrf.mxu0
        %v1401 = vadd.f32 0.0, %v1400
        %1402 = vmatmul.bf16.gmra.mxu0 %v1214
        %v1403 = vpop.f32.mrf.mxu0
        %v1404 = vadd.f32 0.0, %v1403
        %v1405 = vpop.f32.mrf.mxu0
        %v1406 = vadd.f32 0.0, %v1405
        %1407 = vmatmul.bf16.gmra.mxu0 %v1216
        %v1408 = vpop.f32.mrf.mxu0
        %v1409 = vadd.f32 0.0, %v1408
        %v1410 = vpop.f32.mrf.mxu0
        %v1411 = vadd.f32 0.0, %v1410
        %1412 = vmatmul.bf16.gmra.mxu0 %v1215
        %v1413 = vpop.f32.mrf.mxu0
        %v1414 = vadd.f32 0.0, %v1413
        %v1415 = vpop.f32.mrf.mxu0
        %v1416 = vadd.f32 0.0, %v1415
        %1417 = vdwg.mxu0
        %v1418 = vadd.f32 %v1033, %v1299
        %v1419 = vadd.f32 %v1035, %v1301
        %v1420 = vadd.f32 %v1038, %v1304
        %v1421 = vadd.f32 %v1040, %v1306
        %v1422 = vadd.f32 %v1043, %v1309
        %v1423 = vadd.f32 %v1045, %v1311
        %v1424 = vadd.f32 %v1048, %v1314
        %v1425 = vadd.f32 %v1050, %v1316
        %v1426 = vadd.f32 %v1053, %v1319
        %v1427 = vadd.f32 %v1055, %v1321
        %v1428 = vadd.f32 %v1058, %v1324
        %v1429 = vadd.f32 %v1060, %v1326
        %v1430 = vadd.f32 %v1063, %v1329
        %v1431 = vadd.f32 %v1065, %v1331
        %v1432 = vadd.f32 %v1068, %v1334
        %v1433 = vadd.f32 %v1070, %v1336
        %v1434 = vadd.f32 %v1073, %v1339
        %v1435 = vadd.f32 %v1075, %v1341
        %v1436 = vadd.f32 %v1078, %v1344
        %v1437 = vadd.f32 %v1080, %v1346
        %v1438 = vadd.f32 %v1083, %v1349
        %v1439 = vadd.f32 %v1085, %v1351
        %v1440 = vadd.f32 %v1088, %v1354
        %v1441 = vadd.f32 %v1090, %v1356
        %v1442 = vadd.f32 %v1093, %v1359
        %v1443 = vadd.f32 %v1095, %v1361
        %v1444 = vadd.f32 %v1098, %v1364
        %v1445 = vadd.f32 %v1100, %v1366
        %v1446 = vadd.f32 %v1103, %v1369
        %v1447 = vadd.f32 %v1105, %v1371
        %v1448 = vadd.f32 %v1108, %v1374
        %v1449 = vadd.f32 %v1110, %v1376
        %v1450 = vadd.f32 %v1113, %v1379
        %v1451 = vadd.f32 %v1115, %v1381
        %v1452 = vadd.f32 %v1118, %v1384
        %v1453 = vadd.f32 %v1120, %v1386
        %v1454 = vadd.f32 %v1123, %v1389
        %v1455 = vadd.f32 %v1125, %v1391
        %v1456 = vadd.f32 %v1128, %v1394
        %v1457 = vadd.f32 %v1130, %v1396
        %v1458 = vadd.f32 %v1133, %v1399
        %v1459 = vadd.f32 %v1135, %v1401
        %v1460 = vadd.f32 %v1138, %v1404
        %v1461 = vadd.f32 %v1140, %v1406
        %v1462 = vadd.f32 %v1143, %v1409
        %v1463 = vadd.f32 %v1145, %v1411
        %v1464 = vadd.f32 %v1148, %v1414
        %v1465 = vadd.f32 %v1150, %v1416
        %s1466 = scalar_lea.vmem [#allocation2], 192
        %v1467 = vld [vmem:[%s1466] sm:$0xf]
        %v1468 = vld [vmem:[%s1466 + $0x4] sm:$0xf]
        %v1469 = vld [vmem:[%s1466 + $0x8] sm:$0xf]
        %v1470 = vld [vmem:[%s1466 + $0xc] sm:$0xf]
        %v1471 = vld [vmem:[%s1466 + $0x10] sm:$0xf]
        %v1472 = vld [vmem:[%s1466 + $0x14] sm:$0xf]
        %v1473 = vld [vmem:[%s1466 + $0x18] sm:$0xf]
        %v1474 = vld [vmem:[%s1466 + $0x1c] sm:$0xf]
        %v1475 = vld [vmem:[%s1466 + $0x20] sm:$0xf]
        %v1476 = vld [vmem:[%s1466 + $0x24] sm:$0xf]
        %v1477 = vld [vmem:[%s1466 + $0x28] sm:$0xf]
        %v1478 = vld [vmem:[%s1466 + $0x2c] sm:$0xf]
        %v1479 = vld [vmem:[%s1466 + $0x30] sm:$0xf]
        %v1480 = vld [vmem:[%s1466 + $0x34] sm:$0xf]
        %v1481 = vld [vmem:[%s1466 + $0x38] sm:$0xf]
        %v1482 = vld [vmem:[%s1466 + $0x3c] sm:$0xf]
        %vm1483 = vsmask.f32 6400
        %v1484 = vrot.slane %v560, 1
        %v1485 = vrot.slane %v562, 2
        %v1486 = vor.u32 %v1484, %v1485
        %v1487 = vrot.slane %v571, 1
        %v1488 = vrot.slane %v567, 2
        %v1489 = vor.u32 %v1487, %v1488
        %v1490 = vsel %vm1483, %v1486, %v1489
        %v1491 = vrot.slane %v579, 1
        %v1492 = vrot.slane %v575, 2
        %v1493 = vor.u32 %v1491, %v1492
        %v1494 = vsel %vm1483, %v1489, %v1493
        %v1495 = vrot.slane %v587, 1
        %v1496 = vrot.slane %v583, 2
        %v1497 = vor.u32 %v1495, %v1496
        %v1498 = vsel %vm1483, %v1493, %v1497
        %v1499 = vrot.slane %v595, 1
        %v1500 = vrot.slane %v591, 2
        %v1501 = vor.u32 %v1499, %v1500
        %v1502 = vsel %vm1483, %v1497, %v1501
        %v1503 = vrot.slane %v603, 1
        %v1504 = vrot.slane %v599, 2
        %v1505 = vor.u32 %v1503, %v1504
        %v1506 = vsel %vm1483, %v1501, %v1505
        %v1507 = vrot.slane %v611, 1
        %v1508 = vrot.slane %v607, 2
        %v1509 = vor.u32 %v1507, %v1508
        %v1510 = vsel %vm1483, %v1505, %v1509
        %v1511 = vrot.slane %v619, 1
        %v1512 = vrot.slane %v615, 2
        %v1513 = vor.u32 %v1511, %v1512
        %v1514 = vsel %vm1483, %v1509, %v1513
        %v1515 = vrot.slane %v627, 1
        %v1516 = vrot.slane %v623, 2
        %v1517 = vor.u32 %v1515, %v1516
        %v1518 = vsel %vm1483, %v1513, %v1517
        %v1519 = vrot.slane %v635, 1
        %v1520 = vrot.slane %v631, 2
        %v1521 = vor.u32 %v1519, %v1520
        %v1522 = vsel %vm1483, %v1517, %v1521
        %v1523 = vrot.slane %v643, 1
        %v1524 = vrot.slane %v639, 2
        %v1525 = vor.u32 %v1523, %v1524
        %v1526 = vsel %vm1483, %v1521, %v1525
        %v1527 = vrot.slane %v651, 1
        %v1528 = vrot.slane %v647, 2
        %v1529 = vor.u32 %v1527, %v1528
        %v1530 = vsel %vm1483, %v1525, %v1529
        %v1531 = vrot.slane %v659, 1
        %v1532 = vrot.slane %v655, 2
        %v1533 = vor.u32 %v1531, %v1532
        %v1534 = vsel %vm1483, %v1529, %v1533
        %v1535 = vrot.slane %v667, 1
        %v1536 = vrot.slane %v663, 2
        %v1537 = vor.u32 %v1535, %v1536
        %v1538 = vsel %vm1483, %v1533, %v1537
        %v1539 = vrot.slane %v675, 1
        %v1540 = vrot.slane %v671, 2
        %v1541 = vor.u32 %v1539, %v1540
        %v1542 = vsel %vm1483, %v1537, %v1541
        %v1543 = vrot.slane %v683, 1
        %v1544 = vrot.slane %v679, 2
        %v1545 = vor.u32 %v1543, %v1544
        %v1546 = vsel %vm1483, %v1541, %v1545
        %v1547 = vrot.slane %v691, 1
        %v1548 = vrot.slane %v687, 2
        %v1549 = vor.u32 %v1547, %v1548
        %v1550 = vsel %vm1483, %v1545, %v1549
        %v1551 = vrot.slane %v699, 1
        %v1552 = vrot.slane %v695, 2
        %v1553 = vor.u32 %v1551, %v1552
        %v1554 = vsel %vm1483, %v1549, %v1553
        %v1555 = vrot.slane %v707, 1
        %v1556 = vrot.slane %v703, 2
        %v1557 = vor.u32 %v1555, %v1556
        %v1558 = vsel %vm1483, %v1553, %v1557
        %v1559 = vrot.slane %v715, 1
        %v1560 = vrot.slane %v711, 2
        %v1561 = vor.u32 %v1559, %v1560
        %v1562 = vsel %vm1483, %v1557, %v1561
        %v1563 = vrot.slane %v723, 1
        %v1564 = vrot.slane %v719, 2
        %v1565 = vor.u32 %v1563, %v1564
        %v1566 = vsel %vm1483, %v1561, %v1565
        %v1567 = vrot.slane %v731, 1
        %v1568 = vrot.slane %v727, 2
        %v1569 = vor.u32 %v1567, %v1568
        %v1570 = vsel %vm1483, %v1565, %v1569
        %v1571 = vrot.slane %v739, 1
        %v1572 = vrot.slane %v735, 2
        %v1573 = vor.u32 %v1571, %v1572
        %v1574 = vsel %vm1483, %v1569, %v1573
        %v1575 = vrot.slane %v747, 1
        %v1576 = vrot.slane %v743, 2
        %v1577 = vor.u32 %v1575, %v1576
        %v1578 = vsel %vm1483, %v1573, %v1577
        %v1619 = vunpack.c.l.b16 %v1467
        %v1620 = vunpack.c.l.b16 %v1468
        %v1621 = vunpack.c.l.b16 %v1469
        %v1622 = vunpack.c.l.b16 %v1470
        %v1623 = vunpack.c.l.b16 %v1471
        %v1624 = vunpack.c.l.b16 %v1472
        %v1625 = vunpack.c.l.b16 %v1473
        %v1626 = vunpack.c.l.b16 %v1474
        %v1627 = vunpack.c.l.b16 %v1475
        %v1628 = vunpack.c.l.b16 %v1476
        %v1629 = vunpack.c.l.b16 %v1477
        %v1630 = vunpack.c.l.b16 %v1478
        %v1631 = vunpack.c.l.b16 %v1479
        %v1632 = vunpack.c.l.b16 %v1480
        %v1633 = vunpack.c.l.b16 %v1481
        %v1634 = vunpack.c.l.b16 %v1482
        %v1635 = vpack.c.b16 %v1620, %v1619
        %v1636 = vpack.c.b16 %v1622, %v1621
        %v1637 = vpack.c.b16 %v1624, %v1623
        %v1638 = vpack.c.b16 %v1626, %v1625
        %v1639 = vpack.c.b16 %v1628, %v1627
        %v1640 = vpack.c.b16 %v1630, %v1629
        %v1641 = vpack.c.b16 %v1632, %v1631
        %v1642 = vpack.c.b16 %v1634, %v1633
        %1651 = vmatpush.bf16.msra.mxu0 %v1642
        %1652 = vmatpush.bf16.msra.mxu0 %v1641
        %1653 = vmatpush.bf16.msra.mxu0 %v1640
        %1654 = vmatpush.bf16.msra.mxu0 %v1639
        %1655 = vmatpush.bf16.msra.mxu0 %v1638
        %1656 = vmatpush.bf16.msra.mxu0 %v1637
        %1657 = vmatpush.bf16.msra.mxu0 %v1636
        %1658 = vmatpush.bf16.msra.mxu0 %v1635
        %1659 = vmatmul.bf16.gmra.mxu0 %v1490
        %v1660 = vpop.f32.mrf.mxu0
        %v1661 = vadd.f32 0.0, %v1660
        %v1662 = vpop.f32.mrf.mxu0
        %v1663 = vadd.f32 0.0, %v1662
        %1664 = vmatmul.bf16.gmra.mxu0 %v1494
        %v1665 = vpop.f32.mrf.mxu0
        %v1666 = vadd.f32 0.0, %v1665
        %v1667 = vpop.f32.mrf.mxu0
        %v1668 = vadd.f32 0.0, %v1667
        %1669 = vmatmul.bf16.gmra.mxu0 %v1498
        %v1670 = vpop.f32.mrf.mxu0
        %v1671 = vadd.f32 0.0, %v1670
        %v1672 = vpop.f32.mrf.mxu0
        %v1673 = vadd.f32 0.0, %v1672
        %1674 = vmatmul.bf16.gmra.mxu0 %v1502
        %v1675 = vpop.f32.mrf.mxu0
        %v1676 = vadd.f32 0.0, %v1675
        %v1677 = vpop.f32.mrf.mxu0
        %v1678 = vadd.f32 0.0, %v1677
        %1679 = vmatmul.bf16.gmra.mxu0 %v1506
        %v1680 = vpop.f32.mrf.mxu0
        %v1681 = vadd.f32 0.0, %v1680
        %v1682 = vpop.f32.mrf.mxu0
        %v1683 = vadd.f32 0.0, %v1682
        %1684 = vmatmul.bf16.gmra.mxu0 %v1510
        %v1685 = vpop.f32.mrf.mxu0
        %v1686 = vadd.f32 0.0, %v1685
        %v1687 = vpop.f32.mrf.mxu0
        %v1688 = vadd.f32 0.0, %v1687
        %1689 = vmatmul.bf16.gmra.mxu0 %v1514
        %v1690 = vpop.f32.mrf.mxu0
        %v1691 = vadd.f32 0.0, %v1690
        %v1692 = vpop.f32.mrf.mxu0
        %v1693 = vadd.f32 0.0, %v1692
        %1694 = vmatmul.bf16.gmra.mxu0 %v1518
        %v1695 = vpop.f32.mrf.mxu0
        %v1696 = vadd.f32 0.0, %v1695
        %v1697 = vpop.f32.mrf.mxu0
        %v1698 = vadd.f32 0.0, %v1697
        %1699 = vmatmul.bf16.gmra.mxu0 %v1522
        %v1700 = vpop.f32.mrf.mxu0
        %v1701 = vadd.f32 0.0, %v1700
        %v1702 = vpop.f32.mrf.mxu0
        %v1703 = vadd.f32 0.0, %v1702
        %1704 = vmatmul.bf16.gmra.mxu0 %v1526
        %v1705 = vpop.f32.mrf.mxu0
        %v1706 = vadd.f32 0.0, %v1705
        %v1707 = vpop.f32.mrf.mxu0
        %v1708 = vadd.f32 0.0, %v1707
        %1709 = vmatmul.bf16.gmra.mxu0 %v1530
        %v1710 = vpop.f32.mrf.mxu0
        %v1711 = vadd.f32 0.0, %v1710
        %v1712 = vpop.f32.mrf.mxu0
        %v1713 = vadd.f32 0.0, %v1712
        %1714 = vmatmul.bf16.gmra.mxu0 %v1534
        %v1715 = vpop.f32.mrf.mxu0
        %v1716 = vadd.f32 0.0, %v1715
        %v1717 = vpop.f32.mrf.mxu0
        %v1718 = vadd.f32 0.0, %v1717
        %1719 = vmatmul.bf16.gmra.mxu0 %v1538
        %v1720 = vpop.f32.mrf.mxu0
        %v1721 = vadd.f32 0.0, %v1720
        %v1722 = vpop.f32.mrf.mxu0
        %v1723 = vadd.f32 0.0, %v1722
        %1724 = vmatmul.bf16.gmra.mxu0 %v1542
        %v1725 = vpop.f32.mrf.mxu0
        %v1726 = vadd.f32 0.0, %v1725
        %v1727 = vpop.f32.mrf.mxu0
        %v1728 = vadd.f32 0.0, %v1727
        %1729 = vmatmul.bf16.gmra.mxu0 %v1546
        %v1730 = vpop.f32.mrf.mxu0
        %v1731 = vadd.f32 0.0, %v1730
        %v1732 = vpop.f32.mrf.mxu0
        %v1733 = vadd.f32 0.0, %v1732
        %1734 = vmatmul.bf16.gmra.mxu0 %v1550
        %v1735 = vpop.f32.mrf.mxu0
        %v1736 = vadd.f32 0.0, %v1735
        %v1737 = vpop.f32.mrf.mxu0
        %v1738 = vadd.f32 0.0, %v1737
        %1739 = vmatmul.bf16.gmra.mxu0 %v1554
        %v1740 = vpop.f32.mrf.mxu0
        %v1741 = vadd.f32 0.0, %v1740
        %v1742 = vpop.f32.mrf.mxu0
        %v1743 = vadd.f32 0.0, %v1742
        %1744 = vmatmul.bf16.gmra.mxu0 %v1558
        %v1745 = vpop.f32.mrf.mxu0
        %v1746 = vadd.f32 0.0, %v1745
        %v1747 = vpop.f32.mrf.mxu0
        %v1748 = vadd.f32 0.0, %v1747
        %1749 = vmatmul.bf16.gmra.mxu0 %v1562
        %v1750 = vpop.f32.mrf.mxu0
        %v1751 = vadd.f32 0.0, %v1750
        %v1752 = vpop.f32.mrf.mxu0
        %v1753 = vadd.f32 0.0, %v1752
        %1754 = vmatmul.bf16.gmra.mxu0 %v1566
        %v1755 = vpop.f32.mrf.mxu0
        %v1756 = vadd.f32 0.0, %v1755
        %v1757 = vpop.f32.mrf.mxu0
        %v1758 = vadd.f32 0.0, %v1757
        %1759 = vmatmul.bf16.gmra.mxu0 %v1570
        %v1760 = vpop.f32.mrf.mxu0
        %v1761 = vadd.f32 0.0, %v1760
        %v1762 = vpop.f32.mrf.mxu0
        %v1763 = vadd.f32 0.0, %v1762
        %1764 = vmatmul.bf16.gmra.mxu0 %v1574
        %v1765 = vpop.f32.mrf.mxu0
        %v1766 = vadd.f32 0.0, %v1765
        %v1767 = vpop.f32.mrf.mxu0
        %v1768 = vadd.f32 0.0, %v1767
        %1769 = vmatmul.bf16.gmra.mxu0 %v1578
        %v1770 = vpop.f32.mrf.mxu0
        %v1771 = vadd.f32 0.0, %v1770
        %v1772 = vpop.f32.mrf.mxu0
        %v1773 = vadd.f32 0.0, %v1772
        %1774 = vmatmul.bf16.gmra.mxu0 %v1577
        %v1775 = vpop.f32.mrf.mxu0
        %v1776 = vadd.f32 0.0, %v1775
        %v1777 = vpop.f32.mrf.mxu0
        %v1778 = vadd.f32 0.0, %v1777
        %1779 = vdwg.mxu0
        %v1780 = vadd.f32 %v1418, %v1661
        %v1781 = vadd.f32 %v1419, %v1663
        %v1782 = vadd.f32 %v1420, %v1666
        %v1783 = vadd.f32 %v1421, %v1668
        %v1784 = vadd.f32 %v1422, %v1671
        %v1785 = vadd.f32 %v1423, %v1673
        %v1786 = vadd.f32 %v1424, %v1676
        %v1787 = vadd.f32 %v1425, %v1678
        %v1788 = vadd.f32 %v1426, %v1681
        %v1789 = vadd.f32 %v1427, %v1683
        %v1790 = vadd.f32 %v1428, %v1686
        %v1791 = vadd.f32 %v1429, %v1688
        %v1792 = vadd.f32 %v1430, %v1691
        %v1793 = vadd.f32 %v1431, %v1693
        %v1794 = vadd.f32 %v1432, %v1696
        %v1795 = vadd.f32 %v1433, %v1698
        %v1796 = vadd.f32 %v1434, %v1701
        %v1797 = vadd.f32 %v1435, %v1703
        %v1798 = vadd.f32 %v1436, %v1706
        %v1799 = vadd.f32 %v1437, %v1708
        %v1800 = vadd.f32 %v1438, %v1711
        %v1801 = vadd.f32 %v1439, %v1713
        %v1802 = vadd.f32 %v1440, %v1716
        %v1803 = vadd.f32 %v1441, %v1718
        %v1804 = vadd.f32 %v1442, %v1721
        %v1805 = vadd.f32 %v1443, %v1723
        %v1806 = vadd.f32 %v1444, %v1726
        %v1807 = vadd.f32 %v1445, %v1728
        %v1808 = vadd.f32 %v1446, %v1731
        %v1809 = vadd.f32 %v1447, %v1733
        %v1810 = vadd.f32 %v1448, %v1736
        %v1811 = vadd.f32 %v1449, %v1738
        %v1812 = vadd.f32 %v1450, %v1741
        %v1813 = vadd.f32 %v1451, %v1743
        %v1814 = vadd.f32 %v1452, %v1746
        %v1815 = vadd.f32 %v1453, %v1748
        %v1816 = vadd.f32 %v1454, %v1751
        %v1817 = vadd.f32 %v1455, %v1753
        %v1818 = vadd.f32 %v1456, %v1756
        %v1819 = vadd.f32 %v1457, %v1758
        %v1820 = vadd.f32 %v1458, %v1761
        %v1821 = vadd.f32 %v1459, %v1763
        %v1822 = vadd.f32 %v1460, %v1766
        %v1823 = vadd.f32 %v1461, %v1768
        %v1824 = vadd.f32 %v1462, %v1771
        %v1825 = vadd.f32 %v1463, %v1773
        %v1826 = vadd.f32 %v1464, %v1776
        %v1827 = vadd.f32 %v1465, %v1778
        %s1828 = scalar_lea.vmem [#allocation2], 256
        %v1829 = vld [vmem:[%s1828] sm:$0xf]
        %v1830 = vld [vmem:[%s1828 + $0x4] sm:$0xf]
        %v1831 = vld [vmem:[%s1828 + $0x8] sm:$0xf]
        %v1832 = vld [vmem:[%s1828 + $0xc] sm:$0xf]
        %v1833 = vld [vmem:[%s1828 + $0x10] sm:$0xf]
        %v1834 = vld [vmem:[%s1828 + $0x14] sm:$0xf]
        %v1835 = vld [vmem:[%s1828 + $0x18] sm:$0xf]
        %v1836 = vld [vmem:[%s1828 + $0x1c] sm:$0xf]
        %v1837 = vld [vmem:[%s1828 + $0x20] sm:$0xf]
        %v1838 = vld [vmem:[%s1828 + $0x24] sm:$0xf]
        %v1839 = vld [vmem:[%s1828 + $0x28] sm:$0xf]
        %v1840 = vld [vmem:[%s1828 + $0x2c] sm:$0xf]
        %v1841 = vld [vmem:[%s1828 + $0x30] sm:$0xf]
        %v1842 = vld [vmem:[%s1828 + $0x34] sm:$0xf]
        %v1843 = vld [vmem:[%s1828 + $0x38] sm:$0xf]
        %v1844 = vld [vmem:[%s1828 + $0x3c] sm:$0xf]
        %vm1845 = vcmask 1045504
        %v1846 = vrot.slane %v534, 2
        %v1847 = vrot.slane %v535, 2
        %v1848 = vsel %vm1845, %v1846, %v1847
        %v1849 = vrot.slane %v536, 2
        %v1850 = vsel %vm1845, %v1847, %v1849
        %v1851 = vrot.slane %v537, 2
        %v1852 = vsel %vm1845, %v1849, %v1851
        %v1853 = vrot.slane %v538, 2
        %v1854 = vsel %vm1845, %v1851, %v1853
        %v1855 = vrot.slane %v539, 2
        %v1856 = vsel %vm1845, %v1853, %v1855
        %v1857 = vrot.slane %v540, 2
        %v1858 = vsel %vm1845, %v1855, %v1857
        %v1859 = vrot.slane %v541, 2
        %v1860 = vsel %vm1845, %v1857, %v1859
        %v1861 = vrot.slane %v542, 2
        %v1862 = vsel %vm1845, %v1859, %v1861
        %v1863 = vrot.slane %v543, 2
        %v1864 = vsel %vm1845, %v1861, %v1863
        %v1865 = vrot.slane %v544, 2
        %v1866 = vsel %vm1845, %v1863, %v1865
        %v1867 = vrot.slane %v545, 2
        %v1868 = vsel %vm1845, %v1865, %v1867
        %v1869 = vrot.slane %v546, 2
        %v1870 = vsel %vm1845, %v1867, %v1869
        %v1871 = vrot.slane %v547, 2
        %v1872 = vsel %vm1845, %v1869, %v1871
        %v1873 = vrot.slane %v548, 2
        %v1874 = vsel %vm1845, %v1871, %v1873
        %v1875 = vrot.slane %v549, 2
        %v1876 = vsel %vm1845, %v1873, %v1875
        %v1877 = vrot.slane %v550, 2
        %v1878 = vsel %vm1845, %v1875, %v1877
        %v1879 = vrot.slane %v551, 2
        %v1880 = vsel %vm1845, %v1877, %v1879
        %v1881 = vrot.slane %v552, 2
        %v1882 = vsel %vm1845, %v1879, %v1881
        %v1883 = vrot.slane %v553, 2
        %v1884 = vsel %vm1845, %v1881, %v1883
        %v1885 = vrot.slane %v554, 2
        %v1886 = vsel %vm1845, %v1883, %v1885
        %v1887 = vrot.slane %v555, 2
        %v1888 = vsel %vm1845, %v1885, %v1887
        %v1889 = vrot.slane %v556, 2
        %v1890 = vsel %vm1845, %v1887, %v1889
        %v1891 = vrot.slane %v557, 2
        %v1892 = vsel %vm1845, %v1889, %v1891
        %v1933 = vunpack.c.l.b16 %v1829
        %v1934 = vunpack.c.l.b16 %v1830
        %v1935 = vunpack.c.l.b16 %v1831
        %v1936 = vunpack.c.l.b16 %v1832
        %v1937 = vunpack.c.l.b16 %v1833
        %v1938 = vunpack.c.l.b16 %v1834
        %v1939 = vunpack.c.l.b16 %v1835
        %v1940 = vunpack.c.l.b16 %v1836
        %v1941 = vunpack.c.l.b16 %v1837
        %v1942 = vunpack.c.l.b16 %v1838
        %v1943 = vunpack.c.l.b16 %v1839
        %v1944 = vunpack.c.l.b16 %v1840
        %v1945 = vunpack.c.l.b16 %v1841
        %v1946 = vunpack.c.l.b16 %v1842
        %v1947 = vunpack.c.l.b16 %v1843
        %v1948 = vunpack.c.l.b16 %v1844
        %v1949 = vpack.c.b16 %v1934, %v1933
        %v1950 = vpack.c.b16 %v1936, %v1935
        %v1951 = vpack.c.b16 %v1938, %v1937
        %v1952 = vpack.c.b16 %v1940, %v1939
        %v1953 = vpack.c.b16 %v1942, %v1941
        %v1954 = vpack.c.b16 %v1944, %v1943
        %v1955 = vpack.c.b16 %v1946, %v1945
        %v1956 = vpack.c.b16 %v1948, %v1947
        %1965 = vmatpush.bf16.msra.mxu0 %v1956
        %1966 = vmatpush.bf16.msra.mxu0 %v1955
        %1967 = vmatpush.bf16.msra.mxu0 %v1954
        %1968 = vmatpush.bf16.msra.mxu0 %v1953
        %1969 = vmatpush.bf16.msra.mxu0 %v1952
        %1970 = vmatpush.bf16.msra.mxu0 %v1951
        %1971 = vmatpush.bf16.msra.mxu0 %v1950
        %1972 = vmatpush.bf16.msra.mxu0 %v1949
        %1973 = vmatmul.bf16.gmra.mxu0 %v1848
        %v1974 = vpop.f32.mrf.mxu0
        %v1975 = vadd.f32 0.0, %v1974
        %v1976 = vpop.f32.mrf.mxu0
        %v1977 = vadd.f32 0.0, %v1976
        %1978 = vmatmul.bf16.gmra.mxu0 %v1850
        %v1979 = vpop.f32.mrf.mxu0
        %v1980 = vadd.f32 0.0, %v1979
        %v1981 = vpop.f32.mrf.mxu0
        %v1982 = vadd.f32 0.0, %v1981
        %1983 = vmatmul.bf16.gmra.mxu0 %v1852
        %v1984 = vpop.f32.mrf.mxu0
        %v1985 = vadd.f32 0.0, %v1984
        %v1986 = vpop.f32.mrf.mxu0
        %v1987 = vadd.f32 0.0, %v1986
        %1988 = vmatmul.bf16.gmra.mxu0 %v1854
        %v1989 = vpop.f32.mrf.mxu0
        %v1990 = vadd.f32 0.0, %v1989
        %v1991 = vpop.f32.mrf.mxu0
        %v1992 = vadd.f32 0.0, %v1991
        %1993 = vmatmul.bf16.gmra.mxu0 %v1856
        %v1994 = vpop.f32.mrf.mxu0
        %v1995 = vadd.f32 0.0, %v1994
        %v1996 = vpop.f32.mrf.mxu0
        %v1997 = vadd.f32 0.0, %v1996
        %1998 = vmatmul.bf16.gmra.mxu0 %v1858
        %v1999 = vpop.f32.mrf.mxu0
        %v2000 = vadd.f32 0.0, %v1999
        %v2001 = vpop.f32.mrf.mxu0
        %v2002 = vadd.f32 0.0, %v2001
        %2003 = vmatmul.bf16.gmra.mxu0 %v1860
        %v2004 = vpop.f32.mrf.mxu0
        %v2005 = vadd.f32 0.0, %v2004
        %v2006 = vpop.f32.mrf.mxu0
        %v2007 = vadd.f32 0.0, %v2006
        %2008 = vmatmul.bf16.gmra.mxu0 %v1862
        %v2009 = vpop.f32.mrf.mxu0
        %v2010 = vadd.f32 0.0, %v2009
        %v2011 = vpop.f32.mrf.mxu0
        %v2012 = vadd.f32 0.0, %v2011
        %2013 = vmatmul.bf16.gmra.mxu0 %v1864
        %v2014 = vpop.f32.mrf.mxu0
        %v2015 = vadd.f32 0.0, %v2014
        %v2016 = vpop.f32.mrf.mxu0
        %v2017 = vadd.f32 0.0, %v2016
        %2018 = vmatmul.bf16.gmra.mxu0 %v1866
        %v2019 = vpop.f32.mrf.mxu0
        %v2020 = vadd.f32 0.0, %v2019
        %v2021 = vpop.f32.mrf.mxu0
        %v2022 = vadd.f32 0.0, %v2021
        %2023 = vmatmul.bf16.gmra.mxu0 %v1868
        %v2024 = vpop.f32.mrf.mxu0
        %v2025 = vadd.f32 0.0, %v2024
        %v2026 = vpop.f32.mrf.mxu0
        %v2027 = vadd.f32 0.0, %v2026
        %2028 = vmatmul.bf16.gmra.mxu0 %v1870
        %v2029 = vpop.f32.mrf.mxu0
        %v2030 = vadd.f32 0.0, %v2029
        %v2031 = vpop.f32.mrf.mxu0
        %v2032 = vadd.f32 0.0, %v2031
        %2033 = vmatmul.bf16.gmra.mxu0 %v1872
        %v2034 = vpop.f32.mrf.mxu0
        %v2035 = vadd.f32 0.0, %v2034
        %v2036 = vpop.f32.mrf.mxu0
        %v2037 = vadd.f32 0.0, %v2036
        %2038 = vmatmul.bf16.gmra.mxu0 %v1874
        %v2039 = vpop.f32.mrf.mxu0
        %v2040 = vadd.f32 0.0, %v2039
        %v2041 = vpop.f32.mrf.mxu0
        %v2042 = vadd.f32 0.0, %v2041
        %2043 = vmatmul.bf16.gmra.mxu0 %v1876
        %v2044 = vpop.f32.mrf.mxu0
        %v2045 = vadd.f32 0.0, %v2044
        %v2046 = vpop.f32.mrf.mxu0
        %v2047 = vadd.f32 0.0, %v2046
        %2048 = vmatmul.bf16.gmra.mxu0 %v1878
        %v2049 = vpop.f32.mrf.mxu0
        %v2050 = vadd.f32 0.0, %v2049
        %v2051 = vpop.f32.mrf.mxu0
        %v2052 = vadd.f32 0.0, %v2051
        %2053 = vmatmul.bf16.gmra.mxu0 %v1880
        %v2054 = vpop.f32.mrf.mxu0
        %v2055 = vadd.f32 0.0, %v2054
        %v2056 = vpop.f32.mrf.mxu0
        %v2057 = vadd.f32 0.0, %v2056
        %2058 = vmatmul.bf16.gmra.mxu0 %v1882
        %v2059 = vpop.f32.mrf.mxu0
        %v2060 = vadd.f32 0.0, %v2059
        %v2061 = vpop.f32.mrf.mxu0
        %v2062 = vadd.f32 0.0, %v2061
        %2063 = vmatmul.bf16.gmra.mxu0 %v1884
        %v2064 = vpop.f32.mrf.mxu0
        %v2065 = vadd.f32 0.0, %v2064
        %v2066 = vpop.f32.mrf.mxu0
        %v2067 = vadd.f32 0.0, %v2066
        %2068 = vmatmul.bf16.gmra.mxu0 %v1886
        %v2069 = vpop.f32.mrf.mxu0
        %v2070 = vadd.f32 0.0, %v2069
        %v2071 = vpop.f32.mrf.mxu0
        %v2072 = vadd.f32 0.0, %v2071
        %2073 = vmatmul.bf16.gmra.mxu0 %v1888
        %v2074 = vpop.f32.mrf.mxu0
        %v2075 = vadd.f32 0.0, %v2074
        %v2076 = vpop.f32.mrf.mxu0
        %v2077 = vadd.f32 0.0, %v2076
        %2078 = vmatmul.bf16.gmra.mxu0 %v1890
        %v2079 = vpop.f32.mrf.mxu0
        %v2080 = vadd.f32 0.0, %v2079
        %v2081 = vpop.f32.mrf.mxu0
        %v2082 = vadd.f32 0.0, %v2081
        %2083 = vmatmul.bf16.gmra.mxu0 %v1892
        %v2084 = vpop.f32.mrf.mxu0
        %v2085 = vadd.f32 0.0, %v2084
        %v2086 = vpop.f32.mrf.mxu0
        %v2087 = vadd.f32 0.0, %v2086
        %2088 = vmatmul.bf16.gmra.mxu0 %v1891
        %v2089 = vpop.f32.mrf.mxu0
        %v2090 = vadd.f32 0.0, %v2089
        %v2091 = vpop.f32.mrf.mxu0
        %v2092 = vadd.f32 0.0, %v2091
        %2093 = vdwg.mxu0
        %v2094 = vadd.f32 %v1780, %v1975
        %v2095 = vadd.f32 %v1781, %v1977
        %v2096 = vadd.f32 %v1782, %v1980
        %v2097 = vadd.f32 %v1783, %v1982
        %v2098 = vadd.f32 %v1784, %v1985
        %v2099 = vadd.f32 %v1785, %v1987
        %v2100 = vadd.f32 %v1786, %v1990
        %v2101 = vadd.f32 %v1787, %v1992
        %v2102 = vadd.f32 %v1788, %v1995
        %v2103 = vadd.f32 %v1789, %v1997
        %v2104 = vadd.f32 %v1790, %v2000
        %v2105 = vadd.f32 %v1791, %v2002
        %v2106 = vadd.f32 %v1792, %v2005
        %v2107 = vadd.f32 %v1793, %v2007
        %v2108 = vadd.f32 %v1794, %v2010
        %v2109 = vadd.f32 %v1795, %v2012
        %v2110 = vadd.f32 %v1796, %v2015
        %v2111 = vadd.f32 %v1797, %v2017
        %v2112 = vadd.f32 %v1798, %v2020
        %v2113 = vadd.f32 %v1799, %v2022
        %v2114 = vadd.f32 %v1800, %v2025
        %v2115 = vadd.f32 %v1801, %v2027
        %v2116 = vadd.f32 %v1802, %v2030
        %v2117 = vadd.f32 %v1803, %v2032
        %v2118 = vadd.f32 %v1804, %v2035
        %v2119 = vadd.f32 %v1805, %v2037
        %v2120 = vadd.f32 %v1806, %v2040
        %v2121 = vadd.f32 %v1807, %v2042
        %v2122 = vadd.f32 %v1808, %v2045
        %v2123 = vadd.f32 %v1809, %v2047
        %v2124 = vadd.f32 %v1810, %v2050
        %v2125 = vadd.f32 %v1811, %v2052
        %v2126 = vadd.f32 %v1812, %v2055
        %v2127 = vadd.f32 %v1813, %v2057
        %v2128 = vadd.f32 %v1814, %v2060
        %v2129 = vadd.f32 %v1815, %v2062
        %v2130 = vadd.f32 %v1816, %v2065
        %v2131 = vadd.f32 %v1817, %v2067
        %v2132 = vadd.f32 %v1818, %v2070
        %v2133 = vadd.f32 %v1819, %v2072
        %v2134 = vadd.f32 %v1820, %v2075
        %v2135 = vadd.f32 %v1821, %v2077
        %v2136 = vadd.f32 %v1822, %v2080
        %v2137 = vadd.f32 %v1823, %v2082
        %v2138 = vadd.f32 %v1824, %v2085
        %v2139 = vadd.f32 %v1825, %v2087
        %v2140 = vadd.f32 %v1826, %v2090
        %v2141 = vadd.f32 %v1827, %v2092
        %v2142 = vld [vmem:[%s3] sm:$0x1]
        %v2144 = vperm.slane %v2142, 0
        %v2146 = vadd.f32 %v2094, %v2144
        %v2147 = vadd.f32 %v2095, %v2144
        %v2148 = vadd.f32 %v2096, %v2144
        %v2149 = vadd.f32 %v2097, %v2144
        %v2150 = vadd.f32 %v2098, %v2144
        %v2151 = vadd.f32 %v2099, %v2144
        %v2152 = vadd.f32 %v2100, %v2144
        %v2153 = vadd.f32 %v2101, %v2144
        %v2154 = vadd.f32 %v2102, %v2144
        %v2155 = vadd.f32 %v2103, %v2144
        %v2156 = vadd.f32 %v2104, %v2144
        %v2157 = vadd.f32 %v2105, %v2144
        %v2158 = vadd.f32 %v2106, %v2144
        %v2159 = vadd.f32 %v2107, %v2144
        %v2160 = vadd.f32 %v2108, %v2144
        %v2161 = vadd.f32 %v2109, %v2144
        %v2162 = vadd.f32 %v2110, %v2144
        %v2163 = vadd.f32 %v2111, %v2144
        %v2164 = vadd.f32 %v2112, %v2144
        %v2165 = vadd.f32 %v2113, %v2144
        %v2166 = vadd.f32 %v2114, %v2144
        %v2167 = vadd.f32 %v2115, %v2144
        %v2168 = vadd.f32 %v2116, %v2144
        %v2169 = vadd.f32 %v2117, %v2144
        %v2170 = vadd.f32 %v2118, %v2144
        %v2171 = vadd.f32 %v2119, %v2144
        %v2172 = vadd.f32 %v2120, %v2144
        %v2173 = vadd.f32 %v2121, %v2144
        %v2174 = vadd.f32 %v2122, %v2144
        %v2175 = vadd.f32 %v2123, %v2144
        %v2176 = vadd.f32 %v2124, %v2144
        %v2177 = vadd.f32 %v2125, %v2144
        %v2178 = vadd.f32 %v2126, %v2144
        %v2179 = vadd.f32 %v2127, %v2144
        %v2180 = vadd.f32 %v2128, %v2144
        %v2181 = vadd.f32 %v2129, %v2144
        %v2182 = vadd.f32 %v2130, %v2144
        %v2183 = vadd.f32 %v2131, %v2144
        %v2184 = vadd.f32 %v2132, %v2144
        %v2185 = vadd.f32 %v2133, %v2144
        %v2186 = vadd.f32 %v2134, %v2144
        %v2187 = vadd.f32 %v2135, %v2144
        %v2188 = vadd.f32 %v2136, %v2144
        %v2189 = vadd.f32 %v2137, %v2144
        %v2190 = vadd.f32 %v2138, %v2144
        %v2191 = vadd.f32 %v2139, %v2144
        %v2192 = vadd.f32 %v2140, %v2144
        %v2193 = vadd.f32 %v2141, %v2144
        %v2194 = vmax.f32 %v2146, 0.0
        %v2195 = vmax.f32 %v2147, 0.0
        %v2196 = vmax.f32 %v2148, 0.0
        %v2197 = vmax.f32 %v2149, 0.0
        %v2198 = vmax.f32 %v2150, 0.0
        %v2199 = vmax.f32 %v2151, 0.0
        %v2200 = vmax.f32 %v2152, 0.0
        %v2201 = vmax.f32 %v2153, 0.0
        %v2202 = vmax.f32 %v2154, 0.0
        %v2203 = vmax.f32 %v2155, 0.0
        %v2204 = vmax.f32 %v2156, 0.0
        %v2205 = vmax.f32 %v2157, 0.0
        %v2206 = vmax.f32 %v2158, 0.0
        %v2207 = vmax.f32 %v2159, 0.0
        %v2208 = vmax.f32 %v2160, 0.0
        %v2209 = vmax.f32 %v2161, 0.0
        %v2210 = vmax.f32 %v2162, 0.0
        %v2211 = vmax.f32 %v2163, 0.0
        %v2212 = vmax.f32 %v2164, 0.0
        %v2213 = vmax.f32 %v2165, 0.0
        %v2214 = vmax.f32 %v2166, 0.0
        %v2215 = vmax.f32 %v2167, 0.0
        %v2216 = vmax.f32 %v2168, 0.0
        %v2217 = vmax.f32 %v2169, 0.0
        %v2218 = vmax.f32 %v2170, 0.0
        %v2219 = vmax.f32 %v2171, 0.0
        %v2220 = vmax.f32 %v2172, 0.0
        %v2221 = vmax.f32 %v2173, 0.0
        %v2222 = vmax.f32 %v2174, 0.0
        %v2223 = vmax.f32 %v2175, 0.0
        %v2224 = vmax.f32 %v2176, 0.0
        %v2225 = vmax.f32 %v2177, 0.0
        %v2226 = vmax.f32 %v2178, 0.0
        %v2227 = vmax.f32 %v2179, 0.0
        %v2228 = vmax.f32 %v2180, 0.0
        %v2229 = vmax.f32 %v2181, 0.0
        %v2230 = vmax.f32 %v2182, 0.0
        %v2231 = vmax.f32 %v2183, 0.0
        %v2232 = vmax.f32 %v2184, 0.0
        %v2233 = vmax.f32 %v2185, 0.0
        %v2234 = vmax.f32 %v2186, 0.0
        %v2235 = vmax.f32 %v2187, 0.0
        %v2236 = vmax.f32 %v2188, 0.0
        %v2237 = vmax.f32 %v2189, 0.0
        %v2238 = vmax.f32 %v2190, 0.0
        %v2239 = vmax.f32 %v2191, 0.0
        %v2240 = vmax.f32 %v2192, 0.0
        %v2241 = vmax.f32 %v2193, 0.0
        %v2242 = vld [vmem:[%s1] sm:$0xff]
        %v2243 = vld [vmem:[%s1 + $0x8] sm:$0xff]
        %v2244 = vld [vmem:[%s1 + $0x10] sm:$0xff]
        %v2245 = vld [vmem:[%s1 + $0x18] sm:$0xff]
        %v2246 = vld [vmem:[%s1 + $0x20] sm:$0xff]
        %v2247 = vld [vmem:[%s1 + $0x28] sm:$0xff]
        %v2248 = vld [vmem:[%s1 + $0x30] sm:$0xff]
        %v2249 = vld [vmem:[%s1 + $0x38] sm:$0xff]
        %v2250 = vld [vmem:[%s1 + $0x40] sm:$0xff]
        %v2251 = vld [vmem:[%s1 + $0x48] sm:$0xff]
        %v2252 = vld [vmem:[%s1 + $0x50] sm:$0xff]
        %v2253 = vld [vmem:[%s1 + $0x58] sm:$0xff]
        %v2254 = vld [vmem:[%s1 + $0x60] sm:$0xff]
        %v2255 = vld [vmem:[%s1 + $0x68] sm:$0xff]
        %v2256 = vld [vmem:[%s1 + $0x70] sm:$0xff]
        %v2257 = vld [vmem:[%s1 + $0x78] sm:$0xff]
        %v2258 = vld [vmem:[%s1 + $0x80] sm:$0xff]
        %v2259 = vld [vmem:[%s1 + $0x88] sm:$0xff]
        %v2260 = vld [vmem:[%s1 + $0x90] sm:$0xff]
        %v2261 = vld [vmem:[%s1 + $0x98] sm:$0xff]
        %v2262 = vld [vmem:[%s1 + $0xa0] sm:$0xff]
        %v2263 = vld [vmem:[%s1 + $0xa8] sm:$0xff]
        %v2264 = vld [vmem:[%s1 + $0xb0] sm:$0xff]
        %v2265 = vld [vmem:[%s1 + $0xb8] sm:$0xff]
        %v2266 = vld [vmem:[%s1 + $0xc0] sm:$0xff]
        %v2267 = vld [vmem:[%s1 + $0xc8] sm:$0xff]
        %v2268 = vld [vmem:[%s1 + $0xd0] sm:$0xff]
        %v2269 = vld [vmem:[%s1 + $0xd8] sm:$0xff]
        %v2270 = vld [vmem:[%s1 + $0xe0] sm:$0xff]
        %v2271 = vld [vmem:[%s1 + $0xe8] sm:$0xff]
        %v2272 = vld [vmem:[%s1 + $0xf0] sm:$0xff]
        %v2273 = vld [vmem:[%s1 + $0xf8] sm:$0xff]
        %v2274 = vld [vmem:[%s1 + $0x100] sm:$0xff]
        %v2275 = vld [vmem:[%s1 + $0x108] sm:$0xff]
        %v2276 = vld [vmem:[%s1 + $0x110] sm:$0xff]
        %v2277 = vld [vmem:[%s1 + $0x118] sm:$0xff]
        %v2278 = vld [vmem:[%s1 + $0x120] sm:$0xff]
        %v2279 = vld [vmem:[%s1 + $0x128] sm:$0xff]
        %v2280 = vld [vmem:[%s1 + $0x130] sm:$0xff]
        %v2281 = vld [vmem:[%s1 + $0x138] sm:$0xff]
        %v2282 = vld [vmem:[%s1 + $0x140] sm:$0xff]
        %v2283 = vld [vmem:[%s1 + $0x148] sm:$0xff]
        %v2284 = vld [vmem:[%s1 + $0x150] sm:$0xff]
        %v2285 = vld [vmem:[%s1 + $0x158] sm:$0xff]
        %v2286 = vld [vmem:[%s1 + $0x160] sm:$0xff]
        %v2287 = vld [vmem:[%s1 + $0x168] sm:$0xff]
        %v2288 = vld [vmem:[%s1 + $0x170] sm:$0xff]
        %v2289 = vld [vmem:[%s1 + $0x178] sm:$0xf]
        %2291 = vset.pattern.permute.xlu0 0
        %2292 = vperm.xlu0 %2291, %v2242
        %v2293 = vpop.permute.xlu0 %2292
        %2296 = vset.pattern.permute.xlu0 0
        %2297 = vperm.xlu0 %2296, %v2243
        %v2298 = vpop.permute.xlu0 %2297
        %2301 = vset.pattern.permute.xlu0 0
        %2302 = vperm.xlu0 %2301, %v2244
        %v2303 = vpop.permute.xlu0 %2302
        %2306 = vset.pattern.permute.xlu0 0
        %2307 = vperm.xlu0 %2306, %v2245
        %v2308 = vpop.permute.xlu0 %2307
        %2311 = vset.pattern.permute.xlu0 0
        %2312 = vperm.xlu0 %2311, %v2246
        %v2313 = vpop.permute.xlu0 %2312
        %2316 = vset.pattern.permute.xlu0 0
        %2317 = vperm.xlu0 %2316, %v2247
        %v2318 = vpop.permute.xlu0 %2317
        %2321 = vset.pattern.permute.xlu0 0
        %2322 = vperm.xlu0 %2321, %v2248
        %v2323 = vpop.permute.xlu0 %2322
        %2326 = vset.pattern.permute.xlu0 0
        %2327 = vperm.xlu0 %2326, %v2249
        %v2328 = vpop.permute.xlu0 %2327
        %2331 = vset.pattern.permute.xlu0 0
        %2332 = vperm.xlu0 %2331, %v2250
        %v2333 = vpop.permute.xlu0 %2332
        %2336 = vset.pattern.permute.xlu0 0
        %2337 = vperm.xlu0 %2336, %v2251
        %v2338 = vpop.permute.xlu0 %2337
        %2341 = vset.pattern.permute.xlu0 0
        %2342 = vperm.xlu0 %2341, %v2252
        %v2343 = vpop.permute.xlu0 %2342
        %2346 = vset.pattern.permute.xlu0 0
        %2347 = vperm.xlu0 %2346, %v2253
        %v2348 = vpop.permute.xlu0 %2347
        %2351 = vset.pattern.permute.xlu0 0
        %2352 = vperm.xlu0 %2351, %v2254
        %v2353 = vpop.permute.xlu0 %2352
        %2356 = vset.pattern.permute.xlu0 0
        %2357 = vperm.xlu0 %2356, %v2255
        %v2358 = vpop.permute.xlu0 %2357
        %2361 = vset.pattern.permute.xlu0 0
        %2362 = vperm.xlu0 %2361, %v2256
        %v2363 = vpop.permute.xlu0 %2362
        %2366 = vset.pattern.permute.xlu0 0
        %2367 = vperm.xlu0 %2366, %v2257
        %v2368 = vpop.permute.xlu0 %2367
        %2371 = vset.pattern.permute.xlu0 0
        %2372 = vperm.xlu0 %2371, %v2258
        %v2373 = vpop.permute.xlu0 %2372
        %2376 = vset.pattern.permute.xlu0 0
        %2377 = vperm.xlu0 %2376, %v2259
        %v2378 = vpop.permute.xlu0 %2377
        %2381 = vset.pattern.permute.xlu0 0
        %2382 = vperm.xlu0 %2381, %v2260
        %v2383 = vpop.permute.xlu0 %2382
        %2386 = vset.pattern.permute.xlu0 0
        %2387 = vperm.xlu0 %2386, %v2261
        %v2388 = vpop.permute.xlu0 %2387
        %2391 = vset.pattern.permute.xlu0 0
        %2392 = vperm.xlu0 %2391, %v2262
        %v2393 = vpop.permute.xlu0 %2392
        %2396 = vset.pattern.permute.xlu0 0
        %2397 = vperm.xlu0 %2396, %v2263
        %v2398 = vpop.permute.xlu0 %2397
        %2401 = vset.pattern.permute.xlu0 0
        %2402 = vperm.xlu0 %2401, %v2264
        %v2403 = vpop.permute.xlu0 %2402
        %2406 = vset.pattern.permute.xlu0 0
        %2407 = vperm.xlu0 %2406, %v2265
        %v2408 = vpop.permute.xlu0 %2407
        %2411 = vset.pattern.permute.xlu0 0
        %2412 = vperm.xlu0 %2411, %v2266
        %v2413 = vpop.permute.xlu0 %2412
        %2416 = vset.pattern.permute.xlu0 0
        %2417 = vperm.xlu0 %2416, %v2267
        %v2418 = vpop.permute.xlu0 %2417
        %2421 = vset.pattern.permute.xlu0 0
        %2422 = vperm.xlu0 %2421, %v2268
        %v2423 = vpop.permute.xlu0 %2422
        %2426 = vset.pattern.permute.xlu0 0
        %2427 = vperm.xlu0 %2426, %v2269
        %v2428 = vpop.permute.xlu0 %2427
        %2431 = vset.pattern.permute.xlu0 0
        %2432 = vperm.xlu0 %2431, %v2270
        %v2433 = vpop.permute.xlu0 %2432
        %2436 = vset.pattern.permute.xlu0 0
        %2437 = vperm.xlu0 %2436, %v2271
        %v2438 = vpop.permute.xlu0 %2437
        %2441 = vset.pattern.permute.xlu0 0
        %2442 = vperm.xlu0 %2441, %v2272
        %v2443 = vpop.permute.xlu0 %2442
        %2446 = vset.pattern.permute.xlu0 0
        %2447 = vperm.xlu0 %2446, %v2273
        %v2448 = vpop.permute.xlu0 %2447
        %2451 = vset.pattern.permute.xlu0 0
        %2452 = vperm.xlu0 %2451, %v2274
        %v2453 = vpop.permute.xlu0 %2452
        %2456 = vset.pattern.permute.xlu0 0
        %2457 = vperm.xlu0 %2456, %v2275
        %v2458 = vpop.permute.xlu0 %2457
        %2461 = vset.pattern.permute.xlu0 0
        %2462 = vperm.xlu0 %2461, %v2276
        %v2463 = vpop.permute.xlu0 %2462
        %2466 = vset.pattern.permute.xlu0 0
        %2467 = vperm.xlu0 %2466, %v2277
        %v2468 = vpop.permute.xlu0 %2467
        %2471 = vset.pattern.permute.xlu0 0
        %2472 = vperm.xlu0 %2471, %v2278
        %v2473 = vpop.permute.xlu0 %2472
        %2476 = vset.pattern.permute.xlu0 0
        %2477 = vperm.xlu0 %2476, %v2279
        %v2478 = vpop.permute.xlu0 %2477
        %2481 = vset.pattern.permute.xlu0 0
        %2482 = vperm.xlu0 %2481, %v2280
        %v2483 = vpop.permute.xlu0 %2482
        %2486 = vset.pattern.permute.xlu0 0
        %2487 = vperm.xlu0 %2486, %v2281
        %v2488 = vpop.permute.xlu0 %2487
        %2491 = vset.pattern.permute.xlu0 0
        %2492 = vperm.xlu0 %2491, %v2282
        %v2493 = vpop.permute.xlu0 %2492
        %2496 = vset.pattern.permute.xlu0 0
        %2497 = vperm.xlu0 %2496, %v2283
        %v2498 = vpop.permute.xlu0 %2497
        %2501 = vset.pattern.permute.xlu0 0
        %2502 = vperm.xlu0 %2501, %v2284
        %v2503 = vpop.permute.xlu0 %2502
        %2506 = vset.pattern.permute.xlu0 0
        %2507 = vperm.xlu0 %2506, %v2285
        %v2508 = vpop.permute.xlu0 %2507
        %2511 = vset.pattern.permute.xlu0 0
        %2512 = vperm.xlu0 %2511, %v2286
        %v2513 = vpop.permute.xlu0 %2512
        %2516 = vset.pattern.permute.xlu0 0
        %2517 = vperm.xlu0 %2516, %v2287
        %v2518 = vpop.permute.xlu0 %2517
        %2521 = vset.pattern.permute.xlu0 0
        %2522 = vperm.xlu0 %2521, %v2288
        %v2523 = vpop.permute.xlu0 %2522
        %2526 = vset.pattern.permute.xlu0 0
        %2527 = vperm.xlu0 %2526, %v2289
        %v2528 = vpop.permute.xlu0 %2527
        %v2530 = vmul.f32 %v2194, %v2293
        %v2531 = vmul.f32 %v2195, %v2298
        %v2532 = vmul.f32 %v2196, %v2303
        %v2533 = vmul.f32 %v2197, %v2308
        %v2534 = vmul.f32 %v2198, %v2313
        %v2535 = vmul.f32 %v2199, %v2318
        %v2536 = vmul.f32 %v2200, %v2323
        %v2537 = vmul.f32 %v2201, %v2328
        %v2538 = vmul.f32 %v2202, %v2333
        %v2539 = vmul.f32 %v2203, %v2338
        %v2540 = vmul.f32 %v2204, %v2343
        %v2541 = vmul.f32 %v2205, %v2348
        %v2542 = vmul.f32 %v2206, %v2353
        %v2543 = vmul.f32 %v2207, %v2358
        %v2544 = vmul.f32 %v2208, %v2363
        %v2545 = vmul.f32 %v2209, %v2368
        %v2546 = vmul.f32 %v2210, %v2373
        %v2547 = vmul.f32 %v2211, %v2378
        %v2548 = vmul.f32 %v2212, %v2383
        %v2549 = vmul.f32 %v2213, %v2388
        %v2550 = vmul.f32 %v2214, %v2393
        %v2551 = vmul.f32 %v2215, %v2398
        %v2552 = vmul.f32 %v2216, %v2403
        %v2553 = vmul.f32 %v2217, %v2408
        %v2554 = vmul.f32 %v2218, %v2413
        %v2555 = vmul.f32 %v2219, %v2418
        %v2556 = vmul.f32 %v2220, %v2423
        %v2557 = vmul.f32 %v2221, %v2428
        %v2558 = vmul.f32 %v2222, %v2433
        %v2559 = vmul.f32 %v2223, %v2438
        %v2560 = vmul.f32 %v2224, %v2443
        %v2561 = vmul.f32 %v2225, %v2448
        %v2562 = vmul.f32 %v2226, %v2453
        %v2563 = vmul.f32 %v2227, %v2458
        %v2564 = vmul.f32 %v2228, %v2463
        %v2565 = vmul.f32 %v2229, %v2468
        %v2566 = vmul.f32 %v2230, %v2473
        %v2567 = vmul.f32 %v2231, %v2478
        %v2568 = vmul.f32 %v2232, %v2483
        %v2569 = vmul.f32 %v2233, %v2488
        %v2570 = vmul.f32 %v2234, %v2493
        %v2571 = vmul.f32 %v2235, %v2498
        %v2572 = vmul.f32 %v2236, %v2503
        %v2573 = vmul.f32 %v2237, %v2508
        %v2574 = vmul.f32 %v2238, %v2513
        %v2575 = vmul.f32 %v2239, %v2518
        %v2576 = vmul.f32 %v2240, %v2523
        %v2577 = vmul.f32 %v2241, %v2528
        %v2578 = vpack.c.bf16 %v2530, %v2530
        %v2579 = vpack.c.bf16 %v2531, %v2531
        %v2580 = vpack.c.bf16 %v2532, %v2532
        %v2581 = vpack.c.bf16 %v2533, %v2533
        %v2582 = vpack.c.bf16 %v2534, %v2534
        %v2583 = vpack.c.bf16 %v2535, %v2535
        %v2584 = vpack.c.bf16 %v2536, %v2536
        %v2585 = vpack.c.bf16 %v2537, %v2537
        %v2586 = vpack.c.bf16 %v2538, %v2538
        %v2587 = vpack.c.bf16 %v2539, %v2539
        %v2588 = vpack.c.bf16 %v2540, %v2540
        %v2589 = vpack.c.bf16 %v2541, %v2541
        %v2590 = vpack.c.bf16 %v2542, %v2542
        %v2591 = vpack.c.bf16 %v2543, %v2543
        %v2592 = vpack.c.bf16 %v2544, %v2544
        %v2593 = vpack.c.bf16 %v2545, %v2545
        %v2594 = vpack.c.bf16 %v2546, %v2546
        %v2595 = vpack.c.bf16 %v2547, %v2547
        %v2596 = vpack.c.bf16 %v2548, %v2548
        %v2597 = vpack.c.bf16 %v2549, %v2549
        %v2598 = vpack.c.bf16 %v2550, %v2550
        %v2599 = vpack.c.bf16 %v2551, %v2551
        %v2600 = vpack.c.bf16 %v2552, %v2552
        %v2601 = vpack.c.bf16 %v2553, %v2553
        %v2602 = vpack.c.bf16 %v2554, %v2554
        %v2603 = vpack.c.bf16 %v2555, %v2555
        %v2604 = vpack.c.bf16 %v2556, %v2556
        %v2605 = vpack.c.bf16 %v2557, %v2557
        %v2606 = vpack.c.bf16 %v2558, %v2558
        %v2607 = vpack.c.bf16 %v2559, %v2559
        %v2608 = vpack.c.bf16 %v2560, %v2560
        %v2609 = vpack.c.bf16 %v2561, %v2561
        %v2610 = vpack.c.bf16 %v2562, %v2562
        %v2611 = vpack.c.bf16 %v2563, %v2563
        %v2612 = vpack.c.bf16 %v2564, %v2564
        %v2613 = vpack.c.bf16 %v2565, %v2565
        %v2614 = vpack.c.bf16 %v2566, %v2566
        %v2615 = vpack.c.bf16 %v2567, %v2567
        %v2616 = vpack.c.bf16 %v2568, %v2568
        %v2617 = vpack.c.bf16 %v2569, %v2569
        %v2618 = vpack.c.bf16 %v2570, %v2570
        %v2619 = vpack.c.bf16 %v2571, %v2571
        %v2620 = vpack.c.bf16 %v2572, %v2572
        %v2621 = vpack.c.bf16 %v2573, %v2573
        %v2622 = vpack.c.bf16 %v2574, %v2574
        %v2623 = vpack.c.bf16 %v2575, %v2575
        %v2624 = vpack.c.bf16 %v2576, %v2576
        %v2625 = vpack.c.bf16 %v2577, %v2577
        %v2626 = vld [vmem:[#allocation5] sm:$0xf]
        %v2627 = vld [vmem:[#allocation5 + $0x4] sm:$0xf]
        %v2628 = vld [vmem:[#allocation5 + $0x8] sm:$0xf]
        %v2629 = vld [vmem:[#allocation5 + $0xc] sm:$0xf]
        %v2630 = vld [vmem:[#allocation5 + $0x10] sm:$0xf]
        %v2631 = vld [vmem:[#allocation5 + $0x14] sm:$0xf]
        %v2632 = vld [vmem:[#allocation5 + $0x18] sm:$0xf]
        %v2633 = vld [vmem:[#allocation5 + $0x1c] sm:$0xf]
        %v2634 = vld [vmem:[#allocation5 + $0x20] sm:$0xf]
        %v2635 = vld [vmem:[#allocation5 + $0x24] sm:$0xf]
        %v2636 = vld [vmem:[#allocation5 + $0x28] sm:$0xf]
        %v2637 = vld [vmem:[#allocation5 + $0x2c] sm:$0xf]
        %v2638 = vld [vmem:[#allocation5 + $0x30] sm:$0xf]
        %v2639 = vld [vmem:[#allocation5 + $0x34] sm:$0xf]
        %v2640 = vld [vmem:[#allocation5 + $0x38] sm:$0xf]
        %v2641 = vld [vmem:[#allocation5 + $0x3c] sm:$0xf]
        %s2642 = scalar_lea.vmem [#allocation5], 64
        %v2643 = vld [vmem:[%s2642] sm:$0xf]
        %v2644 = vld [vmem:[%s2642 + $0x4] sm:$0xf]
        %v2645 = vld [vmem:[%s2642 + $0x8] sm:$0xf]
        %v2646 = vld [vmem:[%s2642 + $0xc] sm:$0xf]
        %v2647 = vld [vmem:[%s2642 + $0x10] sm:$0xf]
        %v2648 = vld [vmem:[%s2642 + $0x14] sm:$0xf]
        %v2649 = vld [vmem:[%s2642 + $0x18] sm:$0xf]
        %v2650 = vld [vmem:[%s2642 + $0x1c] sm:$0xf]
        %v2651 = vld [vmem:[%s2642 + $0x20] sm:$0xf]
        %v2652 = vld [vmem:[%s2642 + $0x24] sm:$0xf]
        %v2653 = vld [vmem:[%s2642 + $0x28] sm:$0xf]
        %v2654 = vld [vmem:[%s2642 + $0x2c] sm:$0xf]
        %v2655 = vld [vmem:[%s2642 + $0x30] sm:$0xf]
        %v2656 = vld [vmem:[%s2642 + $0x34] sm:$0xf]
        %v2657 = vld [vmem:[%s2642 + $0x38] sm:$0xf]
        %v2658 = vld [vmem:[%s2642 + $0x3c] sm:$0xf]
        %v2707 = vunpack.c.l.b16 %v2578
        %v2708 = vunpack.c.l.b16 %v2579
        %v2709 = vunpack.c.l.b16 %v2580
        %v2710 = vunpack.c.l.b16 %v2581
        %v2711 = vunpack.c.l.b16 %v2582
        %v2712 = vunpack.c.l.b16 %v2583
        %v2713 = vunpack.c.l.b16 %v2584
        %v2714 = vunpack.c.l.b16 %v2585
        %v2715 = vunpack.c.l.b16 %v2586
        %v2716 = vunpack.c.l.b16 %v2587
        %v2717 = vunpack.c.l.b16 %v2588
        %v2718 = vunpack.c.l.b16 %v2589
        %v2719 = vunpack.c.l.b16 %v2590
        %v2720 = vunpack.c.l.b16 %v2591
        %v2721 = vunpack.c.l.b16 %v2592
        %v2722 = vunpack.c.l.b16 %v2593
        %v2723 = vunpack.c.l.b16 %v2594
        %v2724 = vunpack.c.l.b16 %v2595
        %v2725 = vunpack.c.l.b16 %v2596
        %v2726 = vunpack.c.l.b16 %v2597
        %v2727 = vunpack.c.l.b16 %v2598
        %v2728 = vunpack.c.l.b16 %v2599
        %v2729 = vunpack.c.l.b16 %v2600
        %v2730 = vunpack.c.l.b16 %v2601
        %v2731 = vunpack.c.l.b16 %v2602
        %v2732 = vunpack.c.l.b16 %v2603
        %v2733 = vunpack.c.l.b16 %v2604
        %v2734 = vunpack.c.l.b16 %v2605
        %v2735 = vunpack.c.l.b16 %v2606
        %v2736 = vunpack.c.l.b16 %v2607
        %v2737 = vunpack.c.l.b16 %v2608
        %v2738 = vunpack.c.l.b16 %v2609
        %v2739 = vunpack.c.l.b16 %v2610
        %v2740 = vunpack.c.l.b16 %v2611
        %v2741 = vunpack.c.l.b16 %v2612
        %v2742 = vunpack.c.l.b16 %v2613
        %v2743 = vunpack.c.l.b16 %v2614
        %v2744 = vunpack.c.l.b16 %v2615
        %v2745 = vunpack.c.l.b16 %v2616
        %v2746 = vunpack.c.l.b16 %v2617
        %v2747 = vunpack.c.l.b16 %v2618
        %v2748 = vunpack.c.l.b16 %v2619
        %v2749 = vunpack.c.l.b16 %v2620
        %v2750 = vunpack.c.l.b16 %v2621
        %v2751 = vunpack.c.l.b16 %v2622
        %v2752 = vunpack.c.l.b16 %v2623
        %v2753 = vunpack.c.l.b16 %v2624
        %v2754 = vunpack.c.l.b16 %v2625
        %v2755 = vpack.c.b16 %v2708, %v2707
        %v2756 = vpack.c.b16 %v2710, %v2709
        %v2757 = vpack.c.b16 %v2712, %v2711
        %v2758 = vpack.c.b16 %v2714, %v2713
        %v2759 = vpack.c.b16 %v2716, %v2715
        %v2760 = vpack.c.b16 %v2718, %v2717
        %v2761 = vpack.c.b16 %v2720, %v2719
        %v2762 = vpack.c.b16 %v2722, %v2721
        %v2763 = vpack.c.b16 %v2724, %v2723
        %v2764 = vpack.c.b16 %v2726, %v2725
        %v2765 = vpack.c.b16 %v2728, %v2727
        %v2766 = vpack.c.b16 %v2730, %v2729
        %v2767 = vpack.c.b16 %v2732, %v2731
        %v2768 = vpack.c.b16 %v2734, %v2733
        %v2769 = vpack.c.b16 %v2736, %v2735
        %v2770 = vpack.c.b16 %v2738, %v2737
        %v2771 = vpack.c.b16 %v2740, %v2739
        %v2772 = vpack.c.b16 %v2742, %v2741
        %v2773 = vpack.c.b16 %v2744, %v2743
        %v2774 = vpack.c.b16 %v2746, %v2745
        %v2775 = vpack.c.b16 %v2748, %v2747
        %v2776 = vpack.c.b16 %v2750, %v2749
        %v2777 = vpack.c.b16 %v2752, %v2751
        %v2778 = vpack.c.b16 %v2754, %v2753
        %v2780 = vshrl.u32 %v2755, 16
        %v2782 = vshll.u32 %v2755, 16
        %v2784 = vrot.slane %v2782, 1
        %v2785 = vor.u32 %v2780, %v2784
        %v2787 = vshll.u32 %v2756, 16
        %v2789 = vrot.slane %v2787, 1
        %v2790 = vsel %vm558, %v2785, %v2789
        %v2791 = vshrl.u32 %v2756, 16
        %v2793 = vor.u32 %v2791, %v2789
        %v2795 = vshll.u32 %v2757, 16
        %v2797 = vrot.slane %v2795, 1
        %v2798 = vsel %vm558, %v2793, %v2797
        %v2799 = vshrl.u32 %v2757, 16
        %v2801 = vor.u32 %v2799, %v2797
        %v2803 = vshll.u32 %v2758, 16
        %v2805 = vrot.slane %v2803, 1
        %v2806 = vsel %vm558, %v2801, %v2805
        %v2807 = vshrl.u32 %v2758, 16
        %v2809 = vor.u32 %v2807, %v2805
        %v2811 = vshll.u32 %v2759, 16
        %v2813 = vrot.slane %v2811, 1
        %v2814 = vsel %vm558, %v2809, %v2813
        %v2815 = vshrl.u32 %v2759, 16
        %v2817 = vor.u32 %v2815, %v2813
        %v2819 = vshll.u32 %v2760, 16
        %v2821 = vrot.slane %v2819, 1
        %v2822 = vsel %vm558, %v2817, %v2821
        %v2823 = vshrl.u32 %v2760, 16
        %v2825 = vor.u32 %v2823, %v2821
        %v2827 = vshll.u32 %v2761, 16
        %v2829 = vrot.slane %v2827, 1
        %v2830 = vsel %vm558, %v2825, %v2829
        %v2831 = vshrl.u32 %v2761, 16
        %v2833 = vor.u32 %v2831, %v2829
        %v2835 = vshll.u32 %v2762, 16
        %v2837 = vrot.slane %v2835, 1
        %v2838 = vsel %vm558, %v2833, %v2837
        %v2839 = vshrl.u32 %v2762, 16
        %v2841 = vor.u32 %v2839, %v2837
        %v2843 = vshll.u32 %v2763, 16
        %v2845 = vrot.slane %v2843, 1
        %v2846 = vsel %vm558, %v2841, %v2845
        %v2847 = vshrl.u32 %v2763, 16
        %v2849 = vor.u32 %v2847, %v2845
        %v2851 = vshll.u32 %v2764, 16
        %v2853 = vrot.slane %v2851, 1
        %v2854 = vsel %vm558, %v2849, %v2853
        %v2855 = vshrl.u32 %v2764, 16
        %v2857 = vor.u32 %v2855, %v2853
        %v2859 = vshll.u32 %v2765, 16
        %v2861 = vrot.slane %v2859, 1
        %v2862 = vsel %vm558, %v2857, %v2861
        %v2863 = vshrl.u32 %v2765, 16
        %v2865 = vor.u32 %v2863, %v2861
        %v2867 = vshll.u32 %v2766, 16
        %v2869 = vrot.slane %v2867, 1
        %v2870 = vsel %vm558, %v2865, %v2869
        %v2871 = vshrl.u32 %v2766, 16
        %v2873 = vor.u32 %v2871, %v2869
        %v2875 = vshll.u32 %v2767, 16
        %v2877 = vrot.slane %v2875, 1
        %v2878 = vsel %vm558, %v2873, %v2877
        %v2879 = vshrl.u32 %v2767, 16
        %v2881 = vor.u32 %v2879, %v2877
        %v2883 = vshll.u32 %v2768, 16
        %v2885 = vrot.slane %v2883, 1
        %v2886 = vsel %vm558, %v2881, %v2885
        %v2887 = vshrl.u32 %v2768, 16
        %v2889 = vor.u32 %v2887, %v2885
        %v2891 = vshll.u32 %v2769, 16
        %v2893 = vrot.slane %v2891, 1
        %v2894 = vsel %vm558, %v2889, %v2893
        %v2895 = vshrl.u32 %v2769, 16
        %v2897 = vor.u32 %v2895, %v2893
        %v2899 = vshll.u32 %v2770, 16
        %v2901 = vrot.slane %v2899, 1
        %v2902 = vsel %vm558, %v2897, %v2901
        %v2903 = vshrl.u32 %v2770, 16
        %v2905 = vor.u32 %v2903, %v2901
        %v2907 = vshll.u32 %v2771, 16
        %v2909 = vrot.slane %v2907, 1
        %v2910 = vsel %vm558, %v2905, %v2909
        %v2911 = vshrl.u32 %v2771, 16
        %v2913 = vor.u32 %v2911, %v2909
        %v2915 = vshll.u32 %v2772, 16
        %v2917 = vrot.slane %v2915, 1
        %v2918 = vsel %vm558, %v2913, %v2917
        %v2919 = vshrl.u32 %v2772, 16
        %v2921 = vor.u32 %v2919, %v2917
        %v2923 = vshll.u32 %v2773, 16
        %v2925 = vrot.slane %v2923, 1
        %v2926 = vsel %vm558, %v2921, %v2925
        %v2927 = vshrl.u32 %v2773, 16
        %v2929 = vor.u32 %v2927, %v2925
        %v2931 = vshll.u32 %v2774, 16
        %v2933 = vrot.slane %v2931, 1
        %v2934 = vsel %vm558, %v2929, %v2933
        %v2935 = vshrl.u32 %v2774, 16
        %v2937 = vor.u32 %v2935, %v2933
        %v2939 = vshll.u32 %v2775, 16
        %v2941 = vrot.slane %v2939, 1
        %v2942 = vsel %vm558, %v2937, %v2941
        %v2943 = vshrl.u32 %v2775, 16
        %v2945 = vor.u32 %v2943, %v2941
        %v2947 = vshll.u32 %v2776, 16
        %v2949 = vrot.slane %v2947, 1
        %v2950 = vsel %vm558, %v2945, %v2949
        %v2951 = vshrl.u32 %v2776, 16
        %v2953 = vor.u32 %v2951, %v2949
        %v2955 = vshll.u32 %v2777, 16
        %v2957 = vrot.slane %v2955, 1
        %v2958 = vsel %vm558, %v2953, %v2957
        %v2959 = vshrl.u32 %v2777, 16
        %v2961 = vor.u32 %v2959, %v2957
        %v2963 = vshll.u32 %v2778, 16
        %v2965 = vrot.slane %v2963, 1
        %v2966 = vsel %vm558, %v2961, %v2965
        %v2967 = vshrl.u32 %v2778, 16
        %v2969 = vor.u32 %v2967, %v2965
        %v3010 = vunpack.c.l.b16 %v2643
        %v3011 = vunpack.c.l.b16 %v2644
        %v3012 = vunpack.c.l.b16 %v2645
        %v3013 = vunpack.c.l.b16 %v2646
        %v3014 = vunpack.c.l.b16 %v2647
        %v3015 = vunpack.c.l.b16 %v2648
        %v3016 = vunpack.c.l.b16 %v2649
        %v3017 = vunpack.c.l.b16 %v2650
        %v3018 = vunpack.c.l.b16 %v2651
        %v3019 = vunpack.c.l.b16 %v2652
        %v3020 = vunpack.c.l.b16 %v2653
        %v3021 = vunpack.c.l.b16 %v2654
        %v3022 = vunpack.c.l.b16 %v2655
        %v3023 = vunpack.c.l.b16 %v2656
        %v3024 = vunpack.c.l.b16 %v2657
        %v3025 = vunpack.c.l.b16 %v2658
        %v3026 = vpack.c.b16 %v3011, %v3010
        %v3027 = vpack.c.b16 %v3013, %v3012
        %v3028 = vpack.c.b16 %v3015, %v3014
        %v3029 = vpack.c.b16 %v3017, %v3016
        %v3030 = vpack.c.b16 %v3019, %v3018
        %v3031 = vpack.c.b16 %v3021, %v3020
        %v3032 = vpack.c.b16 %v3023, %v3022
        %v3033 = vpack.c.b16 %v3025, %v3024
        %3042 = vmatpush.bf16.msra.mxu0 %v3033
        %3043 = vmatpush.bf16.msra.mxu0 %v3032
        %3044 = vmatpush.bf16.msra.mxu0 %v3031
        %3045 = vmatpush.bf16.msra.mxu0 %v3030
        %3046 = vmatpush.bf16.msra.mxu0 %v3029
        %3047 = vmatpush.bf16.msra.mxu0 %v3028
        %3048 = vmatpush.bf16.msra.mxu0 %v3027
        %3049 = vmatpush.bf16.msra.mxu0 %v3026
        %3050 = vmatmul.bf16.gmra.mxu0 %v2790
        %v3051 = vpop.f32.mrf.mxu0
        %v3052 = vadd.f32 0.0, %v3051
        %v3053 = vpop.f32.mrf.mxu0
        %v3054 = vadd.f32 0.0, %v3053
        %3055 = vmatmul.bf16.gmra.mxu0 %v2798
        %v3056 = vpop.f32.mrf.mxu0
        %v3057 = vpop.f32.mrf.mxu0
        %v3058 = vadd.f32 0.0, %v3057
        %3059 = vmatmul.bf16.gmra.mxu0 %v2806
        %v3060 = vpop.f32.mrf.mxu0
        %v3061 = vadd.f32 0.0, %v3060
        %v3062 = vpop.f32.mrf.mxu0
        %3063 = vmatmul.bf16.gmra.mxu0 %v2814
        %v3064 = vpop.f32.mrf.mxu0
        %v3065 = vadd.f32 0.0, %v3064
        %v3066 = vpop.f32.mrf.mxu0
        %v3067 = vadd.f32 0.0, %v3066
        %3068 = vmatmul.bf16.gmra.mxu0 %v2822
        %v3069 = vpop.f32.mrf.mxu0
        %v3070 = vpop.f32.mrf.mxu0
        %v3071 = vadd.f32 0.0, %v3070
        %3072 = vmatmul.bf16.gmra.mxu0 %v2830
        %v3073 = vpop.f32.mrf.mxu0
        %v3074 = vadd.f32 0.0, %v3073
        %v3075 = vpop.f32.mrf.mxu0
        %3076 = vmatmul.bf16.gmra.mxu0 %v2838
        %v3077 = vpop.f32.mrf.mxu0
        %v3078 = vadd.f32 0.0, %v3077
        %v3079 = vpop.f32.mrf.mxu0
        %v3080 = vadd.f32 0.0, %v3079
        %3081 = vmatmul.bf16.gmra.mxu0 %v2846
        %v3082 = vpop.f32.mrf.mxu0
        %v3083 = vpop.f32.mrf.mxu0
        %v3084 = vadd.f32 0.0, %v3083
        %3085 = vmatmul.bf16.gmra.mxu0 %v2854
        %v3086 = vpop.f32.mrf.mxu0
        %v3087 = vadd.f32 0.0, %v3086
        %v3088 = vpop.f32.mrf.mxu0
        %3089 = vmatmul.bf16.gmra.mxu0 %v2862
        %v3090 = vpop.f32.mrf.mxu0
        %v3091 = vadd.f32 0.0, %v3090
        %v3092 = vpop.f32.mrf.mxu0
        %v3093 = vadd.f32 0.0, %v3092
        %3094 = vmatmul.bf16.gmra.mxu0 %v2870
        %v3095 = vpop.f32.mrf.mxu0
        %v3096 = vpop.f32.mrf.mxu0
        %v3097 = vadd.f32 0.0, %v3096
        %3098 = vmatmul.bf16.gmra.mxu0 %v2878
        %v3099 = vpop.f32.mrf.mxu0
        %v3100 = vadd.f32 0.0, %v3099
        %v3101 = vpop.f32.mrf.mxu0
        %3102 = vmatmul.bf16.gmra.mxu0 %v2886
        %v3103 = vpop.f32.mrf.mxu0
        %v3104 = vadd.f32 0.0, %v3103
        %v3105 = vpop.f32.mrf.mxu0
        %v3106 = vadd.f32 0.0, %v3105
        %3107 = vmatmul.bf16.gmra.mxu0 %v2894
        %v3108 = vpop.f32.mrf.mxu0
        %v3109 = vpop.f32.mrf.mxu0
        %v3110 = vadd.f32 0.0, %v3109
        %3111 = vmatmul.bf16.gmra.mxu0 %v2902
        %v3112 = vpop.f32.mrf.mxu0
        %v3113 = vadd.f32 0.0, %v3112
        %v3114 = vpop.f32.mrf.mxu0
        %3115 = vmatmul.bf16.gmra.mxu0 %v2910
        %v3116 = vpop.f32.mrf.mxu0
        %v3117 = vadd.f32 0.0, %v3116
        %v3118 = vpop.f32.mrf.mxu0
        %v3119 = vadd.f32 0.0, %v3118
        %3120 = vmatmul.bf16.gmra.mxu0 %v2918
        %v3121 = vpop.f32.mrf.mxu0
        %v3122 = vpop.f32.mrf.mxu0
        %v3123 = vadd.f32 0.0, %v3122
        %3124 = vmatmul.bf16.gmra.mxu0 %v2926
        %v3125 = vpop.f32.mrf.mxu0
        %v3126 = vadd.f32 0.0, %v3125
        %v3127 = vpop.f32.mrf.mxu0
        %3128 = vmatmul.bf16.gmra.mxu0 %v2934
        %v3129 = vpop.f32.mrf.mxu0
        %v3130 = vadd.f32 0.0, %v3129
        %v3131 = vpop.f32.mrf.mxu0
        %v3132 = vadd.f32 0.0, %v3131
        %3133 = vmatmul.bf16.gmra.mxu0 %v2942
        %v3134 = vpop.f32.mrf.mxu0
        %v3135 = vpop.f32.mrf.mxu0
        %v3136 = vadd.f32 0.0, %v3135
        %3137 = vmatmul.bf16.gmra.mxu0 %v2950
        %v3138 = vpop.f32.mrf.mxu0
        %v3139 = vadd.f32 0.0, %v3138
        %v3140 = vpop.f32.mrf.mxu0
        %3141 = vmatmul.bf16.gmra.mxu0 %v2958
        %v3142 = vpop.f32.mrf.mxu0
        %v3143 = vadd.f32 0.0, %v3142
        %v3144 = vpop.f32.mrf.mxu0
        %v3145 = vadd.f32 0.0, %v3144
        %3146 = vmatmul.bf16.gmra.mxu0 %v2966
        %v3147 = vpop.f32.mrf.mxu0
        %v3148 = vpop.f32.mrf.mxu0
        %v3149 = vadd.f32 0.0, %v3148
        %3150 = vmatmul.bf16.gmra.mxu0 %v2969
        %v3151 = vpop.f32.mrf.mxu0
        %v3152 = vadd.f32 0.0, %v3151
        %v3153 = vpop.f32.mrf.mxu0
        %3154 = vdwg.mxu0
        %v3195 = vunpack.c.l.b16 %v2626
        %v3196 = vunpack.c.l.b16 %v2627
        %v3197 = vunpack.c.l.b16 %v2628
        %v3198 = vunpack.c.l.b16 %v2629
        %v3199 = vunpack.c.l.b16 %v2630
        %v3200 = vunpack.c.l.b16 %v2631
        %v3201 = vunpack.c.l.b16 %v2632
        %v3202 = vunpack.c.l.b16 %v2633
        %v3203 = vunpack.c.l.b16 %v2634
        %v3204 = vunpack.c.l.b16 %v2635
        %v3205 = vunpack.c.l.b16 %v2636
        %v3206 = vunpack.c.l.b16 %v2637
        %v3207 = vunpack.c.l.b16 %v2638
        %v3208 = vunpack.c.l.b16 %v2639
        %v3209 = vunpack.c.l.b16 %v2640
        %v3210 = vunpack.c.l.b16 %v2641
        %v3211 = vpack.c.b16 %v3196, %v3195
        %v3212 = vpack.c.b16 %v3198, %v3197
        %v3213 = vpack.c.b16 %v3200, %v3199
        %v3214 = vpack.c.b16 %v3202, %v3201
        %v3215 = vpack.c.b16 %v3204, %v3203
        %v3216 = vpack.c.b16 %v3206, %v3205
        %v3217 = vpack.c.b16 %v3208, %v3207
        %v3218 = vpack.c.b16 %v3210, %v3209
        %3227 = vmatpush.bf16.msra.mxu0 %v3218
        %3228 = vmatpush.bf16.msra.mxu0 %v3217
        %3229 = vmatpush.bf16.msra.mxu0 %v3216
        %3230 = vmatpush.bf16.msra.mxu0 %v3215
        %3231 = vmatpush.bf16.msra.mxu0 %v3214
        %3232 = vmatpush.bf16.msra.mxu0 %v3213
        %3233 = vmatpush.bf16.msra.mxu0 %v3212
        %3234 = vmatpush.bf16.msra.mxu0 %v3211
        %3235 = vmatmul.bf16.gmra.mxu0 %v2755
        %v3236 = vpop.f32.mrf.mxu0
        %v3237 = vadd.f32 %v3052, %v3236
        %v3238 = vpop.f32.mrf.mxu0
        %v3239 = vadd.f32 %v3054, %v3238
        %3240 = vmatmul.bf16.gmra.mxu0 %v2756
        %v3241 = vpop.f32.mrf.mxu0
        %v3242 = vpop.f32.mrf.mxu0
        %v3243 = vadd.f32 %v3058, %v3242
        %3244 = vmatmul.bf16.gmra.mxu0 %v2757
        %v3245 = vpop.f32.mrf.mxu0
        %v3246 = vadd.f32 %v3061, %v3245
        %v3247 = vpop.f32.mrf.mxu0
        %3248 = vmatmul.bf16.gmra.mxu0 %v2758
        %v3249 = vpop.f32.mrf.mxu0
        %v3250 = vadd.f32 %v3065, %v3249
        %v3251 = vpop.f32.mrf.mxu0
        %v3252 = vadd.f32 %v3067, %v3251
        %3253 = vmatmul.bf16.gmra.mxu0 %v2759
        %v3254 = vpop.f32.mrf.mxu0
        %v3255 = vpop.f32.mrf.mxu0
        %v3256 = vadd.f32 %v3071, %v3255
        %3257 = vmatmul.bf16.gmra.mxu0 %v2760
        %v3258 = vpop.f32.mrf.mxu0
        %v3259 = vadd.f32 %v3074, %v3258
        %v3260 = vpop.f32.mrf.mxu0
        %3261 = vmatmul.bf16.gmra.mxu0 %v2761
        %v3262 = vpop.f32.mrf.mxu0
        %v3263 = vadd.f32 %v3078, %v3262
        %v3264 = vpop.f32.mrf.mxu0
        %v3265 = vadd.f32 %v3080, %v3264
        %3266 = vmatmul.bf16.gmra.mxu0 %v2762
        %v3267 = vpop.f32.mrf.mxu0
        %v3268 = vpop.f32.mrf.mxu0
        %v3269 = vadd.f32 %v3084, %v3268
        %3270 = vmatmul.bf16.gmra.mxu0 %v2763
        %v3271 = vpop.f32.mrf.mxu0
        %v3272 = vadd.f32 %v3087, %v3271
        %v3273 = vpop.f32.mrf.mxu0
        %3274 = vmatmul.bf16.gmra.mxu0 %v2764
        %v3275 = vpop.f32.mrf.mxu0
        %v3276 = vadd.f32 %v3091, %v3275
        %v3277 = vpop.f32.mrf.mxu0
        %v3278 = vadd.f32 %v3093, %v3277
        %3279 = vmatmul.bf16.gmra.mxu0 %v2765
        %v3280 = vpop.f32.mrf.mxu0
        %v3281 = vpop.f32.mrf.mxu0
        %v3282 = vadd.f32 %v3097, %v3281
        %3283 = vmatmul.bf16.gmra.mxu0 %v2766
        %v3284 = vpop.f32.mrf.mxu0
        %v3285 = vadd.f32 %v3100, %v3284
        %v3286 = vpop.f32.mrf.mxu0
        %3287 = vmatmul.bf16.gmra.mxu0 %v2767
        %v3288 = vpop.f32.mrf.mxu0
        %v3289 = vadd.f32 %v3104, %v3288
        %v3290 = vpop.f32.mrf.mxu0
        %v3291 = vadd.f32 %v3106, %v3290
        %3292 = vmatmul.bf16.gmra.mxu0 %v2768
        %v3293 = vpop.f32.mrf.mxu0
        %v3294 = vpop.f32.mrf.mxu0
        %v3295 = vadd.f32 %v3110, %v3294
        %3296 = vmatmul.bf16.gmra.mxu0 %v2769
        %v3297 = vpop.f32.mrf.mxu0
        %v3298 = vadd.f32 %v3113, %v3297
        %v3299 = vpop.f32.mrf.mxu0
        %3300 = vmatmul.bf16.gmra.mxu0 %v2770
        %v3301 = vpop.f32.mrf.mxu0
        %v3302 = vadd.f32 %v3117, %v3301
        %v3303 = vpop.f32.mrf.mxu0
        %v3304 = vadd.f32 %v3119, %v3303
        %3305 = vmatmul.bf16.gmra.mxu0 %v2771
        %v3306 = vpop.f32.mrf.mxu0
        %v3307 = vpop.f32.mrf.mxu0
        %v3308 = vadd.f32 %v3123, %v3307
        %3309 = vmatmul.bf16.gmra.mxu0 %v2772
        %v3310 = vpop.f32.mrf.mxu0
        %v3311 = vadd.f32 %v3126, %v3310
        %v3312 = vpop.f32.mrf.mxu0
        %3313 = vmatmul.bf16.gmra.mxu0 %v2773
        %v3314 = vpop.f32.mrf.mxu0
        %v3315 = vadd.f32 %v3130, %v3314
        %v3316 = vpop.f32.mrf.mxu0
        %v3317 = vadd.f32 %v3132, %v3316
        %3318 = vmatmul.bf16.gmra.mxu0 %v2774
        %v3319 = vpop.f32.mrf.mxu0
        %v3320 = vpop.f32.mrf.mxu0
        %v3321 = vadd.f32 %v3136, %v3320
        %3322 = vmatmul.bf16.gmra.mxu0 %v2775
        %v3323 = vpop.f32.mrf.mxu0
        %v3324 = vadd.f32 %v3139, %v3323
        %v3325 = vpop.f32.mrf.mxu0
        %3326 = vmatmul.bf16.gmra.mxu0 %v2776
        %v3327 = vpop.f32.mrf.mxu0
        %v3328 = vadd.f32 %v3143, %v3327
        %v3329 = vpop.f32.mrf.mxu0
        %v3330 = vadd.f32 %v3145, %v3329
        %3331 = vmatmul.bf16.gmra.mxu0 %v2777
        %v3332 = vpop.f32.mrf.mxu0
        %v3333 = vpop.f32.mrf.mxu0
        %v3334 = vadd.f32 %v3149, %v3333
        %3335 = vmatmul.bf16.gmra.mxu0 %v2778
        %v3336 = vpop.f32.mrf.mxu0
        %v3337 = vadd.f32 %v3152, %v3336
        %v3338 = vpop.f32.mrf.mxu0
        %3339 = vdwg.mxu0
        %s3340 = scalar_lea.vmem [#allocation5], 128
        %v3341 = vld [vmem:[%s3340] sm:$0xf]
        %v3342 = vld [vmem:[%s3340 + $0x4] sm:$0xf]
        %v3343 = vld [vmem:[%s3340 + $0x8] sm:$0xf]
        %v3344 = vld [vmem:[%s3340 + $0xc] sm:$0xf]
        %v3345 = vld [vmem:[%s3340 + $0x10] sm:$0xf]
        %v3346 = vld [vmem:[%s3340 + $0x14] sm:$0xf]
        %v3347 = vld [vmem:[%s3340 + $0x18] sm:$0xf]
        %v3348 = vld [vmem:[%s3340 + $0x1c] sm:$0xf]
        %v3349 = vld [vmem:[%s3340 + $0x20] sm:$0xf]
        %v3350 = vld [vmem:[%s3340 + $0x24] sm:$0xf]
        %v3351 = vld [vmem:[%s3340 + $0x28] sm:$0xf]
        %v3352 = vld [vmem:[%s3340 + $0x2c] sm:$0xf]
        %v3353 = vld [vmem:[%s3340 + $0x30] sm:$0xf]
        %v3354 = vld [vmem:[%s3340 + $0x34] sm:$0xf]
        %v3355 = vld [vmem:[%s3340 + $0x38] sm:$0xf]
        %v3356 = vld [vmem:[%s3340 + $0x3c] sm:$0xf]
        %v3357 = vrot.slane %v2755, 1
        %v3358 = vrot.slane %v2756, 1
        %v3359 = vsel %vm1169, %v3357, %v3358
        %v3360 = vrot.slane %v2757, 1
        %v3361 = vsel %vm1169, %v3358, %v3360
        %v3362 = vrot.slane %v2758, 1
        %v3363 = vsel %vm1169, %v3360, %v3362
        %v3364 = vrot.slane %v2759, 1
        %v3365 = vsel %vm1169, %v3362, %v3364
        %v3366 = vrot.slane %v2760, 1
        %v3367 = vsel %vm1169, %v3364, %v3366
        %v3368 = vrot.slane %v2761, 1
        %v3369 = vsel %vm1169, %v3366, %v3368
        %v3370 = vrot.slane %v2762, 1
        %v3371 = vsel %vm1169, %v3368, %v3370
        %v3372 = vrot.slane %v2763, 1
        %v3373 = vsel %vm1169, %v3370, %v3372
        %v3374 = vrot.slane %v2764, 1
        %v3375 = vsel %vm1169, %v3372, %v3374
        %v3376 = vrot.slane %v2765, 1
        %v3377 = vsel %vm1169, %v3374, %v3376
        %v3378 = vrot.slane %v2766, 1
        %v3379 = vsel %vm1169, %v3376, %v3378
        %v3380 = vrot.slane %v2767, 1
        %v3381 = vsel %vm1169, %v3378, %v3380
        %v3382 = vrot.slane %v2768, 1
        %v3383 = vsel %vm1169, %v3380, %v3382
        %v3384 = vrot.slane %v2769, 1
        %v3385 = vsel %vm1169, %v3382, %v3384
        %v3386 = vrot.slane %v2770, 1
        %v3387 = vsel %vm1169, %v3384, %v3386
        %v3388 = vrot.slane %v2771, 1
        %v3389 = vsel %vm1169, %v3386, %v3388
        %v3390 = vrot.slane %v2772, 1
        %v3391 = vsel %vm1169, %v3388, %v3390
        %v3392 = vrot.slane %v2773, 1
        %v3393 = vsel %vm1169, %v3390, %v3392
        %v3394 = vrot.slane %v2774, 1
        %v3395 = vsel %vm1169, %v3392, %v3394
        %v3396 = vrot.slane %v2775, 1
        %v3397 = vsel %vm1169, %v3394, %v3396
        %v3398 = vrot.slane %v2776, 1
        %v3399 = vsel %vm1169, %v3396, %v3398
        %v3400 = vrot.slane %v2777, 1
        %v3401 = vsel %vm1169, %v3398, %v3400
        %v3402 = vrot.slane %v2778, 1
        %v3403 = vsel %vm1169, %v3400, %v3402
        %v3444 = vunpack.c.l.b16 %v3341
        %v3445 = vunpack.c.l.b16 %v3342
        %v3446 = vunpack.c.l.b16 %v3343
        %v3447 = vunpack.c.l.b16 %v3344
        %v3448 = vunpack.c.l.b16 %v3345
        %v3449 = vunpack.c.l.b16 %v3346
        %v3450 = vunpack.c.l.b16 %v3347
        %v3451 = vunpack.c.l.b16 %v3348
        %v3452 = vunpack.c.l.b16 %v3349
        %v3453 = vunpack.c.l.b16 %v3350
        %v3454 = vunpack.c.l.b16 %v3351
        %v3455 = vunpack.c.l.b16 %v3352
        %v3456 = vunpack.c.l.b16 %v3353
        %v3457 = vunpack.c.l.b16 %v3354
        %v3458 = vunpack.c.l.b16 %v3355
        %v3459 = vunpack.c.l.b16 %v3356
        %v3460 = vpack.c.b16 %v3445, %v3444
        %v3461 = vpack.c.b16 %v3447, %v3446
        %v3462 = vpack.c.b16 %v3449, %v3448
        %v3463 = vpack.c.b16 %v3451, %v3450
        %v3464 = vpack.c.b16 %v3453, %v3452
        %v3465 = vpack.c.b16 %v3455, %v3454
        %v3466 = vpack.c.b16 %v3457, %v3456
        %v3467 = vpack.c.b16 %v3459, %v3458
        %3476 = vmatpush.bf16.msra.mxu0 %v3467
        %3477 = vmatpush.bf16.msra.mxu0 %v3466
        %3478 = vmatpush.bf16.msra.mxu0 %v3465
        %3479 = vmatpush.bf16.msra.mxu0 %v3464
        %3480 = vmatpush.bf16.msra.mxu0 %v3463
        %3481 = vmatpush.bf16.msra.mxu0 %v3462
        %3482 = vmatpush.bf16.msra.mxu0 %v3461
        %3483 = vmatpush.bf16.msra.mxu0 %v3460
        %3484 = vmatmul.bf16.gmra.mxu0 %v3359
        %v3485 = vpop.f32.mrf.mxu0
        %v3486 = vadd.f32 0.0, %v3485
        %v3487 = vpop.f32.mrf.mxu0
        %v3488 = vadd.f32 0.0, %v3487
        %3489 = vmatmul.bf16.gmra.mxu0 %v3361
        %v3490 = vpop.f32.mrf.mxu0
        %v3491 = vpop.f32.mrf.mxu0
        %v3492 = vadd.f32 0.0, %v3491
        %3493 = vmatmul.bf16.gmra.mxu0 %v3363
        %v3494 = vpop.f32.mrf.mxu0
        %v3495 = vadd.f32 0.0, %v3494
        %v3496 = vpop.f32.mrf.mxu0
        %3497 = vmatmul.bf16.gmra.mxu0 %v3365
        %v3498 = vpop.f32.mrf.mxu0
        %v3499 = vadd.f32 0.0, %v3498
        %v3500 = vpop.f32.mrf.mxu0
        %v3501 = vadd.f32 0.0, %v3500
        %3502 = vmatmul.bf16.gmra.mxu0 %v3367
        %v3503 = vpop.f32.mrf.mxu0
        %v3504 = vpop.f32.mrf.mxu0
        %v3505 = vadd.f32 0.0, %v3504
        %3506 = vmatmul.bf16.gmra.mxu0 %v3369
        %v3507 = vpop.f32.mrf.mxu0
        %v3508 = vadd.f32 0.0, %v3507
        %v3509 = vpop.f32.mrf.mxu0
        %3510 = vmatmul.bf16.gmra.mxu0 %v3371
        %v3511 = vpop.f32.mrf.mxu0
        %v3512 = vadd.f32 0.0, %v3511
        %v3513 = vpop.f32.mrf.mxu0
        %v3514 = vadd.f32 0.0, %v3513
        %3515 = vmatmul.bf16.gmra.mxu0 %v3373
        %v3516 = vpop.f32.mrf.mxu0
        %v3517 = vpop.f32.mrf.mxu0
        %v3518 = vadd.f32 0.0, %v3517
        %3519 = vmatmul.bf16.gmra.mxu0 %v3375
        %v3520 = vpop.f32.mrf.mxu0
        %v3521 = vadd.f32 0.0, %v3520
        %v3522 = vpop.f32.mrf.mxu0
        %3523 = vmatmul.bf16.gmra.mxu0 %v3377
        %v3524 = vpop.f32.mrf.mxu0
        %v3525 = vadd.f32 0.0, %v3524
        %v3526 = vpop.f32.mrf.mxu0
        %v3527 = vadd.f32 0.0, %v3526
        %3528 = vmatmul.bf16.gmra.mxu0 %v3379
        %v3529 = vpop.f32.mrf.mxu0
        %v3530 = vpop.f32.mrf.mxu0
        %v3531 = vadd.f32 0.0, %v3530
        %3532 = vmatmul.bf16.gmra.mxu0 %v3381
        %v3533 = vpop.f32.mrf.mxu0
        %v3534 = vadd.f32 0.0, %v3533
        %v3535 = vpop.f32.mrf.mxu0
        %3536 = vmatmul.bf16.gmra.mxu0 %v3383
        %v3537 = vpop.f32.mrf.mxu0
        %v3538 = vadd.f32 0.0, %v3537
        %v3539 = vpop.f32.mrf.mxu0
        %v3540 = vadd.f32 0.0, %v3539
        %3541 = vmatmul.bf16.gmra.mxu0 %v3385
        %v3542 = vpop.f32.mrf.mxu0
        %v3543 = vpop.f32.mrf.mxu0
        %v3544 = vadd.f32 0.0, %v3543
        %3545 = vmatmul.bf16.gmra.mxu0 %v3387
        %v3546 = vpop.f32.mrf.mxu0
        %v3547 = vadd.f32 0.0, %v3546
        %v3548 = vpop.f32.mrf.mxu0
        %3549 = vmatmul.bf16.gmra.mxu0 %v3389
        %v3550 = vpop.f32.mrf.mxu0
        %v3551 = vadd.f32 0.0, %v3550
        %v3552 = vpop.f32.mrf.mxu0
        %v3553 = vadd.f32 0.0, %v3552
        %3554 = vmatmul.bf16.gmra.mxu0 %v3391
        %v3555 = vpop.f32.mrf.mxu0
        %v3556 = vpop.f32.mrf.mxu0
        %v3557 = vadd.f32 0.0, %v3556
        %3558 = vmatmul.bf16.gmra.mxu0 %v3393
        %v3559 = vpop.f32.mrf.mxu0
        %v3560 = vadd.f32 0.0, %v3559
        %v3561 = vpop.f32.mrf.mxu0
        %3562 = vmatmul.bf16.gmra.mxu0 %v3395
        %v3563 = vpop.f32.mrf.mxu0
        %v3564 = vadd.f32 0.0, %v3563
        %v3565 = vpop.f32.mrf.mxu0
        %v3566 = vadd.f32 0.0, %v3565
        %3567 = vmatmul.bf16.gmra.mxu0 %v3397
        %v3568 = vpop.f32.mrf.mxu0
        %v3569 = vpop.f32.mrf.mxu0
        %v3570 = vadd.f32 0.0, %v3569
        %3571 = vmatmul.bf16.gmra.mxu0 %v3399
        %v3572 = vpop.f32.mrf.mxu0
        %v3573 = vadd.f32 0.0, %v3572
        %v3574 = vpop.f32.mrf.mxu0
        %3575 = vmatmul.bf16.gmra.mxu0 %v3401
        %v3576 = vpop.f32.mrf.mxu0
        %v3577 = vadd.f32 0.0, %v3576
        %v3578 = vpop.f32.mrf.mxu0
        %v3579 = vadd.f32 0.0, %v3578
        %3580 = vmatmul.bf16.gmra.mxu0 %v3403
        %v3581 = vpop.f32.mrf.mxu0
        %v3582 = vpop.f32.mrf.mxu0
        %v3583 = vadd.f32 0.0, %v3582
        %3584 = vmatmul.bf16.gmra.mxu0 %v3402
        %v3585 = vpop.f32.mrf.mxu0
        %v3586 = vadd.f32 0.0, %v3585
        %v3587 = vpop.f32.mrf.mxu0
        %3588 = vdwg.mxu0
        %v3589 = vadd.f32 %v3237, %v3486
        %v3590 = vadd.f32 %v3239, %v3488
        %v3591 = vadd.f32 %v3243, %v3492
        %v3592 = vadd.f32 %v3246, %v3495
        %v3593 = vadd.f32 %v3250, %v3499
        %v3594 = vadd.f32 %v3252, %v3501
        %v3595 = vadd.f32 %v3256, %v3505
        %v3596 = vadd.f32 %v3259, %v3508
        %v3597 = vadd.f32 %v3263, %v3512
        %v3598 = vadd.f32 %v3265, %v3514
        %v3599 = vadd.f32 %v3269, %v3518
        %v3600 = vadd.f32 %v3272, %v3521
        %v3601 = vadd.f32 %v3276, %v3525
        %v3602 = vadd.f32 %v3278, %v3527
        %v3603 = vadd.f32 %v3282, %v3531
        %v3604 = vadd.f32 %v3285, %v3534
        %v3605 = vadd.f32 %v3289, %v3538
        %v3606 = vadd.f32 %v3291, %v3540
        %v3607 = vadd.f32 %v3295, %v3544
        %v3608 = vadd.f32 %v3298, %v3547
        %v3609 = vadd.f32 %v3302, %v3551
        %v3610 = vadd.f32 %v3304, %v3553
        %v3611 = vadd.f32 %v3308, %v3557
        %v3612 = vadd.f32 %v3311, %v3560
        %v3613 = vadd.f32 %v3315, %v3564
        %v3614 = vadd.f32 %v3317, %v3566
        %v3615 = vadd.f32 %v3321, %v3570
        %v3616 = vadd.f32 %v3324, %v3573
        %v3617 = vadd.f32 %v3328, %v3577
        %v3618 = vadd.f32 %v3330, %v3579
        %v3619 = vadd.f32 %v3334, %v3583
        %v3620 = vadd.f32 %v3337, %v3586
        %v3621 = vld [vmem:[%s5] sm:$0x1]
        %v3623 = vperm.slane %v3621, 0
        %v3625 = vadd.f32 %v3589, %v3623
        %v3626 = vadd.f32 %v3590, %v3623
        %v3627 = vadd.f32 %v3591, %v3623
        %v3628 = vadd.f32 %v3592, %v3623
        %v3629 = vadd.f32 %v3593, %v3623
        %v3630 = vadd.f32 %v3594, %v3623
        %v3631 = vadd.f32 %v3595, %v3623
        %v3632 = vadd.f32 %v3596, %v3623
        %v3633 = vadd.f32 %v3597, %v3623
        %v3634 = vadd.f32 %v3598, %v3623
        %v3635 = vadd.f32 %v3599, %v3623
        %v3636 = vadd.f32 %v3600, %v3623
        %v3637 = vadd.f32 %v3601, %v3623
        %v3638 = vadd.f32 %v3602, %v3623
        %v3639 = vadd.f32 %v3603, %v3623
        %v3640 = vadd.f32 %v3604, %v3623
        %v3641 = vadd.f32 %v3605, %v3623
        %v3642 = vadd.f32 %v3606, %v3623
        %v3643 = vadd.f32 %v3607, %v3623
        %v3644 = vadd.f32 %v3608, %v3623
        %v3645 = vadd.f32 %v3609, %v3623
        %v3646 = vadd.f32 %v3610, %v3623
        %v3647 = vadd.f32 %v3611, %v3623
        %v3648 = vadd.f32 %v3612, %v3623
        %v3649 = vadd.f32 %v3613, %v3623
        %v3650 = vadd.f32 %v3614, %v3623
        %v3651 = vadd.f32 %v3615, %v3623
        %v3652 = vadd.f32 %v3616, %v3623
        %v3653 = vadd.f32 %v3617, %v3623
        %v3654 = vadd.f32 %v3618, %v3623
        %v3655 = vadd.f32 %v3619, %v3623
        %v3656 = vadd.f32 %v3620, %v3623
        %v3657 = vmax.f32 %v3625, 0.0
        %v3658 = vmax.f32 %v3626, 0.0
        %v3659 = vmax.f32 %v3627, 0.0
        %v3660 = vmax.f32 %v3628, 0.0
        %v3661 = vmax.f32 %v3629, 0.0
        %v3662 = vmax.f32 %v3630, 0.0
        %v3663 = vmax.f32 %v3631, 0.0
        %v3664 = vmax.f32 %v3632, 0.0
        %v3665 = vmax.f32 %v3633, 0.0
        %v3666 = vmax.f32 %v3634, 0.0
        %v3667 = vmax.f32 %v3635, 0.0
        %v3668 = vmax.f32 %v3636, 0.0
        %v3669 = vmax.f32 %v3637, 0.0
        %v3670 = vmax.f32 %v3638, 0.0
        %v3671 = vmax.f32 %v3639, 0.0
        %v3672 = vmax.f32 %v3640, 0.0
        %v3673 = vmax.f32 %v3641, 0.0
        %v3674 = vmax.f32 %v3642, 0.0
        %v3675 = vmax.f32 %v3643, 0.0
        %v3676 = vmax.f32 %v3644, 0.0
        %v3677 = vmax.f32 %v3645, 0.0
        %v3678 = vmax.f32 %v3646, 0.0
        %v3679 = vmax.f32 %v3647, 0.0
        %v3680 = vmax.f32 %v3648, 0.0
        %v3681 = vmax.f32 %v3649, 0.0
        %v3682 = vmax.f32 %v3650, 0.0
        %v3683 = vmax.f32 %v3651, 0.0
        %v3684 = vmax.f32 %v3652, 0.0
        %v3685 = vmax.f32 %v3653, 0.0
        %v3686 = vmax.f32 %v3654, 0.0
        %v3687 = vmax.f32 %v3655, 0.0
        %v3688 = vmax.f32 %v3656, 0.0
        %v3689 = vmax.f32 %v3657, %v3658
        %v3690 = vrot.slane %v3689, 4
        %v3691 = vmax.f32 %v3689, %v3690
        %v3692 = vrot.slane %v3691, 2
        %v3693 = vmax.f32 %v3691, %v3692
        %v3694 = vrot.slane %v3693, 1
        %v3695 = vmax.f32 %v3693, %v3694
        %v3696 = vmax.f32 %v3659, %v3660
        %v3697 = vrot.slane %v3696, 4
        %v3698 = vmax.f32 %v3696, %v3697
        %v3699 = vrot.slane %v3698, 2
        %v3700 = vmax.f32 %v3698, %v3699
        %v3701 = vrot.slane %v3700, 1
        %v3702 = vmax.f32 %v3700, %v3701
        %v3703 = vmax.f32 %v3661, %v3662
        %v3704 = vrot.slane %v3703, 4
        %v3705 = vmax.f32 %v3703, %v3704
        %v3706 = vrot.slane %v3705, 2
        %v3707 = vmax.f32 %v3705, %v3706
        %v3708 = vrot.slane %v3707, 1
        %v3709 = vmax.f32 %v3707, %v3708
        %v3710 = vmax.f32 %v3663, %v3664
        %v3711 = vrot.slane %v3710, 4
        %v3712 = vmax.f32 %v3710, %v3711
        %v3713 = vrot.slane %v3712, 2
        %v3714 = vmax.f32 %v3712, %v3713
        %v3715 = vrot.slane %v3714, 1
        %v3716 = vmax.f32 %v3714, %v3715
        %v3717 = vmax.f32 %v3665, %v3666
        %v3718 = vrot.slane %v3717, 4
        %v3719 = vmax.f32 %v3717, %v3718
        %v3720 = vrot.slane %v3719, 2
        %v3721 = vmax.f32 %v3719, %v3720
        %v3722 = vrot.slane %v3721, 1
        %v3723 = vmax.f32 %v3721, %v3722
        %v3724 = vmax.f32 %v3667, %v3668
        %v3725 = vrot.slane %v3724, 4
        %v3726 = vmax.f32 %v3724, %v3725
        %v3727 = vrot.slane %v3726, 2
        %v3728 = vmax.f32 %v3726, %v3727
        %v3729 = vrot.slane %v3728, 1
        %v3730 = vmax.f32 %v3728, %v3729
        %v3731 = vmax.f32 %v3669, %v3670
        %v3732 = vrot.slane %v3731, 4
        %v3733 = vmax.f32 %v3731, %v3732
        %v3734 = vrot.slane %v3733, 2
        %v3735 = vmax.f32 %v3733, %v3734
        %v3736 = vrot.slane %v3735, 1
        %v3737 = vmax.f32 %v3735, %v3736
        %v3738 = vmax.f32 %v3671, %v3672
        %v3739 = vrot.slane %v3738, 4
        %v3740 = vmax.f32 %v3738, %v3739
        %v3741 = vrot.slane %v3740, 2
        %v3742 = vmax.f32 %v3740, %v3741
        %v3743 = vrot.slane %v3742, 1
        %v3744 = vmax.f32 %v3742, %v3743
        %v3745 = vmax.f32 %v3673, %v3674
        %v3746 = vrot.slane %v3745, 4
        %v3747 = vmax.f32 %v3745, %v3746
        %v3748 = vrot.slane %v3747, 2
        %v3749 = vmax.f32 %v3747, %v3748
        %v3750 = vrot.slane %v3749, 1
        %v3751 = vmax.f32 %v3749, %v3750
        %v3752 = vmax.f32 %v3675, %v3676
        %v3753 = vrot.slane %v3752, 4
        %v3754 = vmax.f32 %v3752, %v3753
        %v3755 = vrot.slane %v3754, 2
        %v3756 = vmax.f32 %v3754, %v3755
        %v3757 = vrot.slane %v3756, 1
        %v3758 = vmax.f32 %v3756, %v3757
        %v3759 = vmax.f32 %v3677, %v3678
        %v3760 = vrot.slane %v3759, 4
        %v3761 = vmax.f32 %v3759, %v3760
        %v3762 = vrot.slane %v3761, 2
        %v3763 = vmax.f32 %v3761, %v3762
        %v3764 = vrot.slane %v3763, 1
        %v3765 = vmax.f32 %v3763, %v3764
        %v3766 = vmax.f32 %v3679, %v3680
        %v3767 = vrot.slane %v3766, 4
        %v3768 = vmax.f32 %v3766, %v3767
        %v3769 = vrot.slane %v3768, 2
        %v3770 = vmax.f32 %v3768, %v3769
        %v3771 = vrot.slane %v3770, 1
        %v3772 = vmax.f32 %v3770, %v3771
        %v3773 = vmax.f32 %v3681, %v3682
        %v3774 = vrot.slane %v3773, 4
        %v3775 = vmax.f32 %v3773, %v3774
        %v3776 = vrot.slane %v3775, 2
        %v3777 = vmax.f32 %v3775, %v3776
        %v3778 = vrot.slane %v3777, 1
        %v3779 = vmax.f32 %v3777, %v3778
        %v3780 = vmax.f32 %v3683, %v3684
        %v3781 = vrot.slane %v3780, 4
        %v3782 = vmax.f32 %v3780, %v3781
        %v3783 = vrot.slane %v3782, 2
        %v3784 = vmax.f32 %v3782, %v3783
        %v3785 = vrot.slane %v3784, 1
        %v3786 = vmax.f32 %v3784, %v3785
        %v3787 = vmax.f32 %v3685, %v3686
        %v3788 = vrot.slane %v3787, 4
        %v3789 = vmax.f32 %v3787, %v3788
        %v3790 = vrot.slane %v3789, 2
        %v3791 = vmax.f32 %v3789, %v3790
        %v3792 = vrot.slane %v3791, 1
        %v3793 = vmax.f32 %v3791, %v3792
        %v3794 = vmax.f32 %v3687, %v3688
        %v3795 = vrot.slane %v3794, 4
        %v3796 = vmax.f32 %v3794, %v3795
        %v3797 = vrot.slane %v3796, 2
        %v3798 = vmax.f32 %v3796, %v3797
        %v3799 = vrot.slane %v3798, 1
        %v3800 = vmax.f32 %v3798, %v3799
        %vm3801 = vcmask 1040384
        %v3802 = vsel %vm3801, %v3695, %v3702
        %vm3803 = vcmask 1041408
        %v3804 = vsel %vm3803, %v3802, %v3709
        %vm3805 = vcmask 1042432
        %v3806 = vsel %vm3805, %v3804, %v3716
        %vm3807 = vcmask 1043456
        %v3808 = vsel %vm3807, %v3806, %v3723
        %vm3809 = vcmask 1044480
        %v3810 = vsel %vm3809, %v3808, %v3730
        %vm3811 = vcmask 1045504
        %v3812 = vsel %vm3811, %v3810, %v3737
        %vm3813 = vcmask 1046528
        %v3814 = vsel %vm3813, %v3812, %v3744
        %v3815 = vsel %vm3801, %v3751, %v3758
        %v3816 = vsel %vm3803, %v3815, %v3765
        %v3817 = vsel %vm3805, %v3816, %v3772
        %v3818 = vsel %vm3807, %v3817, %v3779
        %v3819 = vsel %vm3809, %v3818, %v3786
        %v3820 = vsel %vm3811, %v3819, %v3793
        %v3821 = vsel %vm3813, %v3820, %v3800
        %v3822 = vpack.c.bf16 %v3821, %v3814
        %v3823 = vld [vmem:[#allocation7] sm:$0xf]
        %v3824 = vld [vmem:[#allocation7 + $0x4] sm:$0xf]
        %v3825 = vld [vmem:[#allocation7 + $0x8] sm:$0xf]
        %v3826 = vld [vmem:[#allocation7 + $0xc] sm:$0xf]
        %v3827 = vld [vmem:[#allocation7 + $0x10] sm:$0xf]
        %v3828 = vld [vmem:[#allocation7 + $0x14] sm:$0xf]
        %v3829 = vld [vmem:[#allocation7 + $0x18] sm:$0xf]
        %v3830 = vld [vmem:[#allocation7 + $0x1c] sm:$0xf]
        %v3831 = vld [vmem:[#allocation7 + $0x20] sm:$0xf]
        %v3832 = vld [vmem:[#allocation7 + $0x24] sm:$0xf]
        %v3833 = vld [vmem:[#allocation7 + $0x28] sm:$0xf]
        %v3834 = vld [vmem:[#allocation7 + $0x2c] sm:$0xf]
        %v3835 = vld [vmem:[#allocation7 + $0x30] sm:$0xf]
        %v3836 = vld [vmem:[#allocation7 + $0x34] sm:$0xf]
        %v3837 = vld [vmem:[#allocation7 + $0x38] sm:$0xf]
        %v3838 = vld [vmem:[#allocation7 + $0x3c] sm:$0xf]
        %v3839 = vld [vmem:[%s7] sm:$0x1]
        %v3841 = vperm.slane %v3839, 0
        %v3859 = vunpack.c.l.b16 %v3823
        %v3860 = vunpack.c.l.b16 %v3824
        %v3861 = vunpack.c.l.b16 %v3825
        %v3862 = vunpack.c.l.b16 %v3826
        %v3863 = vunpack.c.l.b16 %v3827
        %v3864 = vunpack.c.l.b16 %v3828
        %v3865 = vunpack.c.l.b16 %v3829
        %v3866 = vunpack.c.l.b16 %v3830
        %v3867 = vunpack.c.l.b16 %v3831
        %v3868 = vunpack.c.l.b16 %v3832
        %v3869 = vunpack.c.l.b16 %v3833
        %v3870 = vunpack.c.l.b16 %v3834
        %v3871 = vunpack.c.l.b16 %v3835
        %v3872 = vunpack.c.l.b16 %v3836
        %v3873 = vunpack.c.l.b16 %v3837
        %v3874 = vunpack.c.l.b16 %v3838
        %v3875 = vpack.c.b16 %v3860, %v3859
        %v3876 = vpack.c.b16 %v3862, %v3861
        %v3877 = vpack.c.b16 %v3864, %v3863
        %v3878 = vpack.c.b16 %v3866, %v3865
        %v3879 = vpack.c.b16 %v3868, %v3867
        %v3880 = vpack.c.b16 %v3870, %v3869
        %v3881 = vpack.c.b16 %v3872, %v3871
        %v3882 = vpack.c.b16 %v3874, %v3873
        %3891 = vmatpush.bf16.msra.mxu0 %v3882
        %3892 = vmatpush.bf16.msra.mxu0 %v3881
        %3893 = vmatpush.bf16.msra.mxu0 %v3880
        %3894 = vmatpush.bf16.msra.mxu0 %v3879
        %3895 = vmatpush.bf16.msra.mxu0 %v3878
        %3896 = vmatpush.bf16.msra.mxu0 %v3877
        %3897 = vmatpush.bf16.msra.mxu0 %v3876
        %3898 = vmatpush.bf16.msra.mxu0 %v3875
        %3899 = vmatmul.bf16.gmra.mxu0 %v3822
        %v3900 = vpop.f32.mrf.mxu0
        %v3901 = vadd.f32 %v3841, %v3900
        %v3902 = vpop.f32.mrf.mxu0
        %v3903 = vadd.f32 %v3841, %v3902
        %3904 = vdwg.mxu0
        %3905 = vst [vmem:[%s349] sm:$0xff] %v3901
        %3906 = vst [vmem:[%s349 + $0x8] sm:$0xff] %v3903
        %s3907 = sand.u32 %s205, 1
        %s3908 = scalar_lea.sflag [#allocation4], %s3907
        %s3909 = sand.u32 %s205, 1
        %s3910 = smul.addr %s3909, 16
        %s3911 = scalar_lea.vmem [#allocation8], %s3910
        // Predicated region
        $region65: #{tpu_custom_call.1} parent=51 // pred_check
          %p3912 = pneg %p215
        $region66: #{tpu_custom_call.1} parent=51 // pred_check_branch
          %3914 = sbr.rel (%p3912) target = $region68
        $region67: #{tpu_custom_call.1} parent=51 // pred_region
          %s3915 = smul.u32 2, %s24
          %3917 = vsyncadd %s3908, 0
          %s3918 = smul.addr %s3915, 8
          %s3919 = scalar_lea.hbm %s8, %s3918
          %s3920 = sshll.u32 %s3911, 4
          %s3921 = int_to_ptr.vmem [resolvable:$true] %s3920
          %s3922 = sshll.u32 %s3919, 4
          %s3923 = int_to_ptr.hbm [resolvable:$true] %s3922
          %3928 = dma.vmem_to_hbm [thread:$0]  %s3921, 256, %s3923, %s3908, 128, 128, 8
        $region68: #{tpu_custom_call.1} parent=51 // pred_fallthru
          _
      $region52: #{tpu_custom_call.1} parent=5 // pred_fallthru
        _
      %p3929 = scmp.le.s32.totalorder 2, %s19
      // Predicated region
      $region69: #{tpu_custom_call.1} parent=5 // pred_check
        %p3930 = pneg %p3929
      $region70: #{tpu_custom_call.1} parent=5 // pred_check_branch
        %3932 = sbr.rel (%p3930) target = $region72
      $region71: #{tpu_custom_call.1} parent=5 // pred_region
        %s3933 = ssub.s32 %s19, 2
        // Predicated region
        $region73: #{tpu_custom_call.1} parent=71 // pred_check
          %p3934 = pneg %p221
        $region74: #{tpu_custom_call.1} parent=71 // pred_check_branch
          %3936 = sbr.rel (%p3934) target = $region76
        $region75: #{tpu_custom_call.1} parent=71 // pred_region
          %s3937 = sand.u32 %s206, 1
          %s3938 = scalar_lea.sflag [#allocation4], %s3937
          %s3939 = sand.u32 %s206, 1
          %s3940 = smul.addr %s3939, 16
          %s3941 = scalar_lea.vmem [#allocation8], %s3940
          %3943 = dma.done %s3938, 256
        $region76: #{tpu_custom_call.1} parent=71 // pred_fallthru
          _
      $region72: #{tpu_custom_call.1} parent=5 // pred_fallthru
        _
    $region6: #{tpu_custom_call.1} parent=1 // loop_footer
      %s23 = sadd.s32 1, %s19
    $region7: #{tpu_custom_call.1} parent=1 // loop_footer_branch
      %18 = sbr.rel target = $region3
    $region8: #{tpu_custom_call.1} parent=1 // loop_exit
      _
    %3944 = vsyncpa [#allocation3], 1
    %s3945 = scalar_lea.sflag [#allocation3], 1
    %3946 = vsyncpa %s3945, 1
    %3947 = vsyncpa [#allocation6], 1
    %3948 = vsyncpa [#allocation4], 1
    %s3949 = scalar_lea.sflag [#allocation4], 1
    %3950 = vsyncpa %s3949, 1

</llo_original>
